<compile_context>
chip_gen: v7x
topology: tpu7x:2x2x1
jax: 0.10.0
libtpu: 0.0.40
codegen_flags: <defaults>
</compile_context>

<pallas_src>
import jax
import jax.numpy as jnp
from jax.experimental import pallas as pl
from jax.experimental.pallas import tpu as pltpu


LANE = 128          # Cout padded to a multiple of this -> lane-dense, unmasked stores
TM_TARGET = 512     # target output rows (= NB*Ho*Wo) per grid step


def _round_up(x, m):
    return (x + m - 1) // m * m


def _num_tensorcores():
    """Best-effort TensorCore count per chip (2 on v7x, 1 on v5e/v6e)."""
    try:
        info = pltpu.get_tpu_info()
        for attr in ("num_cores", "core_count", "num_tensorcores",
                     "tensorcores_per_chip", "num_cores_per_chip"):
            v = getattr(info, attr, None)
            if isinstance(v, int) and v > 0:
                return v
    except Exception:
        pass
    try:
        d = jax.devices()[0]
        v = getattr(d, "num_cores", None)
        if isinstance(v, int) and v > 0:
            return v
        if "v7" in str(getattr(d, "device_kind", "")).lower():
            return 2
    except Exception:
        pass
    return 1


def _pick_images_per_step(n, rows_per_image, num_cores, tm_target=TM_TARGET):
    """Images per grid step: fold N into big row tiles.  Only force >= num_cores
    grid steps when the chip actually has >1 TensorCore (v7x megacore); on
    1-TC chips (v5e/v6e) extra steps are pure serial-loop overhead."""
    nb = max(1, min(n, tm_target // max(1, rows_per_image)))
    while n % nb:
        nb -= 1
    if num_cores > 1:
        while nb > 1 and n // nb < num_cores:
            nb -= 1
            while n % nb:
                nb -= 1
    # output block is (nb*rows, Cout_pad): sublane dim must be %8==0 or span
    # the whole array -> fall back to one full block if misaligned.
    if (nb * rows_per_image) % 8 and nb != n:
        nb = n
    return nb


# ----------------------------------------------------------------------------
# Pallas kernel: 3x3 stride-2 conv (+ folded-BN bias + ReLU) as one fused matmul
#   x_ref : (NB, Ho+1, Wo+1, 4*Cin) bf16   2x2 space-to-depth of the padded input
#   w_ref : (16*Cin, Cout_pad)      bf16   taps laid out offset-major / phase / cin
#   b_ref : (1, Cout_pad)           f32    folded-BN bias (zero on pad lanes)
#   o_ref : (NB*Ho*Wo, Cout_pad)    bf16   lane-dense 2-D output block
# ----------------------------------------------------------------------------
def _conv3x3s2_kernel(x_ref, w_ref, b_ref, o_ref):
    nb, hp1, wp1, c4 = x_ref.shape
    ho, wo = hp1 - 1, wp1 - 1
    m = nb * ho * wo

    # The 4 static 2x2-offset windows of the space-to-depth tensor together
    # cover all 9 taps of the stride-2 3x3 conv (unused offset/phase pairs have
    # zero weights).  No strided loads, no carried accumulator.
    parts = [x_ref[:, r0:r0 + ho, c0:c0 + wo, :].reshape(m, c4)
             for r0 in (0, 1) for c0 in (0, 1)]

    if c4 % 128 == 0:
        # lane-tile-aligned chunks: fuse everything into ONE MXU matmul,
        # K = 16*Cin, accumulation happens inside the MXU.
        patches = jnp.concatenate(parts, axis=-1)
        y = jnp.dot(patches, w_ref[...], preferred_element_type=jnp.float32)
    else:
        # tiny unaligned Cin (first stage, Cin=3): 4 dots with K = 4*Cin each,
        # summed as a small tree (no looped read-modify-write accumulator).
        w = w_ref[...]
        dots = [jnp.dot(p, w[i * c4:(i + 1) * c4, :],
                        preferred_element_type=jnp.float32)
                for i, p in enumerate(parts)]
        y = (dots[0] + dots[1]) + (dots[2] + dots[3])

    y = jnp.maximum(y + b_ref[...], 0.0)        # folded-BN bias + ReLU epilogue
    o_ref[...] = y.astype(o_ref.dtype)          # bf16, lane-dense, unmasked store


def conv3x3_s2_bn_relu(x, w_fused, b_fused):
    """x: (N, H, W, Cin_in) bf16 NHWC.  Returns (N, Ho, Wo, Cout_pad) bf16.

    w_fused: (16*Cin_in, Cout_pad) bf16 with BN scale folded in.
    b_fused: (1, Cout_pad) f32.
    """
    n, h, wd, cin = x.shape
    kdim, cout_pad = w_fused.shape
    assert kdim == 16 * cin
    ho = (h - 1) // 2 + 1
    wo = (wd - 1) // 2 + 1

    # Host prep (one cheap pass over the small input): conv padding=1 extended
    # to even extents, then 2x2 space-to-depth so every conv tap becomes a
    # static unstrided window inside the kernel with 4x lane density.
    hp, wp = 2 * ho + 2, 2 * wo + 2
    xp = jnp.pad(x, ((0, 0), (1, hp - h - 1), (1, wp - wd - 1), (0, 0)))
    s2d = jnp.concatenate(
        [xp[:, r::2, c::2, :] for r in (0, 1) for c in (0, 1)], axis=-1)
    # s2d: (N, Ho+1, Wo+1, 4*Cin) bf16

    rows = ho * wo
    nb = _pick_images_per_step(n, rows, _num_tensorcores())
    m_tile = nb * rows
    grid = (n // nb,)

    out2d = pl.pallas_call(
        _conv3x3s2_kernel,
        out_shape=jax.ShapeDtypeStruct((n * rows, cout_pad), jnp.bfloat16),
        grid_spec=pltpu.PrefetchScalarGridSpec(
            num_scalar_prefetch=0,
            grid=grid,
            in_specs=[
                pl.BlockSpec((nb, ho + 1, wo + 1, 4 * cin), lambda g: (g, 0, 0, 0)),
                pl.BlockSpec((16 * cin, cout_pad), lambda g: (0, 0)),
                pl.BlockSpec((1, cout_pad), lambda g: (0, 0)),
            ],
            out_specs=pl.BlockSpec((m_tile, cout_pad), lambda g: (g, 0)),
        ),
        compiler_params=pltpu.CompilerParams(
            dimension_semantics=("parallel",),
            vmem_limit_bytes=32 * 1024 * 1024),
    )(s2d, w_fused, b_fused)

    # row-major metadata reshape back to NHWC; stays bf16 & channel-padded so
    # the next stage chains directly (no slice / re-pad / re-cast HBM pass).
    return out2d.reshape(n, ho, wo, cout_pad)


def _fuse_conv_bn(w, scale, bias, cin_in, cout_pad):
    """Fold the BN scale into a (3,3,Cin_real,Cout) conv weight and lay the 9
    taps out for the fused matmul: row index = offset*4*Cin_in + phase*Cin_in
    + cin, matching the kernel's patch layout.  Pad lanes stay zero."""
    _, _, cin_real, cout = w.shape
    ws = (w * scale[None, None, None, :]).astype(jnp.float32)
    wf = jnp.zeros((4, 4, cin_in, cout_pad), jnp.float32)
    for kh in range(3):
        for kw in range(3):
            off = (kh // 2) * 2 + (kw // 2)   # 2x2 window offset in the s2d tensor
            ph = (kh % 2) * 2 + (kw % 2)      # polyphase (= s2d channel block)
            wf = wf.at[off, ph, :cin_real, :cout].set(ws[kh, kw])
    wf = wf.reshape(16 * cin_in, cout_pad).astype(jnp.bfloat16)
    bf = jnp.pad(bias, (0, cout_pad - cout)).reshape(1, cout_pad).astype(jnp.float32)
    return wf, bf


# ----------------------------------------------------------------------------
# FeatureExtractor (JAX/Pallas stand-in for the timm-based torch module)
# ----------------------------------------------------------------------------
class FeatureExtractor:
    def __init__(self, key, num_views: int = 2):
        self.num_views = num_views
        # synthetic "backbone": two 3x3 stride-2 stages -> strides [2, 4],
        # channels [8, 16] (mirrors timm features_only multi-scale outputs).
        chans = [3, 8, 16]
        self.raw_layers = []   # (w, scale, bias) kept for the XLA reference
        self.layers = []       # (w_fused, b_fused) consumed by the kernels
        cin_in = chans[0]
        for i in range(len(chans) - 1):
            key, k_w = jax.random.split(key)
            cin_real, cout = chans[i], chans[i + 1]
            w = jax.random.normal(k_w, (3, 3, cin_real, cout), jnp.float32)
            w = w * (1.0 / (3 * 3 * cin_real) ** 0.5)
            scale = jnp.ones((cout,), jnp.float32)                       # gamma/sqrt(var+eps)
            bias = jnp.linspace(-0.1, 0.1, cout).astype(jnp.float32)     # beta - mean*scale
            cout_pad = _round_up(cout, LANE)
            self.raw_layers.append((w, scale, bias))
            self.layers.append(_fuse_conv_bn(w, scale, bias, cin_in, cout_pad))
            cin_in = cout_pad     # stages chain on the padded bf16 activation
        self._chans = chans
        self.out_strides = [2, 4]

    @property
    def out_channels(self):
        return self._chans[1:]

    def flatten(self, images):
        B, T, V, C, H, W = images.shape
        self._inshape = (B, T, V)
        return images.reshape(B * T * V, C, H, W)

    def unflatten(self, features):
        B, T, V = self._inshape
        return [f.reshape(B, T, V, *f.shape[1:]) for f in features]

    def __call__(self, images):
        """images: (B, T, V, 3, H, W) f32 -> list of (B, T, V, C_i, H_i, W_i) f32."""
        x_nchw = self.flatten(images)                                  # (N, 3, H, W)
        x = jnp.transpose(x_nchw, (0, 2, 3, 1)).astype(jnp.bfloat16)   # NHWC bf16, once
        padded = []
        for (w_fused, b_fused) in self.layers:
            x = conv3x3_s2_bn_relu(x, w_fused, b_fused)   # (N, Hi, Wi, 128) bf16, chained padded
            padded.append(x)
        feats_nchw = []
        for f, c in zip(padded, self.out_channels):
            # one fused slice + NCHW transpose + f32 cast for the torch-facing API
            feats_nchw.append(jnp.transpose(f[..., :c], (0, 3, 1, 2)).astype(jnp.float32))
        return self.unflatten(feats_nchw)


# ----------------------------------------------------------------------------
# reference (XLA conv on identically bf16-quantized operands) for validation
# ----------------------------------------------------------------------------
def _reference_stage(x_nhwc, w, scale, bias):
    xb = x_nhwc.astype(jnp.bfloat16).astype(jnp.float32)
    wf = (w * scale[None, None, None, :]).astype(jnp.bfloat16).astype(jnp.float32)
    y = jax.lax.conv_general_dilated(
        xb, wf, window_strides=(2, 2), padding=((1, 1), (1, 1)),
        dimension_numbers=("NHWC", "HWIO", "NHWC"))
    return jnp.maximum(y + bias[None, None, None, :], 0.0)


if __name__ == "__main__":
    key = jax.random.PRNGKey(0)
    k_params, k_img = jax.random.split(key)

    B, T, V, C, H, W = 2, 1, 2, 3, 16, 16
    images = jax.random.normal(k_img, (B, T, V, C, H, W), jnp.float32)

    model = FeatureExtractor(k_params, num_views=V)
    feats = jax.jit(lambda im: model(im))(images)   # jit fuses the wrapper-side passes
    feats = jax.block_until_ready(feats)

    # sanity: list of (B, T, V, C_i, H_i, W_i) at strides 2 and 4
    assert isinstance(feats, list) and len(feats) == 2
    assert feats[0].shape == (B, T, V, 8, H // 2, W // 2)
    assert feats[1].shape == (B, T, V, 16, H // 4, W // 4)
    assert all(bool(jnp.all(jnp.isfinite(f))) for f in feats)

    # numerical check against the XLA reference conv
    x_ref = jnp.transpose(images.reshape(B * T * V, C, H, W), (0, 2, 3, 1))
    for i, (w, scale, bias) in enumerate(model.raw_layers):
        x_ref = _reference_stage(x_ref, w, scale, bias)
        got = jnp.transpose(
            feats[i].reshape(B * T * V, *feats[i].shape[3:]), (0, 2, 3, 1))
        assert jnp.allclose(got, x_ref, atol=5e-2, rtol=5e-2), f"stage {i} mismatch"

    print("KERNEL_OK")
</pallas_src>

<mosaic_0001>
module attributes {stable_mosaic.version = 11 : i64} {
  func.func @_conv3x3s2_kernel(%arg0: i32, %arg1: memref<4x9x9x12xbf16, #tpu.memory_space<vmem>>, %arg2: memref<48x128xbf16, #tpu.memory_space<vmem>>, %arg3: memref<1x128xf32, #tpu.memory_space<vmem>>, %arg4: memref<256x128xbf16, #tpu.memory_space<vmem>>) attributes {dimension_semantics = [#tpu.dimension_semantics<parallel>], iteration_bounds = array<i64: 1>, scalar_prefetch = 0 : i64, scratch_operands = 0 : i64, tpu.core_type = #tpu.core_type<tc>, window_params = [{transform_indices = @transform_0, window_bounds = array<i64: 4, 9, 9, 12>}, {pipeline_mode = #tpu.pipeline_mode<synchronous>, transform_indices = @transform_1, window_bounds = array<i64: 48, 128>}, {pipeline_mode = #tpu.pipeline_mode<synchronous>, transform_indices = @transform_2, window_bounds = array<i64: 1, 128>}, {transform_indices = @transform_3, window_bounds = array<i64: 256, 128>}]} {
    %c0 = arith.constant 0 : index
    %c0_0 = arith.constant 0 : index
    %c0_1 = arith.constant 0 : index
    %c0_2 = arith.constant 0 : index
    %0 = vector.load %arg1[%c0, %c0_0, %c0_1, %c0_2] : memref<4x9x9x12xbf16, #tpu.memory_space<vmem>>, vector<4x8x8x12xbf16>
    %1 = vector.shape_cast %0 : vector<4x8x8x12xbf16> to vector<256x12xbf16>
    %c0_3 = arith.constant 0 : index
    %c0_4 = arith.constant 0 : index
    %c1 = arith.constant 1 : index
    %c0_5 = arith.constant 0 : index
    %2 = vector.load %arg1[%c0_3, %c0_4, %c1, %c0_5] : memref<4x9x9x12xbf16, #tpu.memory_space<vmem>>, vector<4x8x8x12xbf16>
    %3 = vector.shape_cast %2 : vector<4x8x8x12xbf16> to vector<256x12xbf16>
    %c0_6 = arith.constant 0 : index
    %c1_7 = arith.constant 1 : index
    %c0_8 = arith.constant 0 : index
    %c0_9 = arith.constant 0 : index
    %4 = vector.load %arg1[%c0_6, %c1_7, %c0_8, %c0_9] : memref<4x9x9x12xbf16, #tpu.memory_space<vmem>>, vector<4x8x8x12xbf16>
    %5 = vector.shape_cast %4 : vector<4x8x8x12xbf16> to vector<256x12xbf16>
    %c0_10 = arith.constant 0 : index
    %c1_11 = arith.constant 1 : index
    %c1_12 = arith.constant 1 : index
    %c0_13 = arith.constant 0 : index
    %6 = vector.load %arg1[%c0_10, %c1_11, %c1_12, %c0_13] : memref<4x9x9x12xbf16, #tpu.memory_space<vmem>>, vector<4x8x8x12xbf16>
    %7 = vector.shape_cast %6 : vector<4x8x8x12xbf16> to vector<256x12xbf16>
    %c0_14 = arith.constant 0 : index
    %c0_15 = arith.constant 0 : index
    %8 = vector.load %arg2[%c0_14, %c0_15] : memref<48x128xbf16, #tpu.memory_space<vmem>>, vector<48x128xbf16>
    %9 = vector.extract_strided_slice %8 {offsets = [0, 0], sizes = [12, 128], strides = [1, 1]} : vector<48x128xbf16> to vector<12x128xbf16>
    %cst = arith.constant dense<0.000000e+00> : vector<256x128xf32>
    %10 = tpu.matmul %1, %9, %cst {dimension_numbers = #tpu.dot_dimension_numbers<[1], [0], [0], [1], [0, 0, 1, 1], [], []>} : vector<256x12xbf16>, vector<12x128xbf16>, vector<256x128xf32> -> vector<256x128xf32>
    %11 = vector.extract_strided_slice %8 {offsets = [12, 0], sizes = [12, 128], strides = [1, 1]} : vector<48x128xbf16> to vector<12x128xbf16>
    %cst_16 = arith.constant dense<0.000000e+00> : vector<256x128xf32>
    %12 = tpu.matmul %3, %11, %cst_16 {dimension_numbers = #tpu.dot_dimension_numbers<[1], [0], [0], [1], [0, 0, 1, 1], [], []>} : vector<256x12xbf16>, vector<12x128xbf16>, vector<256x128xf32> -> vector<256x128xf32>
    %13 = vector.extract_strided_slice %8 {offsets = [24, 0], sizes = [12, 128], strides = [1, 1]} : vector<48x128xbf16> to vector<12x128xbf16>
    %cst_17 = arith.constant dense<0.000000e+00> : vector<256x128xf32>
    %14 = tpu.matmul %5, %13, %cst_17 {dimension_numbers = #tpu.dot_dimension_numbers<[1], [0], [0], [1], [0, 0, 1, 1], [], []>} : vector<256x12xbf16>, vector<12x128xbf16>, vector<256x128xf32> -> vector<256x128xf32>
    %15 = vector.extract_strided_slice %8 {offsets = [36, 0], sizes = [12, 128], strides = [1, 1]} : vector<48x128xbf16> to vector<12x128xbf16>
    %cst_18 = arith.constant dense<0.000000e+00> : vector<256x128xf32>
    %16 = tpu.matmul %7, %15, %cst_18 {dimension_numbers = #tpu.dot_dimension_numbers<[1], [0], [0], [1], [0, 0, 1, 1], [], []>} : vector<256x12xbf16>, vector<12x128xbf16>, vector<256x128xf32> -> vector<256x128xf32>
    %17 = arith.addf %10, %12 : vector<256x128xf32>
    %18 = arith.addf %14, %16 : vector<256x128xf32>
    %19 = arith.addf %17, %18 : vector<256x128xf32>
    %c0_19 = arith.constant 0 : index
    %c0_20 = arith.constant 0 : index
    %20 = vector.load %arg3[%c0_19, %c0_20] : memref<1x128xf32, #tpu.memory_space<vmem>>, vector<1x128xf32>
    %21 = vector.broadcast %20 : vector<1x128xf32> to vector<256x128xf32>
    %22 = arith.addf %19, %21 : vector<256x128xf32>
    %cst_21 = arith.constant 0.000000e+00 : f32
    %23 = vector.broadcast %cst_21 : f32 to vector<256x128xf32>
    %24 = arith.maximumf %22, %23 : vector<256x128xf32>
    %25 = arith.truncf %24 : vector<256x128xf32> to vector<256x128xbf16>
    %c0_22 = arith.constant 0 : index
    %c0_23 = arith.constant 0 : index
    %26 = vector.load %arg4[%c0_22, %c0_23] : memref<256x128xbf16, #tpu.memory_space<vmem>>, vector<256x128xbf16>
    tpu.vector_store %arg4[%c0_22, %c0_23], %25 {strides = array<i32>} : memref<256x128xbf16, #tpu.memory_space<vmem>>, vector<256x128xbf16>,
    return
  }
  func.func @transform_0(%arg0: i32) -> (i32, i32, i32, i32) {
    %c0_i32 = arith.constant 0 : i32
    %c0_i32_0 = arith.constant 0 : i32
    %c0_i32_1 = arith.constant 0 : i32
    %c0_i32_2 = arith.constant 0 : i32
    return %arg0, %c0_i32, %c0_i32_0, %c0_i32_1 : i32, i32, i32, i32
  }
  func.func @transform_1(%arg0: i32) -> (i32, i32) {
    %c0_i32 = arith.constant 0 : i32
    %c0_i32_0 = arith.constant 0 : i32
    %c0_i32_1 = arith.constant 0 : i32
    return %c0_i32, %c0_i32_0 : i32, i32
  }
  func.func @transform_2(%arg0: i32) -> (i32, i32) {
    %c0_i32 = arith.constant 0 : i32
    %c0_i32_0 = arith.constant 0 : i32
    %c0_i32_1 = arith.constant 0 : i32
    return %c0_i32, %c0_i32_0 : i32, i32
  }
  func.func @transform_3(%arg0: i32) -> (i32, i32) {
    %c0_i32 = arith.constant 0 : i32
    %c0_i32_0 = arith.constant 0 : i32
    return %arg0, %c0_i32 : i32, i32
  }
}

module attributes {stable_mosaic.version = 11 : i64} {
  func.func @_conv3x3s2_kernel(%arg0: i32, %arg1: memref<4x5x5x512xbf16, #tpu.memory_space<vmem>>, %arg2: memref<2048x128xbf16, #tpu.memory_space<vmem>>, %arg3: memref<1x128xf32, #tpu.memory_space<vmem>>, %arg4: memref<64x128xbf16, #tpu.memory_space<vmem>>) attributes {dimension_semantics = [#tpu.dimension_semantics<parallel>], iteration_bounds = array<i64: 1>, scalar_prefetch = 0 : i64, scratch_operands = 0 : i64, tpu.core_type = #tpu.core_type<tc>, window_params = [{transform_indices = @transform_0, window_bounds = array<i64: 4, 5, 5, 512>}, {pipeline_mode = #tpu.pipeline_mode<synchronous>, transform_indices = @transform_1, window_bounds = array<i64: 2048, 128>}, {pipeline_mode = #tpu.pipeline_mode<synchronous>, transform_indices = @transform_2, window_bounds = array<i64: 1, 128>}, {transform_indices = @transform_3, window_bounds = array<i64: 64, 128>}]} {
    %c0 = arith.constant 0 : index
    %c0_0 = arith.constant 0 : index
    %c0_1 = arith.constant 0 : index
    %c0_2 = arith.constant 0 : index
    %0 = vector.load %arg1[%c0, %c0_0, %c0_1, %c0_2] : memref<4x5x5x512xbf16, #tpu.memory_space<vmem>>, vector<4x4x4x512xbf16>
    %1 = vector.shape_cast %0 : vector<4x4x4x512xbf16> to vector<64x512xbf16>
    %c0_3 = arith.constant 0 : index
    %c0_4 = arith.constant 0 : index
    %c1 = arith.constant 1 : index
    %c0_5 = arith.constant 0 : index
    %2 = vector.load %arg1[%c0_3, %c0_4, %c1, %c0_5] : memref<4x5x5x512xbf16, #tpu.memory_space<vmem>>, vector<4x4x4x512xbf16>
    %3 = vector.shape_cast %2 : vector<4x4x4x512xbf16> to vector<64x512xbf16>
    %c0_6 = arith.constant 0 : index
    %c1_7 = arith.constant 1 : index
    %c0_8 = arith.constant 0 : index
    %c0_9 = arith.constant 0 : index
    %4 = vector.load %arg1[%c0_6, %c1_7, %c0_8, %c0_9] : memref<4x5x5x512xbf16, #tpu.memory_space<vmem>>, vector<4x4x4x512xbf16>
    %5 = vector.shape_cast %4 : vector<4x4x4x512xbf16> to vector<64x512xbf16>
    %c0_10 = arith.constant 0 : index
    %c1_11 = arith.constant 1 : index
    %c1_12 = arith.constant 1 : index
    %c0_13 = arith.constant 0 : index
    %6 = vector.load %arg1[%c0_10, %c1_11, %c1_12, %c0_13] : memref<4x5x5x512xbf16, #tpu.memory_space<vmem>>, vector<4x4x4x512xbf16>
    %7 = vector.shape_cast %6 : vector<4x4x4x512xbf16> to vector<64x512xbf16>
    %8 = tpu.concatenate %1, %3, %5, %7 in 1 : vector<64x512xbf16>, vector<64x512xbf16>, vector<64x512xbf16>, vector<64x512xbf16> -> vector<64x2048xbf16>
    %c0_14 = arith.constant 0 : index
    %c0_15 = arith.constant 0 : index
    %9 = vector.load %arg2[%c0_14, %c0_15] : memref<2048x128xbf16, #tpu.memory_space<vmem>>, vector<2048x128xbf16>
    %cst = arith.constant dense<0.000000e+00> : vector<64x128xf32>
    %10 = tpu.matmul %8, %9, %cst {dimension_numbers = #tpu.dot_dimension_numbers<[1], [0], [0], [1], [0, 0, 1, 1], [], []>} : vector<64x2048xbf16>, vector<2048x128xbf16>, vector<64x128xf32> -> vector<64x128xf32>
    %c0_16 = arith.constant 0 : index
    %c0_17 = arith.constant 0 : index
    %11 = vector.load %arg3[%c0_16, %c0_17] : memref<1x128xf32, #tpu.memory_space<vmem>>, vector<1x128xf32>
    %12 = vector.broadcast %11 : vector<1x128xf32> to vector<64x128xf32>
    %13 = arith.addf %10, %12 : vector<64x128xf32>
    %cst_18 = arith.constant 0.000000e+00 : f32
    %14 = vector.broadcast %cst_18 : f32 to vector<64x128xf32>
    %15 = arith.maximumf %13, %14 : vector<64x128xf32>
    %16 = arith.truncf %15 : vector<64x128xf32> to vector<64x128xbf16>
    %c0_19 = arith.constant 0 : index
    %c0_20 = arith.constant 0 : index
    %17 = vector.load %arg4[%c0_19, %c0_20] : memref<64x128xbf16, #tpu.memory_space<vmem>>, vector<64x128xbf16>
    tpu.vector_store %arg4[%c0_19, %c0_20], %16 {strides = array<i32>} : memref<64x128xbf16, #tpu.memory_space<vmem>>, vector<64x128xbf16>,
    return
  }
  func.func @transform_0(%arg0: i32) -> (i32, i32, i32, i32) {
    %c0_i32 = arith.constant 0 : i32
    %c0_i32_0 = arith.constant 0 : i32
    %c0_i32_1 = arith.constant 0 : i32
    %c0_i32_2 = arith.constant 0 : i32
    return %arg0, %c0_i32, %c0_i32_0, %c0_i32_1 : i32, i32, i32, i32
  }
  func.func @transform_1(%arg0: i32) -> (i32, i32) {
    %c0_i32 = arith.constant 0 : i32
    %c0_i32_0 = arith.constant 0 : i32
    %c0_i32_1 = arith.constant 0 : i32
    return %c0_i32, %c0_i32_0 : i32, i32
  }
  func.func @transform_2(%arg0: i32) -> (i32, i32) {
    %c0_i32 = arith.constant 0 : i32
    %c0_i32_0 = arith.constant 0 : i32
    %c0_i32_1 = arith.constant 0 : i32
    return %c0_i32, %c0_i32_0 : i32, i32
  }
  func.func @transform_3(%arg0: i32) -> (i32, i32) {
    %c0_i32 = arith.constant 0 : i32
    %c0_i32_0 = arith.constant 0 : i32
    return %arg0, %c0_i32 : i32, i32
  }
}

</mosaic_0001>

<llo_original>
// kernel: _lambda_.2
$region0: #{_lambda_.2}
  #allocation0 [shape = 'u32[]', space=smem, size = 0x4, offset = 0x4, fixed_abs, tag = 'smem constant byte address 0x4 - core index']
  #allocation1 [shape = 'u32[144,128]{1,0:T(1,128)}', space=vmem, size = 0x12000, scoped, tag = 'internal scratch']
  %s0 = inlined_call_operand.vmem [shape: bf16[4,9,9,12], index: 0, kind: input, shape index: {}]
  %s1 = inlined_call_operand.vmem [shape: bf16[48,128], index: 1, kind: input, shape index: {}]
  %s2 = inlined_call_operand.vmem [shape: f32[1,128], index: 2, kind: input, shape index: {}]
  %s3 = inlined_call_operand.vmem [shape: bf16[256,128], index: 3, kind: output, shape index: {}]
  %s4 = sld [smem:[#allocation0]]
  $region22: #{_lambda_.2} parent=0
    _
  %s6 = ssub.s32 1, %s4
  %s7 = scalar_select 0, %s6, %s4
  // Predicated region
  $region2: #{_lambda_.2} parent=0 // pred_check
    _
  $region3: #{_lambda_.2} parent=0 // pred_check_branch
    %9 = sbr.rel (0) target = $region5
  $region4: #{_lambda_.2} parent=0 // pred_region
    _
  $region5: #{_lambda_.2} parent=0 // pred_fallthru
    _
  // Predicated region
  $region6: #{_lambda_.2} parent=0 // pred_check
    _
  $region7: #{_lambda_.2} parent=0 // pred_check_branch
    %11 = sbr.rel (0) target = $region9
  $region8: #{_lambda_.2} parent=0 // pred_region
    _
  $region9: #{_lambda_.2} parent=0 // pred_fallthru
    _
  // Predicated region
  $region10: #{_lambda_.2} parent=0 // pred_check
    _
  $region11: #{_lambda_.2} parent=0 // pred_check_branch
    %13 = sbr.rel (0) target = $region13
  $region12: #{_lambda_.2} parent=0 // pred_region
    _
  $region13: #{_lambda_.2} parent=0 // pred_fallthru
    _
  %v15 = vld [vmem:[%s0] sm:$0xf]
  %v16 = vld [vmem:[%s0 + $0x8] sm:$0xf]
  %v17 = vld [vmem:[%s0 + $0x10] sm:$0xf]
  %v18 = vld [vmem:[%s0 + $0x18] sm:$0xf]
  %v19 = vld [vmem:[%s0 + $0x20] sm:$0xf]
  %v20 = vld [vmem:[%s0 + $0x28] sm:$0xf]
  %v21 = vld [vmem:[%s0 + $0x30] sm:$0xf]
  %v22 = vld [vmem:[%s0 + $0x38] sm:$0xf]
  %v23 = vld [vmem:[%s0 + $0x48] sm:$0xf]
  %v24 = vld [vmem:[%s0 + $0x50] sm:$0xf]
  %v25 = vld [vmem:[%s0 + $0x58] sm:$0xf]
  %v26 = vld [vmem:[%s0 + $0x60] sm:$0xf]
  %v27 = vld [vmem:[%s0 + $0x68] sm:$0xf]
  %v28 = vld [vmem:[%s0 + $0x70] sm:$0xf]
  %v29 = vld [vmem:[%s0 + $0x78] sm:$0xf]
  %v30 = vld [vmem:[%s0 + $0x80] sm:$0xf]
  %v31 = vld [vmem:[%s0 + $0x90] sm:$0xf]
  %v32 = vld [vmem:[%s0 + $0x98] sm:$0xf]
  %v33 = vld [vmem:[%s0 + $0xa0] sm:$0xf]
  %v34 = vld [vmem:[%s0 + $0xa8] sm:$0xf]
  %v35 = vld [vmem:[%s0 + $0xb0] sm:$0xf]
  %v36 = vld [vmem:[%s0 + $0xb8] sm:$0xf]
  %v37 = vld [vmem:[%s0 + $0xc0] sm:$0xf]
  %v38 = vld [vmem:[%s0 + $0xc8] sm:$0xf]
  %v39 = vld [vmem:[%s0 + $0xd8] sm:$0xf]
  %v40 = vld [vmem:[%s0 + $0xe0] sm:$0xf]
  %v41 = vld [vmem:[%s0 + $0xe8] sm:$0xf]
  %v42 = vld [vmem:[%s0 + $0xf0] sm:$0xf]
  %v43 = vld [vmem:[%s0 + $0xf8] sm:$0xf]
  %v44 = vld [vmem:[%s0 + $0x100] sm:$0xf]
  %v45 = vld [vmem:[%s0 + $0x108] sm:$0xf]
  %v46 = vld [vmem:[%s0 + $0x110] sm:$0xf]
  %v47 = vld [vmem:[%s0 + $0x4] sm:$0x1]
  %v48 = vld [vmem:[%s0 + $0xc] sm:$0x1]
  %v49 = vld [vmem:[%s0 + $0x14] sm:$0x1]
  %v50 = vld [vmem:[%s0 + $0x1c] sm:$0x1]
  %v51 = vld [vmem:[%s0 + $0x24] sm:$0x1]
  %v52 = vld [vmem:[%s0 + $0x2c] sm:$0x1]
  %v53 = vld [vmem:[%s0 + $0x34] sm:$0x1]
  %v54 = vld [vmem:[%s0 + $0x3c] sm:$0x1]
  %v55 = vld [vmem:[%s0 + $0x4c] sm:$0x1]
  %v56 = vld [vmem:[%s0 + $0x54] sm:$0x1]
  %v57 = vld [vmem:[%s0 + $0x5c] sm:$0x1]
  %v58 = vld [vmem:[%s0 + $0x64] sm:$0x1]
  %v59 = vld [vmem:[%s0 + $0x6c] sm:$0x1]
  %v60 = vld [vmem:[%s0 + $0x74] sm:$0x1]
  %v61 = vld [vmem:[%s0 + $0x7c] sm:$0x1]
  %v62 = vld [vmem:[%s0 + $0x84] sm:$0x1]
  %v63 = vld [vmem:[%s0 + $0x94] sm:$0x1]
  %v64 = vld [vmem:[%s0 + $0x9c] sm:$0x1]
  %v65 = vld [vmem:[%s0 + $0xa4] sm:$0x1]
  %v66 = vld [vmem:[%s0 + $0xac] sm:$0x1]
  %v67 = vld [vmem:[%s0 + $0xb4] sm:$0x1]
  %v68 = vld [vmem:[%s0 + $0xbc] sm:$0x1]
  %v69 = vld [vmem:[%s0 + $0xc4] sm:$0x1]
  %v70 = vld [vmem:[%s0 + $0xcc] sm:$0x1]
  %v71 = vld [vmem:[%s0 + $0xdc] sm:$0x1]
  %v72 = vld [vmem:[%s0 + $0xe4] sm:$0x1]
  %v73 = vld [vmem:[%s0 + $0xec] sm:$0x1]
  %v74 = vld [vmem:[%s0 + $0xf4] sm:$0x1]
  %v75 = vld [vmem:[%s0 + $0xfc] sm:$0x1]
  %v76 = vld [vmem:[%s0 + $0x104] sm:$0x1]
  %v77 = vld [vmem:[%s0 + $0x10c] sm:$0x1]
  %v78 = vld [vmem:[%s0 + $0x114] sm:$0x1]
  %vm79 = vsmask.f32 3328
  %vm80 = vsmask.f32 7440
  %vm81 = vmor %vm79, %vm80
  %v83 = vshrl.u32 %v15, 16
  %v85 = vrot.slane %v83, 4
  %v86 = vshll.u32 %v15, 16
  %v88 = vrot.slane %v86, 5
  %v89 = vor.u32 %v85, %v88
  %v90 = vrot.slane %v89, 4
  %v92 = vshll.u32 %v47, 16
  %v94 = vrot.slane %v92, 5
  %v95 = vsel %vm81, %v90, %v94
  %v97 = vshrl.u32 %v16, 16
  %v99 = vrot.slane %v97, 4
  %v100 = vshll.u32 %v16, 16
  %v102 = vrot.slane %v100, 5
  %v103 = vor.u32 %v99, %v102
  %v104 = vrot.slane %v103, 4
  %v106 = vshll.u32 %v48, 16
  %v108 = vrot.slane %v106, 5
  %v109 = vsel %vm81, %v104, %v108
  %v111 = vshrl.u32 %v17, 16
  %v113 = vrot.slane %v111, 4
  %v114 = vshll.u32 %v17, 16
  %v116 = vrot.slane %v114, 5
  %v117 = vor.u32 %v113, %v116
  %v118 = vrot.slane %v117, 4
  %v120 = vshll.u32 %v49, 16
  %v122 = vrot.slane %v120, 5
  %v123 = vsel %vm81, %v118, %v122
  %v125 = vshrl.u32 %v18, 16
  %v127 = vrot.slane %v125, 4
  %v128 = vshll.u32 %v18, 16
  %v130 = vrot.slane %v128, 5
  %v131 = vor.u32 %v127, %v130
  %v132 = vrot.slane %v131, 4
  %v134 = vshll.u32 %v50, 16
  %v136 = vrot.slane %v134, 5
  %v137 = vsel %vm81, %v132, %v136
  %v139 = vshrl.u32 %v19, 16
  %v141 = vrot.slane %v139, 4
  %v142 = vshll.u32 %v19, 16
  %v144 = vrot.slane %v142, 5
  %v145 = vor.u32 %v141, %v144
  %v146 = vrot.slane %v145, 4
  %v148 = vshll.u32 %v51, 16
  %v150 = vrot.slane %v148, 5
  %v151 = vsel %vm81, %v146, %v150
  %v153 = vshrl.u32 %v20, 16
  %v155 = vrot.slane %v153, 4
  %v156 = vshll.u32 %v20, 16
  %v158 = vrot.slane %v156, 5
  %v159 = vor.u32 %v155, %v158
  %v160 = vrot.slane %v159, 4
  %v162 = vshll.u32 %v52, 16
  %v164 = vrot.slane %v162, 5
  %v165 = vsel %vm81, %v160, %v164
  %v167 = vshrl.u32 %v21, 16
  %v169 = vrot.slane %v167, 4
  %v170 = vshll.u32 %v21, 16
  %v172 = vrot.slane %v170, 5
  %v173 = vor.u32 %v169, %v172
  %v174 = vrot.slane %v173, 4
  %v176 = vshll.u32 %v53, 16
  %v178 = vrot.slane %v176, 5
  %v179 = vsel %vm81, %v174, %v178
  %v181 = vshrl.u32 %v22, 16
  %v183 = vrot.slane %v181, 4
  %v184 = vshll.u32 %v22, 16
  %v186 = vrot.slane %v184, 5
  %v187 = vor.u32 %v183, %v186
  %v188 = vrot.slane %v187, 4
  %v190 = vshll.u32 %v54, 16
  %v192 = vrot.slane %v190, 5
  %v193 = vsel %vm81, %v188, %v192
  %v195 = vshrl.u32 %v23, 16
  %v197 = vrot.slane %v195, 4
  %v198 = vshll.u32 %v23, 16
  %v200 = vrot.slane %v198, 5
  %v201 = vor.u32 %v197, %v200
  %v202 = vrot.slane %v201, 4
  %v204 = vshll.u32 %v55, 16
  %v206 = vrot.slane %v204, 5
  %v207 = vsel %vm81, %v202, %v206
  %v209 = vshrl.u32 %v24, 16
  %v211 = vrot.slane %v209, 4
  %v212 = vshll.u32 %v24, 16
  %v214 = vrot.slane %v212, 5
  %v215 = vor.u32 %v211, %v214
  %v216 = vrot.slane %v215, 4
  %v218 = vshll.u32 %v56, 16
  %v220 = vrot.slane %v218, 5
  %v221 = vsel %vm81, %v216, %v220
  %v223 = vshrl.u32 %v25, 16
  %v225 = vrot.slane %v223, 4
  %v226 = vshll.u32 %v25, 16
  %v228 = vrot.slane %v226, 5
  %v229 = vor.u32 %v225, %v228
  %v230 = vrot.slane %v229, 4
  %v232 = vshll.u32 %v57, 16
  %v234 = vrot.slane %v232, 5
  %v235 = vsel %vm81, %v230, %v234
  %v237 = vshrl.u32 %v26, 16
  %v239 = vrot.slane %v237, 4
  %v240 = vshll.u32 %v26, 16
  %v242 = vrot.slane %v240, 5
  %v243 = vor.u32 %v239, %v242
  %v244 = vrot.slane %v243, 4
  %v246 = vshll.u32 %v58, 16
  %v248 = vrot.slane %v246, 5
  %v249 = vsel %vm81, %v244, %v248
  %v251 = vshrl.u32 %v27, 16
  %v253 = vrot.slane %v251, 4
  %v254 = vshll.u32 %v27, 16
  %v256 = vrot.slane %v254, 5
  %v257 = vor.u32 %v253, %v256
  %v258 = vrot.slane %v257, 4
  %v260 = vshll.u32 %v59, 16
  %v262 = vrot.slane %v260, 5
  %v263 = vsel %vm81, %v258, %v262
  %v265 = vshrl.u32 %v28, 16
  %v267 = vrot.slane %v265, 4
  %v268 = vshll.u32 %v28, 16
  %v270 = vrot.slane %v268, 5
  %v271 = vor.u32 %v267, %v270
  %v272 = vrot.slane %v271, 4
  %v274 = vshll.u32 %v60, 16
  %v276 = vrot.slane %v274, 5
  %v277 = vsel %vm81, %v272, %v276
  %v279 = vshrl.u32 %v29, 16
  %v281 = vrot.slane %v279, 4
  %v282 = vshll.u32 %v29, 16
  %v284 = vrot.slane %v282, 5
  %v285 = vor.u32 %v281, %v284
  %v286 = vrot.slane %v285, 4
  %v288 = vshll.u32 %v61, 16
  %v290 = vrot.slane %v288, 5
  %v291 = vsel %vm81, %v286, %v290
  %v293 = vshrl.u32 %v30, 16
  %v295 = vrot.slane %v293, 4
  %v296 = vshll.u32 %v30, 16
  %v298 = vrot.slane %v296, 5
  %v299 = vor.u32 %v295, %v298
  %v300 = vrot.slane %v299, 4
  %v302 = vshll.u32 %v62, 16
  %v304 = vrot.slane %v302, 5
  %v305 = vsel %vm81, %v300, %v304
  %v307 = vshrl.u32 %v31, 16
  %v309 = vrot.slane %v307, 4
  %v310 = vshll.u32 %v31, 16
  %v312 = vrot.slane %v310, 5
  %v313 = vor.u32 %v309, %v312
  %v314 = vrot.slane %v313, 4
  %v316 = vshll.u32 %v63, 16
  %v318 = vrot.slane %v316, 5
  %v319 = vsel %vm81, %v314, %v318
  %v321 = vshrl.u32 %v32, 16
  %v323 = vrot.slane %v321, 4
  %v324 = vshll.u32 %v32, 16
  %v326 = vrot.slane %v324, 5
  %v327 = vor.u32 %v323, %v326
  %v328 = vrot.slane %v327, 4
  %v330 = vshll.u32 %v64, 16
  %v332 = vrot.slane %v330, 5
  %v333 = vsel %vm81, %v328, %v332
  %v335 = vshrl.u32 %v33, 16
  %v337 = vrot.slane %v335, 4
  %v338 = vshll.u32 %v33, 16
  %v340 = vrot.slane %v338, 5
  %v341 = vor.u32 %v337, %v340
  %v342 = vrot.slane %v341, 4
  %v344 = vshll.u32 %v65, 16
  %v346 = vrot.slane %v344, 5
  %v347 = vsel %vm81, %v342, %v346
  %v349 = vshrl.u32 %v34, 16
  %v351 = vrot.slane %v349, 4
  %v352 = vshll.u32 %v34, 16
  %v354 = vrot.slane %v352, 5
  %v355 = vor.u32 %v351, %v354
  %v356 = vrot.slane %v355, 4
  %v358 = vshll.u32 %v66, 16
  %v360 = vrot.slane %v358, 5
  %v361 = vsel %vm81, %v356, %v360
  %v363 = vshrl.u32 %v35, 16
  %v365 = vrot.slane %v363, 4
  %v366 = vshll.u32 %v35, 16
  %v368 = vrot.slane %v366, 5
  %v369 = vor.u32 %v365, %v368
  %v370 = vrot.slane %v369, 4
  %v372 = vshll.u32 %v67, 16
  %v374 = vrot.slane %v372, 5
  %v375 = vsel %vm81, %v370, %v374
  %v377 = vshrl.u32 %v36, 16
  %v379 = vrot.slane %v377, 4
  %v380 = vshll.u32 %v36, 16
  %v382 = vrot.slane %v380, 5
  %v383 = vor.u32 %v379, %v382
  %v384 = vrot.slane %v383, 4
  %v386 = vshll.u32 %v68, 16
  %v388 = vrot.slane %v386, 5
  %v389 = vsel %vm81, %v384, %v388
  %v391 = vshrl.u32 %v37, 16
  %v393 = vrot.slane %v391, 4
  %v394 = vshll.u32 %v37, 16
  %v396 = vrot.slane %v394, 5
  %v397 = vor.u32 %v393, %v396
  %v398 = vrot.slane %v397, 4
  %v400 = vshll.u32 %v69, 16
  %v402 = vrot.slane %v400, 5
  %v403 = vsel %vm81, %v398, %v402
  %v405 = vshrl.u32 %v38, 16
  %v407 = vrot.slane %v405, 4
  %v408 = vshll.u32 %v38, 16
  %v410 = vrot.slane %v408, 5
  %v411 = vor.u32 %v407, %v410
  %v412 = vrot.slane %v411, 4
  %v414 = vshll.u32 %v70, 16
  %v416 = vrot.slane %v414, 5
  %v417 = vsel %vm81, %v412, %v416
  %v419 = vshrl.u32 %v39, 16
  %v421 = vrot.slane %v419, 4
  %v422 = vshll.u32 %v39, 16
  %v424 = vrot.slane %v422, 5
  %v425 = vor.u32 %v421, %v424
  %v426 = vrot.slane %v425, 4
  %v428 = vshll.u32 %v71, 16
  %v430 = vrot.slane %v428, 5
  %v431 = vsel %vm81, %v426, %v430
  %v433 = vshrl.u32 %v40, 16
  %v435 = vrot.slane %v433, 4
  %v436 = vshll.u32 %v40, 16
  %v438 = vrot.slane %v436, 5
  %v439 = vor.u32 %v435, %v438
  %v440 = vrot.slane %v439, 4
  %v442 = vshll.u32 %v72, 16
  %v444 = vrot.slane %v442, 5
  %v445 = vsel %vm81, %v440, %v444
  %v447 = vshrl.u32 %v41, 16
  %v449 = vrot.slane %v447, 4
  %v450 = vshll.u32 %v41, 16
  %v452 = vrot.slane %v450, 5
  %v453 = vor.u32 %v449, %v452
  %v454 = vrot.slane %v453, 4
  %v456 = vshll.u32 %v73, 16
  %v458 = vrot.slane %v456, 5
  %v459 = vsel %vm81, %v454, %v458
  %v461 = vshrl.u32 %v42, 16
  %v463 = vrot.slane %v461, 4
  %v464 = vshll.u32 %v42, 16
  %v466 = vrot.slane %v464, 5
  %v467 = vor.u32 %v463, %v466
  %v468 = vrot.slane %v467, 4
  %v470 = vshll.u32 %v74, 16
  %v472 = vrot.slane %v470, 5
  %v473 = vsel %vm81, %v468, %v472
  %v475 = vshrl.u32 %v43, 16
  %v477 = vrot.slane %v475, 4
  %v478 = vshll.u32 %v43, 16
  %v480 = vrot.slane %v478, 5
  %v481 = vor.u32 %v477, %v480
  %v482 = vrot.slane %v481, 4
  %v484 = vshll.u32 %v75, 16
  %v486 = vrot.slane %v484, 5
  %v487 = vsel %vm81, %v482, %v486
  %v489 = vshrl.u32 %v44, 16
  %v491 = vrot.slane %v489, 4
  %v492 = vshll.u32 %v44, 16
  %v494 = vrot.slane %v492, 5
  %v495 = vor.u32 %v491, %v494
  %v496 = vrot.slane %v495, 4
  %v498 = vshll.u32 %v76, 16
  %v500 = vrot.slane %v498, 5
  %v501 = vsel %vm81, %v496, %v500
  %v503 = vshrl.u32 %v45, 16
  %v505 = vrot.slane %v503, 4
  %v506 = vshll.u32 %v45, 16
  %v508 = vrot.slane %v506, 5
  %v509 = vor.u32 %v505, %v508
  %v510 = vrot.slane %v509, 4
  %v512 = vshll.u32 %v77, 16
  %v514 = vrot.slane %v512, 5
  %v515 = vsel %vm81, %v510, %v514
  %v517 = vshrl.u32 %v46, 16
  %v519 = vrot.slane %v517, 4
  %v520 = vshll.u32 %v46, 16
  %v522 = vrot.slane %v520, 5
  %v523 = vor.u32 %v519, %v522
  %v524 = vrot.slane %v523, 4
  %v526 = vshll.u32 %v78, 16
  %v528 = vrot.slane %v526, 5
  %v529 = vsel %vm81, %v524, %v528
  %s530 = scalar_lea.vmem %s0, 8
  %v531 = vld [vmem:[%s530] sm:$0xf]
  %v532 = vld [vmem:[%s530 + $0x8] sm:$0xf]
  %v533 = vld [vmem:[%s530 + $0x10] sm:$0xf]
  %v534 = vld [vmem:[%s530 + $0x18] sm:$0xf]
  %v535 = vld [vmem:[%s530 + $0x20] sm:$0xf]
  %v536 = vld [vmem:[%s530 + $0x28] sm:$0xf]
  %v537 = vld [vmem:[%s530 + $0x30] sm:$0xf]
  %v538 = vld [vmem:[%s530 + $0x38] sm:$0xf]
  %v539 = vld [vmem:[%s530 + $0x48] sm:$0xf]
  %v540 = vld [vmem:[%s530 + $0x50] sm:$0xf]
  %v541 = vld [vmem:[%s530 + $0x58] sm:$0xf]
  %v542 = vld [vmem:[%s530 + $0x60] sm:$0xf]
  %v543 = vld [vmem:[%s530 + $0x68] sm:$0xf]
  %v544 = vld [vmem:[%s530 + $0x70] sm:$0xf]
  %v545 = vld [vmem:[%s530 + $0x78] sm:$0xf]
  %v546 = vld [vmem:[%s530 + $0x80] sm:$0xf]
  %v547 = vld [vmem:[%s530 + $0x90] sm:$0xf]
  %v548 = vld [vmem:[%s530 + $0x98] sm:$0xf]
  %v549 = vld [vmem:[%s530 + $0xa0] sm:$0xf]
  %v550 = vld [vmem:[%s530 + $0xa8] sm:$0xf]
  %v551 = vld [vmem:[%s530 + $0xb0] sm:$0xf]
  %v552 = vld [vmem:[%s530 + $0xb8] sm:$0xf]
  %v553 = vld [vmem:[%s530 + $0xc0] sm:$0xf]
  %v554 = vld [vmem:[%s530 + $0xc8] sm:$0xf]
  %v555 = vld [vmem:[%s530 + $0xd8] sm:$0xf]
  %v556 = vld [vmem:[%s530 + $0xe0] sm:$0xf]
  %v557 = vld [vmem:[%s530 + $0xe8] sm:$0xf]
  %v558 = vld [vmem:[%s530 + $0xf0] sm:$0xf]
  %v559 = vld [vmem:[%s530 + $0xf8] sm:$0xf]
  %v560 = vld [vmem:[%s530 + $0x100] sm:$0xf]
  %v561 = vld [vmem:[%s530 + $0x108] sm:$0xf]
  %v562 = vld [vmem:[%s530 + $0x110] sm:$0xf]
  %v563 = vld [vmem:[%s530 + $0x4] sm:$0x1]
  %v564 = vld [vmem:[%s530 + $0xc] sm:$0x1]
  %v565 = vld [vmem:[%s530 + $0x14] sm:$0x1]
  %v566 = vld [vmem:[%s530 + $0x1c] sm:$0x1]
  %v567 = vld [vmem:[%s530 + $0x24] sm:$0x1]
  %v568 = vld [vmem:[%s530 + $0x2c] sm:$0x1]
  %v569 = vld [vmem:[%s530 + $0x34] sm:$0x1]
  %v570 = vld [vmem:[%s530 + $0x3c] sm:$0x1]
  %v571 = vld [vmem:[%s530 + $0x4c] sm:$0x1]
  %v572 = vld [vmem:[%s530 + $0x54] sm:$0x1]
  %v573 = vld [vmem:[%s530 + $0x5c] sm:$0x1]
  %v574 = vld [vmem:[%s530 + $0x64] sm:$0x1]
  %v575 = vld [vmem:[%s530 + $0x6c] sm:$0x1]
  %v576 = vld [vmem:[%s530 + $0x74] sm:$0x1]
  %v577 = vld [vmem:[%s530 + $0x7c] sm:$0x1]
  %v578 = vld [vmem:[%s530 + $0x84] sm:$0x1]
  %v579 = vld [vmem:[%s530 + $0x94] sm:$0x1]
  %v580 = vld [vmem:[%s530 + $0x9c] sm:$0x1]
  %v581 = vld [vmem:[%s530 + $0xa4] sm:$0x1]
  %v582 = vld [vmem:[%s530 + $0xac] sm:$0x1]
  %v583 = vld [vmem:[%s530 + $0xb4] sm:$0x1]
  %v584 = vld [vmem:[%s530 + $0xbc] sm:$0x1]
  %v585 = vld [vmem:[%s530 + $0xc4] sm:$0x1]
  %v586 = vld [vmem:[%s530 + $0xcc] sm:$0x1]
  %v587 = vld [vmem:[%s530 + $0xdc] sm:$0x1]
  %v588 = vld [vmem:[%s530 + $0xe4] sm:$0x1]
  %v589 = vld [vmem:[%s530 + $0xec] sm:$0x1]
  %v590 = vld [vmem:[%s530 + $0xf4] sm:$0x1]
  %v591 = vld [vmem:[%s530 + $0xfc] sm:$0x1]
  %v592 = vld [vmem:[%s530 + $0x104] sm:$0x1]
  %v593 = vld [vmem:[%s530 + $0x10c] sm:$0x1]
  %v594 = vld [vmem:[%s530 + $0x114] sm:$0x1]
  %v596 = vshrl.u32 %v531, 16
  %v598 = vrot.slane %v596, 4
  %v599 = vshll.u32 %v531, 16
  %v601 = vrot.slane %v599, 5
  %v602 = vor.u32 %v598, %v601
  %v603 = vrot.slane %v602, 4
  %v605 = vshll.u32 %v563, 16
  %v607 = vrot.slane %v605, 5
  %v608 = vsel %vm81, %v603, %v607
  %v610 = vshrl.u32 %v532, 16
  %v612 = vrot.slane %v610, 4
  %v613 = vshll.u32 %v532, 16
  %v615 = vrot.slane %v613, 5
  %v616 = vor.u32 %v612, %v615
  %v617 = vrot.slane %v616, 4
  %v619 = vshll.u32 %v564, 16
  %v621 = vrot.slane %v619, 5
  %v622 = vsel %vm81, %v617, %v621
  %v624 = vshrl.u32 %v533, 16
  %v626 = vrot.slane %v624, 4
  %v627 = vshll.u32 %v533, 16
  %v629 = vrot.slane %v627, 5
  %v630 = vor.u32 %v626, %v629
  %v631 = vrot.slane %v630, 4
  %v633 = vshll.u32 %v565, 16
  %v635 = vrot.slane %v633, 5
  %v636 = vsel %vm81, %v631, %v635
  %v638 = vshrl.u32 %v534, 16
  %v640 = vrot.slane %v638, 4
  %v641 = vshll.u32 %v534, 16
  %v643 = vrot.slane %v641, 5
  %v644 = vor.u32 %v640, %v643
  %v645 = vrot.slane %v644, 4
  %v647 = vshll.u32 %v566, 16
  %v649 = vrot.slane %v647, 5
  %v650 = vsel %vm81, %v645, %v649
  %v652 = vshrl.u32 %v535, 16
  %v654 = vrot.slane %v652, 4
  %v655 = vshll.u32 %v535, 16
  %v657 = vrot.slane %v655, 5
  %v658 = vor.u32 %v654, %v657
  %v659 = vrot.slane %v658, 4
  %v661 = vshll.u32 %v567, 16
  %v663 = vrot.slane %v661, 5
  %v664 = vsel %vm81, %v659, %v663
  %v666 = vshrl.u32 %v536, 16
  %v668 = vrot.slane %v666, 4
  %v669 = vshll.u32 %v536, 16
  %v671 = vrot.slane %v669, 5
  %v672 = vor.u32 %v668, %v671
  %v673 = vrot.slane %v672, 4
  %v675 = vshll.u32 %v568, 16
  %v677 = vrot.slane %v675, 5
  %v678 = vsel %vm81, %v673, %v677
  %v680 = vshrl.u32 %v537, 16
  %v682 = vrot.slane %v680, 4
  %v683 = vshll.u32 %v537, 16
  %v685 = vrot.slane %v683, 5
  %v686 = vor.u32 %v682, %v685
  %v687 = vrot.slane %v686, 4
  %v689 = vshll.u32 %v569, 16
  %v691 = vrot.slane %v689, 5
  %v692 = vsel %vm81, %v687, %v691
  %v694 = vshrl.u32 %v538, 16
  %v696 = vrot.slane %v694, 4
  %v697 = vshll.u32 %v538, 16
  %v699 = vrot.slane %v697, 5
  %v700 = vor.u32 %v696, %v699
  %v701 = vrot.slane %v700, 4
  %v703 = vshll.u32 %v570, 16
  %v705 = vrot.slane %v703, 5
  %v706 = vsel %vm81, %v701, %v705
  %v708 = vshrl.u32 %v539, 16
  %v710 = vrot.slane %v708, 4
  %v711 = vshll.u32 %v539, 16
  %v713 = vrot.slane %v711, 5
  %v714 = vor.u32 %v710, %v713
  %v715 = vrot.slane %v714, 4
  %v717 = vshll.u32 %v571, 16
  %v719 = vrot.slane %v717, 5
  %v720 = vsel %vm81, %v715, %v719
  %v722 = vshrl.u32 %v540, 16
  %v724 = vrot.slane %v722, 4
  %v725 = vshll.u32 %v540, 16
  %v727 = vrot.slane %v725, 5
  %v728 = vor.u32 %v724, %v727
  %v729 = vrot.slane %v728, 4
  %v731 = vshll.u32 %v572, 16
  %v733 = vrot.slane %v731, 5
  %v734 = vsel %vm81, %v729, %v733
  %v736 = vshrl.u32 %v541, 16
  %v738 = vrot.slane %v736, 4
  %v739 = vshll.u32 %v541, 16
  %v741 = vrot.slane %v739, 5
  %v742 = vor.u32 %v738, %v741
  %v743 = vrot.slane %v742, 4
  %v745 = vshll.u32 %v573, 16
  %v747 = vrot.slane %v745, 5
  %v748 = vsel %vm81, %v743, %v747
  %v750 = vshrl.u32 %v542, 16
  %v752 = vrot.slane %v750, 4
  %v753 = vshll.u32 %v542, 16
  %v755 = vrot.slane %v753, 5
  %v756 = vor.u32 %v752, %v755
  %v757 = vrot.slane %v756, 4
  %v759 = vshll.u32 %v574, 16
  %v761 = vrot.slane %v759, 5
  %v762 = vsel %vm81, %v757, %v761
  %v764 = vshrl.u32 %v543, 16
  %v766 = vrot.slane %v764, 4
  %v767 = vshll.u32 %v543, 16
  %v769 = vrot.slane %v767, 5
  %v770 = vor.u32 %v766, %v769
  %v771 = vrot.slane %v770, 4
  %v773 = vshll.u32 %v575, 16
  %v775 = vrot.slane %v773, 5
  %v776 = vsel %vm81, %v771, %v775
  %v778 = vshrl.u32 %v544, 16
  %v780 = vrot.slane %v778, 4
  %v781 = vshll.u32 %v544, 16
  %v783 = vrot.slane %v781, 5
  %v784 = vor.u32 %v780, %v783
  %v785 = vrot.slane %v784, 4
  %v787 = vshll.u32 %v576, 16
  %v789 = vrot.slane %v787, 5
  %v790 = vsel %vm81, %v785, %v789
  %v792 = vshrl.u32 %v545, 16
  %v794 = vrot.slane %v792, 4
  %v795 = vshll.u32 %v545, 16
  %v797 = vrot.slane %v795, 5
  %v798 = vor.u32 %v794, %v797
  %v799 = vrot.slane %v798, 4
  %v801 = vshll.u32 %v577, 16
  %v803 = vrot.slane %v801, 5
  %v804 = vsel %vm81, %v799, %v803
  %v806 = vshrl.u32 %v546, 16
  %v808 = vrot.slane %v806, 4
  %v809 = vshll.u32 %v546, 16
  %v811 = vrot.slane %v809, 5
  %v812 = vor.u32 %v808, %v811
  %v813 = vrot.slane %v812, 4
  %v815 = vshll.u32 %v578, 16
  %v817 = vrot.slane %v815, 5
  %v818 = vsel %vm81, %v813, %v817
  %v820 = vshrl.u32 %v547, 16
  %v822 = vrot.slane %v820, 4
  %v823 = vshll.u32 %v547, 16
  %v825 = vrot.slane %v823, 5
  %v826 = vor.u32 %v822, %v825
  %v827 = vrot.slane %v826, 4
  %v829 = vshll.u32 %v579, 16
  %v831 = vrot.slane %v829, 5
  %v832 = vsel %vm81, %v827, %v831
  %v834 = vshrl.u32 %v548, 16
  %v836 = vrot.slane %v834, 4
  %v837 = vshll.u32 %v548, 16
  %v839 = vrot.slane %v837, 5
  %v840 = vor.u32 %v836, %v839
  %v841 = vrot.slane %v840, 4
  %v843 = vshll.u32 %v580, 16
  %v845 = vrot.slane %v843, 5
  %v846 = vsel %vm81, %v841, %v845
  %v848 = vshrl.u32 %v549, 16
  %v850 = vrot.slane %v848, 4
  %v851 = vshll.u32 %v549, 16
  %v853 = vrot.slane %v851, 5
  %v854 = vor.u32 %v850, %v853
  %v855 = vrot.slane %v854, 4
  %v857 = vshll.u32 %v581, 16
  %v859 = vrot.slane %v857, 5
  %v860 = vsel %vm81, %v855, %v859
  %v862 = vshrl.u32 %v550, 16
  %v864 = vrot.slane %v862, 4
  %v865 = vshll.u32 %v550, 16
  %v867 = vrot.slane %v865, 5
  %v868 = vor.u32 %v864, %v867
  %v869 = vrot.slane %v868, 4
  %v871 = vshll.u32 %v582, 16
  %v873 = vrot.slane %v871, 5
  %v874 = vsel %vm81, %v869, %v873
  %v876 = vshrl.u32 %v551, 16
  %v878 = vrot.slane %v876, 4
  %v879 = vshll.u32 %v551, 16
  %v881 = vrot.slane %v879, 5
  %v882 = vor.u32 %v878, %v881
  %v883 = vrot.slane %v882, 4
  %v885 = vshll.u32 %v583, 16
  %v887 = vrot.slane %v885, 5
  %v888 = vsel %vm81, %v883, %v887
  %v890 = vshrl.u32 %v552, 16
  %v892 = vrot.slane %v890, 4
  %v893 = vshll.u32 %v552, 16
  %v895 = vrot.slane %v893, 5
  %v896 = vor.u32 %v892, %v895
  %v897 = vrot.slane %v896, 4
  %v899 = vshll.u32 %v584, 16
  %v901 = vrot.slane %v899, 5
  %v902 = vsel %vm81, %v897, %v901
  %v904 = vshrl.u32 %v553, 16
  %v906 = vrot.slane %v904, 4
  %v907 = vshll.u32 %v553, 16
  %v909 = vrot.slane %v907, 5
  %v910 = vor.u32 %v906, %v909
  %v911 = vrot.slane %v910, 4
  %v913 = vshll.u32 %v585, 16
  %v915 = vrot.slane %v913, 5
  %v916 = vsel %vm81, %v911, %v915
  %v918 = vshrl.u32 %v554, 16
  %v920 = vrot.slane %v918, 4
  %v921 = vshll.u32 %v554, 16
  %v923 = vrot.slane %v921, 5
  %v924 = vor.u32 %v920, %v923
  %v925 = vrot.slane %v924, 4
  %v927 = vshll.u32 %v586, 16
  %v929 = vrot.slane %v927, 5
  %v930 = vsel %vm81, %v925, %v929
  %v932 = vshrl.u32 %v555, 16
  %v934 = vrot.slane %v932, 4
  %v935 = vshll.u32 %v555, 16
  %v937 = vrot.slane %v935, 5
  %v938 = vor.u32 %v934, %v937
  %v939 = vrot.slane %v938, 4
  %v941 = vshll.u32 %v587, 16
  %v943 = vrot.slane %v941, 5
  %v944 = vsel %vm81, %v939, %v943
  %v946 = vshrl.u32 %v556, 16
  %v948 = vrot.slane %v946, 4
  %v949 = vshll.u32 %v556, 16
  %v951 = vrot.slane %v949, 5
  %v952 = vor.u32 %v948, %v951
  %v953 = vrot.slane %v952, 4
  %v955 = vshll.u32 %v588, 16
  %v957 = vrot.slane %v955, 5
  %v958 = vsel %vm81, %v953, %v957
  %v960 = vshrl.u32 %v557, 16
  %v962 = vrot.slane %v960, 4
  %v963 = vshll.u32 %v557, 16
  %v965 = vrot.slane %v963, 5
  %v966 = vor.u32 %v962, %v965
  %v967 = vrot.slane %v966, 4
  %v969 = vshll.u32 %v589, 16
  %v971 = vrot.slane %v969, 5
  %v972 = vsel %vm81, %v967, %v971
  %v974 = vshrl.u32 %v558, 16
  %v976 = vrot.slane %v974, 4
  %v977 = vshll.u32 %v558, 16
  %v979 = vrot.slane %v977, 5
  %v980 = vor.u32 %v976, %v979
  %v981 = vrot.slane %v980, 4
  %v983 = vshll.u32 %v590, 16
  %v985 = vrot.slane %v983, 5
  %v986 = vsel %vm81, %v981, %v985
  %v988 = vshrl.u32 %v559, 16
  %v990 = vrot.slane %v988, 4
  %v991 = vshll.u32 %v559, 16
  %v993 = vrot.slane %v991, 5
  %v994 = vor.u32 %v990, %v993
  %v995 = vrot.slane %v994, 4
  %v997 = vshll.u32 %v591, 16
  %v999 = vrot.slane %v997, 5
  %v1000 = vsel %vm81, %v995, %v999
  %v1002 = vshrl.u32 %v560, 16
  %v1004 = vrot.slane %v1002, 4
  %v1005 = vshll.u32 %v560, 16
  %v1007 = vrot.slane %v1005, 5
  %v1008 = vor.u32 %v1004, %v1007
  %v1009 = vrot.slane %v1008, 4
  %v1011 = vshll.u32 %v592, 16
  %v1013 = vrot.slane %v1011, 5
  %v1014 = vsel %vm81, %v1009, %v1013
  %v1016 = vshrl.u32 %v561, 16
  %v1018 = vrot.slane %v1016, 4
  %v1019 = vshll.u32 %v561, 16
  %v1021 = vrot.slane %v1019, 5
  %v1022 = vor.u32 %v1018, %v1021
  %v1023 = vrot.slane %v1022, 4
  %v1025 = vshll.u32 %v593, 16
  %v1027 = vrot.slane %v1025, 5
  %v1028 = vsel %vm81, %v1023, %v1027
  %v1030 = vshrl.u32 %v562, 16
  %v1032 = vrot.slane %v1030, 4
  %v1033 = vshll.u32 %v562, 16
  %v1035 = vrot.slane %v1033, 5
  %v1036 = vor.u32 %v1032, %v1035
  %v1037 = vrot.slane %v1036, 4
  %v1039 = vshll.u32 %v594, 16
  %v1041 = vrot.slane %v1039, 5
  %v1042 = vsel %vm81, %v1037, %v1041
  %v1043 = vld [vmem:[%s1] sm:$0xf]
  %v1044 = vld [vmem:[%s1 + $0x4] sm:$0xf]
  %v1045 = vld [vmem:[%s1 + $0x8] sm:$0xf]
  %v1046 = vld [vmem:[%s1 + $0xc] sm:$0xf]
  %v1047 = vld [vmem:[%s1 + $0x10] sm:$0xf]
  %v1048 = vld [vmem:[%s1 + $0x14] sm:$0xf]
  %v1049 = vunpack.c.l.b16 %v95
  %v1050 = vunpack.c.l.b16 %v109
  %v1051 = vunpack.c.l.b16 %v123
  %v1052 = vunpack.c.l.b16 %v137
  %v1053 = vunpack.c.l.b16 %v151
  %v1054 = vunpack.c.l.b16 %v165
  %v1055 = vunpack.c.l.b16 %v179
  %v1056 = vunpack.c.l.b16 %v193
  %v1057 = vunpack.c.l.b16 %v207
  %v1058 = vunpack.c.l.b16 %v221
  %v1059 = vunpack.c.l.b16 %v235
  %v1060 = vunpack.c.l.b16 %v249
  %v1061 = vunpack.c.l.b16 %v263
  %v1062 = vunpack.c.l.b16 %v277
  %v1063 = vunpack.c.l.b16 %v291
  %v1064 = vunpack.c.l.b16 %v305
  %v1065 = vunpack.c.l.b16 %v319
  %v1066 = vunpack.c.l.b16 %v333
  %v1067 = vunpack.c.l.b16 %v347
  %v1068 = vunpack.c.l.b16 %v361
  %v1069 = vunpack.c.l.b16 %v375
  %v1070 = vunpack.c.l.b16 %v389
  %v1071 = vunpack.c.l.b16 %v403
  %v1072 = vunpack.c.l.b16 %v417
  %v1073 = vunpack.c.l.b16 %v431
  %v1074 = vunpack.c.l.b16 %v445
  %v1075 = vunpack.c.l.b16 %v459
  %v1076 = vunpack.c.l.b16 %v473
  %v1077 = vunpack.c.l.b16 %v487
  %v1078 = vunpack.c.l.b16 %v501
  %v1079 = vunpack.c.l.b16 %v515
  %v1080 = vunpack.c.l.b16 %v529
  %v1081 = vpack.c.b16 %v1050, %v1049
  %v1082 = vpack.c.b16 %v1052, %v1051
  %v1083 = vpack.c.b16 %v1054, %v1053
  %v1084 = vpack.c.b16 %v1056, %v1055
  %v1085 = vpack.c.b16 %v1058, %v1057
  %v1086 = vpack.c.b16 %v1060, %v1059
  %v1087 = vpack.c.b16 %v1062, %v1061
  %v1088 = vpack.c.b16 %v1064, %v1063
  %v1089 = vpack.c.b16 %v1066, %v1065
  %v1090 = vpack.c.b16 %v1068, %v1067
  %v1091 = vpack.c.b16 %v1070, %v1069
  %v1092 = vpack.c.b16 %v1072, %v1071
  %v1093 = vpack.c.b16 %v1074, %v1073
  %v1094 = vpack.c.b16 %v1076, %v1075
  %v1095 = vpack.c.b16 %v1078, %v1077
  %v1096 = vpack.c.b16 %v1080, %v1079
  %v1099 = vunpack.c.l.b16 %v1044
  %v1100 = vunpack.c.l.b16 %v1045
  %v1101 = vpack.c.b16 %v1100, %v1099
  %v1102 = vrot.slane %v1101, 2
  %vm1103 = vcmask 97280
  %v1105 = vsel %vm1103, %v1081, 0
  %v1108 = vsel %vm1103, %v1082, 0
  %v1111 = vsel %vm1103, %v1083, 0
  %v1114 = vsel %vm1103, %v1084, 0
  %v1117 = vsel %vm1103, %v1085, 0
  %v1120 = vsel %vm1103, %v1086, 0
  %v1123 = vsel %vm1103, %v1087, 0
  %v1126 = vsel %vm1103, %v1088, 0
  %v1129 = vsel %vm1103, %v1089, 0
  %v1132 = vsel %vm1103, %v1090, 0
  %v1135 = vsel %vm1103, %v1091, 0
  %v1138 = vsel %vm1103, %v1092, 0
  %v1141 = vsel %vm1103, %v1093, 0
  %v1144 = vsel %vm1103, %v1094, 0
  %v1147 = vsel %vm1103, %v1095, 0
  %v1150 = vsel %vm1103, %v1096, 0
  %vm1152 = vcmask 1045504
  %v1154 = vsel %vm1152, %v1102, 0
  %1156 = vmatprep.subr.bf16.mxu0 0
  %1157 = vmatpush1.bf16.msra.mxu0 %v1154
  %1158 = vmatprep.subr.bf16.mxu0 0
  %1159 = vmatpush1.bf16.msra.mxu0 0
  %1160 = vmatprep.subr.bf16.mxu0 0
  %1161 = vmatpush1.bf16.msra.mxu0 0
  %1162 = vmatprep.subr.bf16.mxu0 0
  %1163 = vmatpush1.bf16.msra.mxu0 0
  %1164 = vmatprep.subr.bf16.mxu0 0
  %1165 = vmatpush1.bf16.msra.mxu0 0
  %1166 = vmatprep.subr.bf16.mxu0 0
  %1167 = vmatpush1.bf16.msra.mxu0 0
  %1168 = vmatprep.subr.bf16.mxu0 0
  %1169 = vmatpush1.bf16.msra.mxu0 0
  %1170 = vmatprep.subr.bf16.mxu0 0
  %1171 = vmatpush1.bf16.msra.mxu0 0
  %1172 = vmatprep.subr.bf16.mxu0 0
  %1173 = vmatpush1.bf16.msra.mxu0 0
  %1174 = vmatprep.subr.bf16.mxu0 0
  %1175 = vmatpush1.bf16.msra.mxu0 0
  %1176 = vmatprep.subr.bf16.mxu0 0
  %1177 = vmatpush1.bf16.msra.mxu0 0
  %1178 = vmatprep.subr.bf16.mxu0 0
  %1179 = vmatpush1.bf16.msra.mxu0 0
  %1180 = vmatprep.subr.bf16.mxu0 0
  %1181 = vmatpush1.bf16.msra.mxu0 0
  %1182 = vmatprep.subr.bf16.mxu0 0
  %1183 = vmatpush1.bf16.msra.mxu0 0
  %1184 = vmatprep.subr.bf16.mxu0 0
  %1185 = vmatpush1.bf16.msra.mxu0 0
  %1186 = vmatprep.subr.bf16.mxu0 0
  %1187 = vmatpush1.bf16.msra.mxu0 0
  %1188 = vmatprep.mubr.bf16.mxu0 0
  %1189 = vmatmul.mubr.bf16.gmra.mrb[0].mxu0 %v1105
  %v1190 = vpop.f32.mrb[0].mxu0
  %v1191 = vadd.f32 0.0, %v1190
  %v1192 = vpop.f32.mrb[0].mxu0
  %v1193 = vpop.f32.mrb[0].mxu0
  %v1194 = vadd.f32 0.0, %v1193
  %v1195 = vpop.f32.mrb[0].mxu0
  %1196 = vmatprep.mubr.bf16.mxu0 0
  %1197 = vmatmul.mubr.bf16.gmra.mrb[0].mxu0 %v1108
  %v1198 = vpop.f32.mrb[0].mxu0
  %v1199 = vadd.f32 0.0, %v1198
  %v1200 = vpop.f32.mrb[0].mxu0
  %v1201 = vpop.f32.mrb[0].mxu0
  %v1202 = vadd.f32 0.0, %v1201
  %v1203 = vpop.f32.mrb[0].mxu0
  %1204 = vmatprep.mubr.bf16.mxu0 0
  %1205 = vmatmul.mubr.bf16.gmra.mrb[0].mxu0 %v1111
  %v1206 = vpop.f32.mrb[0].mxu0
  %v1207 = vadd.f32 0.0, %v1206
  %v1208 = vpop.f32.mrb[0].mxu0
  %v1209 = vpop.f32.mrb[0].mxu0
  %v1210 = vadd.f32 0.0, %v1209
  %v1211 = vpop.f32.mrb[0].mxu0
  %1212 = vmatprep.mubr.bf16.mxu0 0
  %1213 = vmatmul.mubr.bf16.gmra.mrb[0].mxu0 %v1114
  %v1214 = vpop.f32.mrb[0].mxu0
  %v1215 = vadd.f32 0.0, %v1214
  %v1216 = vpop.f32.mrb[0].mxu0
  %v1217 = vpop.f32.mrb[0].mxu0
  %v1218 = vadd.f32 0.0, %v1217
  %v1219 = vpop.f32.mrb[0].mxu0
  %1220 = vmatprep.mubr.bf16.mxu0 0
  %1221 = vmatmul.mubr.bf16.gmra.mrb[0].mxu0 %v1117
  %v1222 = vpop.f32.mrb[0].mxu0
  %v1223 = vadd.f32 0.0, %v1222
  %v1224 = vpop.f32.mrb[0].mxu0
  %v1225 = vpop.f32.mrb[0].mxu0
  %v1226 = vadd.f32 0.0, %v1225
  %v1227 = vpop.f32.mrb[0].mxu0
  %1228 = vmatprep.mubr.bf16.mxu0 0
  %1229 = vmatmul.mubr.bf16.gmra.mrb[0].mxu0 %v1120
  %v1230 = vpop.f32.mrb[0].mxu0
  %v1231 = vadd.f32 0.0, %v1230
  %v1232 = vpop.f32.mrb[0].mxu0
  %v1233 = vpop.f32.mrb[0].mxu0
  %v1234 = vadd.f32 0.0, %v1233
  %v1235 = vpop.f32.mrb[0].mxu0
  %1236 = vmatprep.mubr.bf16.mxu0 0
  %1237 = vmatmul.mubr.bf16.gmra.mrb[0].mxu0 %v1123
  %v1238 = vpop.f32.mrb[0].mxu0
  %v1239 = vadd.f32 0.0, %v1238
  %v1240 = vpop.f32.mrb[0].mxu0
  %v1241 = vpop.f32.mrb[0].mxu0
  %v1242 = vadd.f32 0.0, %v1241
  %v1243 = vpop.f32.mrb[0].mxu0
  %1244 = vmatprep.mubr.bf16.mxu0 0
  %1245 = vmatmul.mubr.bf16.gmra.mrb[0].mxu0 %v1126
  %v1246 = vpop.f32.mrb[0].mxu0
  %v1247 = vadd.f32 0.0, %v1246
  %v1248 = vpop.f32.mrb[0].mxu0
  %v1249 = vpop.f32.mrb[0].mxu0
  %v1250 = vadd.f32 0.0, %v1249
  %v1251 = vpop.f32.mrb[0].mxu0
  %1252 = vmatprep.mubr.bf16.mxu0 0
  %1253 = vmatmul.mubr.bf16.gmra.mrb[0].mxu0 %v1129
  %v1254 = vpop.f32.mrb[0].mxu0
  %v1255 = vadd.f32 0.0, %v1254
  %v1256 = vpop.f32.mrb[0].mxu0
  %v1257 = vpop.f32.mrb[0].mxu0
  %v1258 = vadd.f32 0.0, %v1257
  %v1259 = vpop.f32.mrb[0].mxu0
  %1260 = vmatprep.mubr.bf16.mxu0 0
  %1261 = vmatmul.mubr.bf16.gmra.mrb[0].mxu0 %v1132
  %v1262 = vpop.f32.mrb[0].mxu0
  %v1263 = vadd.f32 0.0, %v1262
  %v1264 = vpop.f32.mrb[0].mxu0
  %v1265 = vpop.f32.mrb[0].mxu0
  %v1266 = vadd.f32 0.0, %v1265
  %v1267 = vpop.f32.mrb[0].mxu0
  %1268 = vmatprep.mubr.bf16.mxu0 0
  %1269 = vmatmul.mubr.bf16.gmra.mrb[0].mxu0 %v1135
  %v1270 = vpop.f32.mrb[0].mxu0
  %v1271 = vadd.f32 0.0, %v1270
  %v1272 = vpop.f32.mrb[0].mxu0
  %v1273 = vpop.f32.mrb[0].mxu0
  %v1274 = vadd.f32 0.0, %v1273
  %v1275 = vpop.f32.mrb[0].mxu0
  %1276 = vmatprep.mubr.bf16.mxu0 0
  %1277 = vmatmul.mubr.bf16.gmra.mrb[0].mxu0 %v1138
  %v1278 = vpop.f32.mrb[0].mxu0
  %v1279 = vadd.f32 0.0, %v1278
  %v1280 = vpop.f32.mrb[0].mxu0
  %v1281 = vpop.f32.mrb[0].mxu0
  %v1282 = vadd.f32 0.0, %v1281
  %v1283 = vpop.f32.mrb[0].mxu0
  %1284 = vmatprep.mubr.bf16.mxu0 0
  %1285 = vmatmul.mubr.bf16.gmra.mrb[0].mxu0 %v1141
  %v1286 = vpop.f32.mrb[0].mxu0
  %v1287 = vadd.f32 0.0, %v1286
  %v1288 = vpop.f32.mrb[0].mxu0
  %v1289 = vpop.f32.mrb[0].mxu0
  %v1290 = vadd.f32 0.0, %v1289
  %v1291 = vpop.f32.mrb[0].mxu0
  %1292 = vmatprep.mubr.bf16.mxu0 0
  %1293 = vmatmul.mubr.bf16.gmra.mrb[0].mxu0 %v1144
  %v1294 = vpop.f32.mrb[0].mxu0
  %v1295 = vadd.f32 0.0, %v1294
  %v1296 = vpop.f32.mrb[0].mxu0
  %v1297 = vpop.f32.mrb[0].mxu0
  %v1298 = vadd.f32 0.0, %v1297
  %v1299 = vpop.f32.mrb[0].mxu0
  %1300 = vmatprep.mubr.bf16.mxu0 0
  %1301 = vmatmul.mubr.bf16.gmra.mrb[0].mxu0 %v1147
  %v1302 = vpop.f32.mrb[0].mxu0
  %v1303 = vadd.f32 0.0, %v1302
  %v1304 = vpop.f32.mrb[0].mxu0
  %v1305 = vpop.f32.mrb[0].mxu0
  %v1306 = vadd.f32 0.0, %v1305
  %v1307 = vpop.f32.mrb[0].mxu0
  %1308 = vmatprep.mubr.bf16.mxu0 0
  %1309 = vmatmul.mubr.bf16.gmra.mrb[0].mxu0 %v1150
  %v1310 = vpop.f32.mrb[0].mxu0
  %v1311 = vadd.f32 0.0, %v1310
  %v1312 = vpop.f32.mrb[0].mxu0
  %v1313 = vpop.f32.mrb[0].mxu0
  %v1314 = vadd.f32 0.0, %v1313
  %v1315 = vpop.f32.mrb[0].mxu0
  %1316 = vdwg.mxu0
  %v1317 = vunpack.c.l.b16 %v608
  %v1318 = vunpack.c.l.b16 %v622
  %v1319 = vunpack.c.l.b16 %v636
  %v1320 = vunpack.c.l.b16 %v650
  %v1321 = vunpack.c.l.b16 %v664
  %v1322 = vunpack.c.l.b16 %v678
  %v1323 = vunpack.c.l.b16 %v692
  %v1324 = vunpack.c.l.b16 %v706
  %v1325 = vunpack.c.l.b16 %v720
  %v1326 = vunpack.c.l.b16 %v734
  %v1327 = vunpack.c.l.b16 %v748
  %v1328 = vunpack.c.l.b16 %v762
  %v1329 = vunpack.c.l.b16 %v776
  %v1330 = vunpack.c.l.b16 %v790
  %v1331 = vunpack.c.l.b16 %v804
  %v1332 = vunpack.c.l.b16 %v818
  %v1333 = vunpack.c.l.b16 %v832
  %v1334 = vunpack.c.l.b16 %v846
  %v1335 = vunpack.c.l.b16 %v860
  %v1336 = vunpack.c.l.b16 %v874
  %v1337 = vunpack.c.l.b16 %v888
  %v1338 = vunpack.c.l.b16 %v902
  %v1339 = vunpack.c.l.b16 %v916
  %v1340 = vunpack.c.l.b16 %v930
  %v1341 = vunpack.c.l.b16 %v944
  %v1342 = vunpack.c.l.b16 %v958
  %v1343 = vunpack.c.l.b16 %v972
  %v1344 = vunpack.c.l.b16 %v986
  %v1345 = vunpack.c.l.b16 %v1000
  %v1346 = vunpack.c.l.b16 %v1014
  %v1347 = vunpack.c.l.b16 %v1028
  %v1348 = vunpack.c.l.b16 %v1042
  %v1349 = vpack.c.b16 %v1318, %v1317
  %v1350 = vpack.c.b16 %v1320, %v1319
  %v1351 = vpack.c.b16 %v1322, %v1321
  %v1352 = vpack.c.b16 %v1324, %v1323
  %v1353 = vpack.c.b16 %v1326, %v1325
  %v1354 = vpack.c.b16 %v1328, %v1327
  %v1355 = vpack.c.b16 %v1330, %v1329
  %v1356 = vpack.c.b16 %v1332, %v1331
  %v1357 = vpack.c.b16 %v1334, %v1333
  %v1358 = vpack.c.b16 %v1336, %v1335
  %v1359 = vpack.c.b16 %v1338, %v1337
  %v1360 = vpack.c.b16 %v1340, %v1339
  %v1361 = vpack.c.b16 %v1342, %v1341
  %v1362 = vpack.c.b16 %v1344, %v1343
  %v1363 = vpack.c.b16 %v1346, %v1345
  %v1364 = vpack.c.b16 %v1348, %v1347
  %v1367 = vunpack.c.l.b16 %v1047
  %v1368 = vunpack.c.l.b16 %v1048
  %v1369 = vpack.c.b16 %v1368, %v1367
  %v1370 = vrot.slane %v1369, 2
  %v1372 = vsel %vm1103, %v1349, 0
  %v1375 = vsel %vm1103, %v1350, 0
  %v1378 = vsel %vm1103, %v1351, 0
  %v1381 = vsel %vm1103, %v1352, 0
  %v1384 = vsel %vm1103, %v1353, 0
  %v1387 = vsel %vm1103, %v1354, 0
  %v1390 = vsel %vm1103, %v1355, 0
  %v1393 = vsel %vm1103, %v1356, 0
  %v1396 = vsel %vm1103, %v1357, 0
  %v1399 = vsel %vm1103, %v1358, 0
  %v1402 = vsel %vm1103, %v1359, 0
  %v1405 = vsel %vm1103, %v1360, 0
  %v1408 = vsel %vm1103, %v1361, 0
  %v1411 = vsel %vm1103, %v1362, 0
  %v1414 = vsel %vm1103, %v1363, 0
  %v1417 = vsel %vm1103, %v1364, 0
  %v1420 = vsel %vm1152, %v1370, 0
  %1422 = vmatprep.subr.bf16.mxu0 0
  %1423 = vmatpush1.bf16.msra.mxu0 %v1420
  %1424 = vmatprep.subr.bf16.mxu0 0
  %1425 = vmatpush1.bf16.msra.mxu0 0
  %1426 = vmatprep.subr.bf16.mxu0 0
  %1427 = vmatpush1.bf16.msra.mxu0 0
  %1428 = vmatprep.subr.bf16.mxu0 0
  %1429 = vmatpush1.bf16.msra.mxu0 0
  %1430 = vmatprep.subr.bf16.mxu0 0
  %1431 = vmatpush1.bf16.msra.mxu0 0
  %1432 = vmatprep.subr.bf16.mxu0 0
  %1433 = vmatpush1.bf16.msra.mxu0 0
  %1434 = vmatprep.subr.bf16.mxu0 0
  %1435 = vmatpush1.bf16.msra.mxu0 0
  %1436 = vmatprep.subr.bf16.mxu0 0
  %1437 = vmatpush1.bf16.msra.mxu0 0
  %1438 = vmatprep.subr.bf16.mxu0 0
  %1439 = vmatpush1.bf16.msra.mxu0 0
  %1440 = vmatprep.subr.bf16.mxu0 0
  %1441 = vmatpush1.bf16.msra.mxu0 0
  %1442 = vmatprep.subr.bf16.mxu0 0
  %1443 = vmatpush1.bf16.msra.mxu0 0
  %1444 = vmatprep.subr.bf16.mxu0 0
  %1445 = vmatpush1.bf16.msra.mxu0 0
  %1446 = vmatprep.subr.bf16.mxu0 0
  %1447 = vmatpush1.bf16.msra.mxu0 0
  %1448 = vmatprep.subr.bf16.mxu0 0
  %1449 = vmatpush1.bf16.msra.mxu0 0
  %1450 = vmatprep.subr.bf16.mxu0 0
  %1451 = vmatpush1.bf16.msra.mxu0 0
  %1452 = vmatprep.subr.bf16.mxu0 0
  %1453 = vmatpush1.bf16.msra.mxu0 0
  %1454 = vmatprep.mubr.bf16.mxu0 0
  %1455 = vmatmul.mubr.bf16.gmra.mrb[0].mxu0 %v1372
  %v1456 = vpop.f32.mrb[0].mxu0
  %v1457 = vadd.f32 0.0, %v1456
  %v1458 = vpop.f32.mrb[0].mxu0
  %v1459 = vpop.f32.mrb[0].mxu0
  %v1460 = vadd.f32 0.0, %v1459
  %v1461 = vpop.f32.mrb[0].mxu0
  %1462 = vmatprep.mubr.bf16.mxu0 0
  %1463 = vmatmul.mubr.bf16.gmra.mrb[0].mxu0 %v1375
  %v1464 = vpop.f32.mrb[0].mxu0
  %v1465 = vadd.f32 0.0, %v1464
  %v1466 = vpop.f32.mrb[0].mxu0
  %v1467 = vpop.f32.mrb[0].mxu0
  %v1468 = vadd.f32 0.0, %v1467
  %v1469 = vpop.f32.mrb[0].mxu0
  %1470 = vmatprep.mubr.bf16.mxu0 0
  %1471 = vmatmul.mubr.bf16.gmra.mrb[0].mxu0 %v1378
  %v1472 = vpop.f32.mrb[0].mxu0
  %v1473 = vadd.f32 0.0, %v1472
  %v1474 = vpop.f32.mrb[0].mxu0
  %v1475 = vpop.f32.mrb[0].mxu0
  %v1476 = vadd.f32 0.0, %v1475
  %v1477 = vpop.f32.mrb[0].mxu0
  %1478 = vmatprep.mubr.bf16.mxu0 0
  %1479 = vmatmul.mubr.bf16.gmra.mrb[0].mxu0 %v1381
  %v1480 = vpop.f32.mrb[0].mxu0
  %v1481 = vadd.f32 0.0, %v1480
  %v1482 = vpop.f32.mrb[0].mxu0
  %v1483 = vpop.f32.mrb[0].mxu0
  %v1484 = vadd.f32 0.0, %v1483
  %v1485 = vpop.f32.mrb[0].mxu0
  %1486 = vmatprep.mubr.bf16.mxu0 0
  %1487 = vmatmul.mubr.bf16.gmra.mrb[0].mxu0 %v1384
  %v1488 = vpop.f32.mrb[0].mxu0
  %v1489 = vadd.f32 0.0, %v1488
  %v1490 = vpop.f32.mrb[0].mxu0
  %v1491 = vpop.f32.mrb[0].mxu0
  %v1492 = vadd.f32 0.0, %v1491
  %v1493 = vpop.f32.mrb[0].mxu0
  %1494 = vmatprep.mubr.bf16.mxu0 0
  %1495 = vmatmul.mubr.bf16.gmra.mrb[0].mxu0 %v1387
  %v1496 = vpop.f32.mrb[0].mxu0
  %v1497 = vadd.f32 0.0, %v1496
  %v1498 = vpop.f32.mrb[0].mxu0
  %v1499 = vpop.f32.mrb[0].mxu0
  %v1500 = vadd.f32 0.0, %v1499
  %v1501 = vpop.f32.mrb[0].mxu0
  %1502 = vmatprep.mubr.bf16.mxu0 0
  %1503 = vmatmul.mubr.bf16.gmra.mrb[0].mxu0 %v1390
  %v1504 = vpop.f32.mrb[0].mxu0
  %v1505 = vadd.f32 0.0, %v1504
  %v1506 = vpop.f32.mrb[0].mxu0
  %v1507 = vpop.f32.mrb[0].mxu0
  %v1508 = vadd.f32 0.0, %v1507
  %v1509 = vpop.f32.mrb[0].mxu0
  %1510 = vmatprep.mubr.bf16.mxu0 0
  %1511 = vmatmul.mubr.bf16.gmra.mrb[0].mxu0 %v1393
  %v1512 = vpop.f32.mrb[0].mxu0
  %v1513 = vadd.f32 0.0, %v1512
  %v1514 = vpop.f32.mrb[0].mxu0
  %v1515 = vpop.f32.mrb[0].mxu0
  %v1516 = vadd.f32 0.0, %v1515
  %v1517 = vpop.f32.mrb[0].mxu0
  %1518 = vmatprep.mubr.bf16.mxu0 0
  %1519 = vmatmul.mubr.bf16.gmra.mrb[0].mxu0 %v1396
  %v1520 = vpop.f32.mrb[0].mxu0
  %v1521 = vadd.f32 0.0, %v1520
  %v1522 = vpop.f32.mrb[0].mxu0
  %v1523 = vpop.f32.mrb[0].mxu0
  %v1524 = vadd.f32 0.0, %v1523
  %v1525 = vpop.f32.mrb[0].mxu0
  %1526 = vmatprep.mubr.bf16.mxu0 0
  %1527 = vmatmul.mubr.bf16.gmra.mrb[0].mxu0 %v1399
  %v1528 = vpop.f32.mrb[0].mxu0
  %v1529 = vadd.f32 0.0, %v1528
  %v1530 = vpop.f32.mrb[0].mxu0
  %v1531 = vpop.f32.mrb[0].mxu0
  %v1532 = vadd.f32 0.0, %v1531
  %v1533 = vpop.f32.mrb[0].mxu0
  %1534 = vmatprep.mubr.bf16.mxu0 0
  %1535 = vmatmul.mubr.bf16.gmra.mrb[0].mxu0 %v1402
  %v1536 = vpop.f32.mrb[0].mxu0
  %v1537 = vadd.f32 0.0, %v1536
  %v1538 = vpop.f32.mrb[0].mxu0
  %v1539 = vpop.f32.mrb[0].mxu0
  %v1540 = vadd.f32 0.0, %v1539
  %v1541 = vpop.f32.mrb[0].mxu0
  %1542 = vmatprep.mubr.bf16.mxu0 0
  %1543 = vmatmul.mubr.bf16.gmra.mrb[0].mxu0 %v1405
  %v1544 = vpop.f32.mrb[0].mxu0
  %v1545 = vadd.f32 0.0, %v1544
  %v1546 = vpop.f32.mrb[0].mxu0
  %v1547 = vpop.f32.mrb[0].mxu0
  %v1548 = vadd.f32 0.0, %v1547
  %v1549 = vpop.f32.mrb[0].mxu0
  %1550 = vmatprep.mubr.bf16.mxu0 0
  %1551 = vmatmul.mubr.bf16.gmra.mrb[0].mxu0 %v1408
  %v1552 = vpop.f32.mrb[0].mxu0
  %v1553 = vadd.f32 0.0, %v1552
  %v1554 = vpop.f32.mrb[0].mxu0
  %v1555 = vpop.f32.mrb[0].mxu0
  %v1556 = vadd.f32 0.0, %v1555
  %v1557 = vpop.f32.mrb[0].mxu0
  %1558 = vmatprep.mubr.bf16.mxu0 0
  %1559 = vmatmul.mubr.bf16.gmra.mrb[0].mxu0 %v1411
  %v1560 = vpop.f32.mrb[0].mxu0
  %v1561 = vadd.f32 0.0, %v1560
  %v1562 = vpop.f32.mrb[0].mxu0
  %v1563 = vpop.f32.mrb[0].mxu0
  %v1564 = vadd.f32 0.0, %v1563
  %v1565 = vpop.f32.mrb[0].mxu0
  %1566 = vmatprep.mubr.bf16.mxu0 0
  %1567 = vmatmul.mubr.bf16.gmra.mrb[0].mxu0 %v1414
  %v1568 = vpop.f32.mrb[0].mxu0
  %v1569 = vadd.f32 0.0, %v1568
  %v1570 = vpop.f32.mrb[0].mxu0
  %v1571 = vpop.f32.mrb[0].mxu0
  %v1572 = vadd.f32 0.0, %v1571
  %v1573 = vpop.f32.mrb[0].mxu0
  %1574 = vmatprep.mubr.bf16.mxu0 0
  %1575 = vmatmul.mubr.bf16.gmra.mrb[0].mxu0 %v1417
  %v1576 = vpop.f32.mrb[0].mxu0
  %v1577 = vadd.f32 0.0, %v1576
  %v1578 = vpop.f32.mrb[0].mxu0
  %v1579 = vpop.f32.mrb[0].mxu0
  %v1580 = vadd.f32 0.0, %v1579
  %v1581 = vpop.f32.mrb[0].mxu0
  %1582 = vdwg.mxu0
  %v1615 = vunpack.c.l.b16 %v15
  %v1616 = vunpack.c.l.b16 %v16
  %v1617 = vunpack.c.l.b16 %v17
  %v1618 = vunpack.c.l.b16 %v18
  %v1619 = vunpack.c.l.b16 %v19
  %v1620 = vunpack.c.l.b16 %v20
  %v1621 = vunpack.c.l.b16 %v21
  %v1622 = vunpack.c.l.b16 %v22
  %v1623 = vunpack.c.l.b16 %v23
  %v1624 = vunpack.c.l.b16 %v24
  %v1625 = vunpack.c.l.b16 %v25
  %v1626 = vunpack.c.l.b16 %v26
  %v1627 = vunpack.c.l.b16 %v27
  %v1628 = vunpack.c.l.b16 %v28
  %v1629 = vunpack.c.l.b16 %v29
  %v1630 = vunpack.c.l.b16 %v30
  %v1631 = vunpack.c.l.b16 %v31
  %v1632 = vunpack.c.l.b16 %v32
  %v1633 = vunpack.c.l.b16 %v33
  %v1634 = vunpack.c.l.b16 %v34
  %v1635 = vunpack.c.l.b16 %v35
  %v1636 = vunpack.c.l.b16 %v36
  %v1637 = vunpack.c.l.b16 %v37
  %v1638 = vunpack.c.l.b16 %v38
  %v1639 = vunpack.c.l.b16 %v39
  %v1640 = vunpack.c.l.b16 %v40
  %v1641 = vunpack.c.l.b16 %v41
  %v1642 = vunpack.c.l.b16 %v42
  %v1643 = vunpack.c.l.b16 %v43
  %v1644 = vunpack.c.l.b16 %v44
  %v1645 = vunpack.c.l.b16 %v45
  %v1646 = vunpack.c.l.b16 %v46
  %v1647 = vpack.c.b16 %v1616, %v1615
  %v1648 = vpack.c.b16 %v1618, %v1617
  %v1649 = vpack.c.b16 %v1620, %v1619
  %v1650 = vpack.c.b16 %v1622, %v1621
  %v1651 = vpack.c.b16 %v1624, %v1623
  %v1652 = vpack.c.b16 %v1626, %v1625
  %v1653 = vpack.c.b16 %v1628, %v1627
  %v1654 = vpack.c.b16 %v1630, %v1629
  %v1655 = vpack.c.b16 %v1632, %v1631
  %v1656 = vpack.c.b16 %v1634, %v1633
  %v1657 = vpack.c.b16 %v1636, %v1635
  %v1658 = vpack.c.b16 %v1638, %v1637
  %v1659 = vpack.c.b16 %v1640, %v1639
  %v1660 = vpack.c.b16 %v1642, %v1641
  %v1661 = vpack.c.b16 %v1644, %v1643
  %v1662 = vpack.c.b16 %v1646, %v1645
  %v1664 = vunpack.c.l.b16 %v1043
  %v1665 = vpack.c.b16 %v1099, %v1664
  %v1667 = vsel %vm1103, %v1647, 0
  %v1670 = vsel %vm1103, %v1648, 0
  %v1673 = vsel %vm1103, %v1649, 0
  %v1676 = vsel %vm1103, %v1650, 0
  %v1679 = vsel %vm1103, %v1651, 0
  %v1682 = vsel %vm1103, %v1652, 0
  %v1685 = vsel %vm1103, %v1653, 0
  %v1688 = vsel %vm1103, %v1654, 0
  %v1691 = vsel %vm1103, %v1655, 0
  %v1694 = vsel %vm1103, %v1656, 0
  %v1697 = vsel %vm1103, %v1657, 0
  %v1700 = vsel %vm1103, %v1658, 0
  %v1703 = vsel %vm1103, %v1659, 0
  %v1706 = vsel %vm1103, %v1660, 0
  %v1709 = vsel %vm1103, %v1661, 0
  %v1712 = vsel %vm1103, %v1662, 0
  %v1715 = vsel %vm1152, %v1665, 0
  %1717 = vmatprep.subr.bf16.mxu0 0
  %1718 = vmatpush1.bf16.msra.mxu0 %v1715
  %1719 = vmatprep.subr.bf16.mxu0 0
  %1720 = vmatpush1.bf16.msra.mxu0 0
  %1721 = vmatprep.subr.bf16.mxu0 0
  %1722 = vmatpush1.bf16.msra.mxu0 0
  %1723 = vmatprep.subr.bf16.mxu0 0
  %1724 = vmatpush1.bf16.msra.mxu0 0
  %1725 = vmatprep.subr.bf16.mxu0 0
  %1726 = vmatpush1.bf16.msra.mxu0 0
  %1727 = vmatprep.subr.bf16.mxu0 0
  %1728 = vmatpush1.bf16.msra.mxu0 0
  %1729 = vmatprep.subr.bf16.mxu0 0
  %1730 = vmatpush1.bf16.msra.mxu0 0
  %1731 = vmatprep.subr.bf16.mxu0 0
  %1732 = vmatpush1.bf16.msra.mxu0 0
  %1733 = vmatprep.subr.bf16.mxu0 0
  %1734 = vmatpush1.bf16.msra.mxu0 0
  %1735 = vmatprep.subr.bf16.mxu0 0
  %1736 = vmatpush1.bf16.msra.mxu0 0
  %1737 = vmatprep.subr.bf16.mxu0 0
  %1738 = vmatpush1.bf16.msra.mxu0 0
  %1739 = vmatprep.subr.bf16.mxu0 0
  %1740 = vmatpush1.bf16.msra.mxu0 0
  %1741 = vmatprep.subr.bf16.mxu0 0
  %1742 = vmatpush1.bf16.msra.mxu0 0
  %1743 = vmatprep.subr.bf16.mxu0 0
  %1744 = vmatpush1.bf16.msra.mxu0 0
  %1745 = vmatprep.subr.bf16.mxu0 0
  %1746 = vmatpush1.bf16.msra.mxu0 0
  %1747 = vmatprep.subr.bf16.mxu0 0
  %1748 = vmatpush1.bf16.msra.mxu0 0
  %1749 = vmatprep.mubr.bf16.mxu0 0
  %1750 = vmatmul.mubr.bf16.gmra.mrb[0].mxu0 %v1667
  %v1751 = vpop.f32.mrb[0].mxu0
  %v1752 = vadd.f32 %v1191, %v1751
  %v1753 = vpop.f32.mrb[0].mxu0
  %v1754 = vpop.f32.mrb[0].mxu0
  %v1755 = vadd.f32 %v1194, %v1754
  %v1756 = vpop.f32.mrb[0].mxu0
  %1757 = vmatprep.mubr.bf16.mxu0 0
  %1758 = vmatmul.mubr.bf16.gmra.mrb[0].mxu0 %v1670
  %v1759 = vpop.f32.mrb[0].mxu0
  %v1760 = vadd.f32 %v1199, %v1759
  %v1761 = vpop.f32.mrb[0].mxu0
  %v1762 = vpop.f32.mrb[0].mxu0
  %v1763 = vadd.f32 %v1202, %v1762
  %v1764 = vpop.f32.mrb[0].mxu0
  %1765 = vmatprep.mubr.bf16.mxu0 0
  %1766 = vmatmul.mubr.bf16.gmra.mrb[0].mxu0 %v1673
  %v1767 = vpop.f32.mrb[0].mxu0
  %v1768 = vadd.f32 %v1207, %v1767
  %v1769 = vpop.f32.mrb[0].mxu0
  %v1770 = vpop.f32.mrb[0].mxu0
  %v1771 = vadd.f32 %v1210, %v1770
  %v1772 = vpop.f32.mrb[0].mxu0
  %1773 = vmatprep.mubr.bf16.mxu0 0
  %1774 = vmatmul.mubr.bf16.gmra.mrb[0].mxu0 %v1676
  %v1775 = vpop.f32.mrb[0].mxu0
  %v1776 = vadd.f32 %v1215, %v1775
  %v1777 = vpop.f32.mrb[0].mxu0
  %v1778 = vpop.f32.mrb[0].mxu0
  %v1779 = vadd.f32 %v1218, %v1778
  %v1780 = vpop.f32.mrb[0].mxu0
  %1781 = vmatprep.mubr.bf16.mxu0 0
  %1782 = vmatmul.mubr.bf16.gmra.mrb[0].mxu0 %v1679
  %v1783 = vpop.f32.mrb[0].mxu0
  %v1784 = vadd.f32 %v1223, %v1783
  %v1785 = vpop.f32.mrb[0].mxu0
  %v1786 = vpop.f32.mrb[0].mxu0
  %v1787 = vadd.f32 %v1226, %v1786
  %v1788 = vpop.f32.mrb[0].mxu0
  %1789 = vmatprep.mubr.bf16.mxu0 0
  %1790 = vmatmul.mubr.bf16.gmra.mrb[0].mxu0 %v1682
  %v1791 = vpop.f32.mrb[0].mxu0
  %v1792 = vadd.f32 %v1231, %v1791
  %v1793 = vpop.f32.mrb[0].mxu0
  %v1794 = vpop.f32.mrb[0].mxu0
  %v1795 = vadd.f32 %v1234, %v1794
  %v1796 = vpop.f32.mrb[0].mxu0
  %1797 = vmatprep.mubr.bf16.mxu0 0
  %1798 = vmatmul.mubr.bf16.gmra.mrb[0].mxu0 %v1685
  %v1799 = vpop.f32.mrb[0].mxu0
  %v1800 = vadd.f32 %v1239, %v1799
  %v1801 = vpop.f32.mrb[0].mxu0
  %v1802 = vpop.f32.mrb[0].mxu0
  %v1803 = vadd.f32 %v1242, %v1802
  %v1804 = vpop.f32.mrb[0].mxu0
  %1805 = vmatprep.mubr.bf16.mxu0 0
  %1806 = vmatmul.mubr.bf16.gmra.mrb[0].mxu0 %v1688
  %v1807 = vpop.f32.mrb[0].mxu0
  %v1808 = vadd.f32 %v1247, %v1807
  %v1809 = vpop.f32.mrb[0].mxu0
  %v1810 = vpop.f32.mrb[0].mxu0
  %v1811 = vadd.f32 %v1250, %v1810
  %v1812 = vpop.f32.mrb[0].mxu0
  %1813 = vmatprep.mubr.bf16.mxu0 0
  %1814 = vmatmul.mubr.bf16.gmra.mrb[0].mxu0 %v1691
  %v1815 = vpop.f32.mrb[0].mxu0
  %v1816 = vadd.f32 %v1255, %v1815
  %v1817 = vpop.f32.mrb[0].mxu0
  %v1818 = vpop.f32.mrb[0].mxu0
  %v1819 = vadd.f32 %v1258, %v1818
  %v1820 = vpop.f32.mrb[0].mxu0
  %1821 = vmatprep.mubr.bf16.mxu0 0
  %1822 = vmatmul.mubr.bf16.gmra.mrb[0].mxu0 %v1694
  %v1823 = vpop.f32.mrb[0].mxu0
  %v1824 = vadd.f32 %v1263, %v1823
  %v1825 = vpop.f32.mrb[0].mxu0
  %v1826 = vpop.f32.mrb[0].mxu0
  %v1827 = vadd.f32 %v1266, %v1826
  %v1828 = vpop.f32.mrb[0].mxu0
  %1829 = vmatprep.mubr.bf16.mxu0 0
  %1830 = vmatmul.mubr.bf16.gmra.mrb[0].mxu0 %v1697
  %v1831 = vpop.f32.mrb[0].mxu0
  %v1832 = vadd.f32 %v1271, %v1831
  %v1833 = vpop.f32.mrb[0].mxu0
  %v1834 = vpop.f32.mrb[0].mxu0
  %v1835 = vadd.f32 %v1274, %v1834
  %v1836 = vpop.f32.mrb[0].mxu0
  %1837 = vmatprep.mubr.bf16.mxu0 0
  %1838 = vmatmul.mubr.bf16.gmra.mrb[0].mxu0 %v1700
  %v1839 = vpop.f32.mrb[0].mxu0
  %v1840 = vadd.f32 %v1279, %v1839
  %v1841 = vpop.f32.mrb[0].mxu0
  %v1842 = vpop.f32.mrb[0].mxu0
  %v1843 = vadd.f32 %v1282, %v1842
  %v1844 = vpop.f32.mrb[0].mxu0
  %1845 = vmatprep.mubr.bf16.mxu0 0
  %1846 = vmatmul.mubr.bf16.gmra.mrb[0].mxu0 %v1703
  %v1847 = vpop.f32.mrb[0].mxu0
  %v1848 = vadd.f32 %v1287, %v1847
  %v1849 = vpop.f32.mrb[0].mxu0
  %v1850 = vpop.f32.mrb[0].mxu0
  %v1851 = vadd.f32 %v1290, %v1850
  %v1852 = vpop.f32.mrb[0].mxu0
  %1853 = vmatprep.mubr.bf16.mxu0 0
  %1854 = vmatmul.mubr.bf16.gmra.mrb[0].mxu0 %v1706
  %v1855 = vpop.f32.mrb[0].mxu0
  %v1856 = vadd.f32 %v1295, %v1855
  %v1857 = vpop.f32.mrb[0].mxu0
  %v1858 = vpop.f32.mrb[0].mxu0
  %v1859 = vadd.f32 %v1298, %v1858
  %v1860 = vpop.f32.mrb[0].mxu0
  %1861 = vmatprep.mubr.bf16.mxu0 0
  %1862 = vmatmul.mubr.bf16.gmra.mrb[0].mxu0 %v1709
  %v1863 = vpop.f32.mrb[0].mxu0
  %v1864 = vadd.f32 %v1303, %v1863
  %v1865 = vpop.f32.mrb[0].mxu0
  %v1866 = vpop.f32.mrb[0].mxu0
  %v1867 = vadd.f32 %v1306, %v1866
  %v1868 = vpop.f32.mrb[0].mxu0
  %1869 = vmatprep.mubr.bf16.mxu0 0
  %1870 = vmatmul.mubr.bf16.gmra.mrb[0].mxu0 %v1712
  %v1871 = vpop.f32.mrb[0].mxu0
  %v1872 = vadd.f32 %v1311, %v1871
  %v1873 = vpop.f32.mrb[0].mxu0
  %v1874 = vpop.f32.mrb[0].mxu0
  %v1875 = vadd.f32 %v1314, %v1874
  %v1876 = vpop.f32.mrb[0].mxu0
  %1877 = vdwg.mxu0
  %v1910 = vunpack.c.l.b16 %v531
  %v1911 = vunpack.c.l.b16 %v532
  %v1912 = vunpack.c.l.b16 %v533
  %v1913 = vunpack.c.l.b16 %v534
  %v1914 = vunpack.c.l.b16 %v535
  %v1915 = vunpack.c.l.b16 %v536
  %v1916 = vunpack.c.l.b16 %v537
  %v1917 = vunpack.c.l.b16 %v538
  %v1918 = vunpack.c.l.b16 %v539
  %v1919 = vunpack.c.l.b16 %v540
  %v1920 = vunpack.c.l.b16 %v541
  %v1921 = vunpack.c.l.b16 %v542
  %v1922 = vunpack.c.l.b16 %v543
  %v1923 = vunpack.c.l.b16 %v544
  %v1924 = vunpack.c.l.b16 %v545
  %v1925 = vunpack.c.l.b16 %v546
  %v1926 = vunpack.c.l.b16 %v547
  %v1927 = vunpack.c.l.b16 %v548
  %v1928 = vunpack.c.l.b16 %v549
  %v1929 = vunpack.c.l.b16 %v550
  %v1930 = vunpack.c.l.b16 %v551
  %v1931 = vunpack.c.l.b16 %v552
  %v1932 = vunpack.c.l.b16 %v553
  %v1933 = vunpack.c.l.b16 %v554
  %v1934 = vunpack.c.l.b16 %v555
  %v1935 = vunpack.c.l.b16 %v556
  %v1936 = vunpack.c.l.b16 %v557
  %v1937 = vunpack.c.l.b16 %v558
  %v1938 = vunpack.c.l.b16 %v559
  %v1939 = vunpack.c.l.b16 %v560
  %v1940 = vunpack.c.l.b16 %v561
  %v1941 = vunpack.c.l.b16 %v562
  %v1942 = vpack.c.b16 %v1911, %v1910
  %v1943 = vpack.c.b16 %v1913, %v1912
  %v1944 = vpack.c.b16 %v1915, %v1914
  %v1945 = vpack.c.b16 %v1917, %v1916
  %v1946 = vpack.c.b16 %v1919, %v1918
  %v1947 = vpack.c.b16 %v1921, %v1920
  %v1948 = vpack.c.b16 %v1923, %v1922
  %v1949 = vpack.c.b16 %v1925, %v1924
  %v1950 = vpack.c.b16 %v1927, %v1926
  %v1951 = vpack.c.b16 %v1929, %v1928
  %v1952 = vpack.c.b16 %v1931, %v1930
  %v1953 = vpack.c.b16 %v1933, %v1932
  %v1954 = vpack.c.b16 %v1935, %v1934
  %v1955 = vpack.c.b16 %v1937, %v1936
  %v1956 = vpack.c.b16 %v1939, %v1938
  %v1957 = vpack.c.b16 %v1941, %v1940
  %v1959 = vunpack.c.l.b16 %v1046
  %v1960 = vpack.c.b16 %v1367, %v1959
  %v1962 = vsel %vm1103, %v1942, 0
  %v1965 = vsel %vm1103, %v1943, 0
  %v1968 = vsel %vm1103, %v1944, 0
  %v1971 = vsel %vm1103, %v1945, 0
  %v1974 = vsel %vm1103, %v1946, 0
  %v1977 = vsel %vm1103, %v1947, 0
  %v1980 = vsel %vm1103, %v1948, 0
  %v1983 = vsel %vm1103, %v1949, 0
  %v1986 = vsel %vm1103, %v1950, 0
  %v1989 = vsel %vm1103, %v1951, 0
  %v1992 = vsel %vm1103, %v1952, 0
  %v1995 = vsel %vm1103, %v1953, 0
  %v1998 = vsel %vm1103, %v1954, 0
  %v2001 = vsel %vm1103, %v1955, 0
  %v2004 = vsel %vm1103, %v1956, 0
  %v2007 = vsel %vm1103, %v1957, 0
  %v2010 = vsel %vm1152, %v1960, 0
  %2012 = vmatprep.subr.bf16.mxu0 0
  %2013 = vmatpush1.bf16.msra.mxu0 %v2010
  %2014 = vmatprep.subr.bf16.mxu0 0
  %2015 = vmatpush1.bf16.msra.mxu0 0
  %2016 = vmatprep.subr.bf16.mxu0 0
  %2017 = vmatpush1.bf16.msra.mxu0 0
  %2018 = vmatprep.subr.bf16.mxu0 0
  %2019 = vmatpush1.bf16.msra.mxu0 0
  %2020 = vmatprep.subr.bf16.mxu0 0
  %2021 = vmatpush1.bf16.msra.mxu0 0
  %2022 = vmatprep.subr.bf16.mxu0 0
  %2023 = vmatpush1.bf16.msra.mxu0 0
  %2024 = vmatprep.subr.bf16.mxu0 0
  %2025 = vmatpush1.bf16.msra.mxu0 0
  %2026 = vmatprep.subr.bf16.mxu0 0
  %2027 = vmatpush1.bf16.msra.mxu0 0
  %2028 = vmatprep.subr.bf16.mxu0 0
  %2029 = vmatpush1.bf16.msra.mxu0 0
  %2030 = vmatprep.subr.bf16.mxu0 0
  %2031 = vmatpush1.bf16.msra.mxu0 0
  %2032 = vmatprep.subr.bf16.mxu0 0
  %2033 = vmatpush1.bf16.msra.mxu0 0
  %2034 = vmatprep.subr.bf16.mxu0 0
  %2035 = vmatpush1.bf16.msra.mxu0 0
  %2036 = vmatprep.subr.bf16.mxu0 0
  %2037 = vmatpush1.bf16.msra.mxu0 0
  %2038 = vmatprep.subr.bf16.mxu0 0
  %2039 = vmatpush1.bf16.msra.mxu0 0
  %2040 = vmatprep.subr.bf16.mxu0 0
  %2041 = vmatpush1.bf16.msra.mxu0 0
  %2042 = vmatprep.subr.bf16.mxu0 0
  %2043 = vmatpush1.bf16.msra.mxu0 0
  %2044 = vmatprep.mubr.bf16.mxu0 0
  %2045 = vmatmul.mubr.bf16.gmra.mrb[0].mxu0 %v1962
  %v2046 = vpop.f32.mrb[0].mxu0
  %v2047 = vadd.f32 %v1457, %v2046
  %v2048 = vpop.f32.mrb[0].mxu0
  %v2049 = vpop.f32.mrb[0].mxu0
  %v2050 = vadd.f32 %v1460, %v2049
  %v2051 = vpop.f32.mrb[0].mxu0
  %2052 = vmatprep.mubr.bf16.mxu0 0
  %2053 = vmatmul.mubr.bf16.gmra.mrb[0].mxu0 %v1965
  %v2054 = vpop.f32.mrb[0].mxu0
  %v2055 = vadd.f32 %v1465, %v2054
  %v2056 = vpop.f32.mrb[0].mxu0
  %v2057 = vpop.f32.mrb[0].mxu0
  %v2058 = vadd.f32 %v1468, %v2057
  %v2059 = vpop.f32.mrb[0].mxu0
  %2060 = vmatprep.mubr.bf16.mxu0 0
  %2061 = vmatmul.mubr.bf16.gmra.mrb[0].mxu0 %v1968
  %v2062 = vpop.f32.mrb[0].mxu0
  %v2063 = vadd.f32 %v1473, %v2062
  %v2064 = vpop.f32.mrb[0].mxu0
  %v2065 = vpop.f32.mrb[0].mxu0
  %v2066 = vadd.f32 %v1476, %v2065
  %v2067 = vpop.f32.mrb[0].mxu0
  %2068 = vmatprep.mubr.bf16.mxu0 0
  %2069 = vmatmul.mubr.bf16.gmra.mrb[0].mxu0 %v1971
  %v2070 = vpop.f32.mrb[0].mxu0
  %v2071 = vadd.f32 %v1481, %v2070
  %v2072 = vpop.f32.mrb[0].mxu0
  %v2073 = vpop.f32.mrb[0].mxu0
  %v2074 = vadd.f32 %v1484, %v2073
  %v2075 = vpop.f32.mrb[0].mxu0
  %2076 = vmatprep.mubr.bf16.mxu0 0
  %2077 = vmatmul.mubr.bf16.gmra.mrb[0].mxu0 %v1974
  %v2078 = vpop.f32.mrb[0].mxu0
  %v2079 = vadd.f32 %v1489, %v2078
  %v2080 = vpop.f32.mrb[0].mxu0
  %v2081 = vpop.f32.mrb[0].mxu0
  %v2082 = vadd.f32 %v1492, %v2081
  %v2083 = vpop.f32.mrb[0].mxu0
  %2084 = vmatprep.mubr.bf16.mxu0 0
  %2085 = vmatmul.mubr.bf16.gmra.mrb[0].mxu0 %v1977
  %v2086 = vpop.f32.mrb[0].mxu0
  %v2087 = vadd.f32 %v1497, %v2086
  %v2088 = vpop.f32.mrb[0].mxu0
  %v2089 = vpop.f32.mrb[0].mxu0
  %v2090 = vadd.f32 %v1500, %v2089
  %v2091 = vpop.f32.mrb[0].mxu0
  %2092 = vmatprep.mubr.bf16.mxu0 0
  %2093 = vmatmul.mubr.bf16.gmra.mrb[0].mxu0 %v1980
  %v2094 = vpop.f32.mrb[0].mxu0
  %v2095 = vadd.f32 %v1505, %v2094
  %v2096 = vpop.f32.mrb[0].mxu0
  %v2097 = vpop.f32.mrb[0].mxu0
  %v2098 = vadd.f32 %v1508, %v2097
  %v2099 = vpop.f32.mrb[0].mxu0
  %2100 = vmatprep.mubr.bf16.mxu0 0
  %2101 = vmatmul.mubr.bf16.gmra.mrb[0].mxu0 %v1983
  %v2102 = vpop.f32.mrb[0].mxu0
  %v2103 = vadd.f32 %v1513, %v2102
  %v2104 = vpop.f32.mrb[0].mxu0
  %v2105 = vpop.f32.mrb[0].mxu0
  %v2106 = vadd.f32 %v1516, %v2105
  %v2107 = vpop.f32.mrb[0].mxu0
  %2108 = vmatprep.mubr.bf16.mxu0 0
  %2109 = vmatmul.mubr.bf16.gmra.mrb[0].mxu0 %v1986
  %v2110 = vpop.f32.mrb[0].mxu0
  %v2111 = vadd.f32 %v1521, %v2110
  %v2112 = vpop.f32.mrb[0].mxu0
  %v2113 = vpop.f32.mrb[0].mxu0
  %v2114 = vadd.f32 %v1524, %v2113
  %v2115 = vpop.f32.mrb[0].mxu0
  %2116 = vmatprep.mubr.bf16.mxu0 0
  %2117 = vmatmul.mubr.bf16.gmra.mrb[0].mxu0 %v1989
  %v2118 = vpop.f32.mrb[0].mxu0
  %v2119 = vadd.f32 %v1529, %v2118
  %v2120 = vpop.f32.mrb[0].mxu0
  %v2121 = vpop.f32.mrb[0].mxu0
  %v2122 = vadd.f32 %v1532, %v2121
  %v2123 = vpop.f32.mrb[0].mxu0
  %2124 = vmatprep.mubr.bf16.mxu0 0
  %2125 = vmatmul.mubr.bf16.gmra.mrb[0].mxu0 %v1992
  %v2126 = vpop.f32.mrb[0].mxu0
  %v2127 = vadd.f32 %v1537, %v2126
  %v2128 = vpop.f32.mrb[0].mxu0
  %v2129 = vpop.f32.mrb[0].mxu0
  %v2130 = vadd.f32 %v1540, %v2129
  %v2131 = vpop.f32.mrb[0].mxu0
  %2132 = vmatprep.mubr.bf16.mxu0 0
  %2133 = vmatmul.mubr.bf16.gmra.mrb[0].mxu0 %v1995
  %v2134 = vpop.f32.mrb[0].mxu0
  %v2135 = vadd.f32 %v1545, %v2134
  %v2136 = vpop.f32.mrb[0].mxu0
  %v2137 = vpop.f32.mrb[0].mxu0
  %v2138 = vadd.f32 %v1548, %v2137
  %v2139 = vpop.f32.mrb[0].mxu0
  %2140 = vmatprep.mubr.bf16.mxu0 0
  %2141 = vmatmul.mubr.bf16.gmra.mrb[0].mxu0 %v1998
  %v2142 = vpop.f32.mrb[0].mxu0
  %v2143 = vadd.f32 %v1553, %v2142
  %v2144 = vpop.f32.mrb[0].mxu0
  %v2145 = vpop.f32.mrb[0].mxu0
  %v2146 = vadd.f32 %v1556, %v2145
  %v2147 = vpop.f32.mrb[0].mxu0
  %2148 = vmatprep.mubr.bf16.mxu0 0
  %2149 = vmatmul.mubr.bf16.gmra.mrb[0].mxu0 %v2001
  %v2150 = vpop.f32.mrb[0].mxu0
  %v2151 = vadd.f32 %v1561, %v2150
  %v2152 = vpop.f32.mrb[0].mxu0
  %v2153 = vpop.f32.mrb[0].mxu0
  %v2154 = vadd.f32 %v1564, %v2153
  %v2155 = vpop.f32.mrb[0].mxu0
  %2156 = vmatprep.mubr.bf16.mxu0 0
  %2157 = vmatmul.mubr.bf16.gmra.mrb[0].mxu0 %v2004
  %v2158 = vpop.f32.mrb[0].mxu0
  %v2159 = vadd.f32 %v1569, %v2158
  %v2160 = vpop.f32.mrb[0].mxu0
  %v2161 = vpop.f32.mrb[0].mxu0
  %v2162 = vadd.f32 %v1572, %v2161
  %v2163 = vpop.f32.mrb[0].mxu0
  %2164 = vmatprep.mubr.bf16.mxu0 0
  %2165 = vmatmul.mubr.bf16.gmra.mrb[0].mxu0 %v2007
  %v2166 = vpop.f32.mrb[0].mxu0
  %v2167 = vadd.f32 %v1577, %v2166
  %v2168 = vpop.f32.mrb[0].mxu0
  %v2169 = vpop.f32.mrb[0].mxu0
  %v2170 = vadd.f32 %v1580, %v2169
  %v2171 = vpop.f32.mrb[0].mxu0
  %2172 = vdwg.mxu0
  %v2173 = vadd.f32 %v1752, %v2047
  %v2174 = vadd.f32 %v1755, %v2050
  %v2175 = vadd.f32 %v1760, %v2055
  %v2176 = vadd.f32 %v1763, %v2058
  %v2177 = vadd.f32 %v1768, %v2063
  %v2178 = vadd.f32 %v1771, %v2066
  %v2179 = vadd.f32 %v1776, %v2071
  %v2180 = vadd.f32 %v1779, %v2074
  %v2181 = vadd.f32 %v1784, %v2079
  %v2182 = vadd.f32 %v1787, %v2082
  %v2183 = vadd.f32 %v1792, %v2087
  %v2184 = vadd.f32 %v1795, %v2090
  %v2185 = vadd.f32 %v1800, %v2095
  %v2186 = vadd.f32 %v1803, %v2098
  %v2187 = vadd.f32 %v1808, %v2103
  %v2188 = vadd.f32 %v1811, %v2106
  %v2189 = vadd.f32 %v1816, %v2111
  %v2190 = vadd.f32 %v1819, %v2114
  %v2191 = vadd.f32 %v1824, %v2119
  %v2192 = vadd.f32 %v1827, %v2122
  %v2193 = vadd.f32 %v1832, %v2127
  %v2194 = vadd.f32 %v1835, %v2130
  %v2195 = vadd.f32 %v1840, %v2135
  %v2196 = vadd.f32 %v1843, %v2138
  %v2197 = vadd.f32 %v1848, %v2143
  %v2198 = vadd.f32 %v1851, %v2146
  %v2199 = vadd.f32 %v1856, %v2151
  %v2200 = vadd.f32 %v1859, %v2154
  %v2201 = vadd.f32 %v1864, %v2159
  %v2202 = vadd.f32 %v1867, %v2162
  %v2203 = vadd.f32 %v1872, %v2167
  %v2204 = vadd.f32 %v1875, %v2170
  %v2205 = vld [vmem:[%s2] sm:$0x1]
  %v2207 = vlaneseq
  %v2208 = vshrl.u32 %v2207, 7
  %v2209 = vsub.s32 0, %v2208
  %v2210 = vrot.slane %v2205, %v2209
  %v2212 = vadd.f32 %v2173, %v2210
  %v2213 = vadd.f32 %v2174, %v2210
  %v2214 = vadd.f32 %v2175, %v2210
  %v2215 = vadd.f32 %v2176, %v2210
  %v2216 = vadd.f32 %v2177, %v2210
  %v2217 = vadd.f32 %v2178, %v2210
  %v2218 = vadd.f32 %v2179, %v2210
  %v2219 = vadd.f32 %v2180, %v2210
  %v2220 = vadd.f32 %v2181, %v2210
  %v2221 = vadd.f32 %v2182, %v2210
  %v2222 = vadd.f32 %v2183, %v2210
  %v2223 = vadd.f32 %v2184, %v2210
  %v2224 = vadd.f32 %v2185, %v2210
  %v2225 = vadd.f32 %v2186, %v2210
  %v2226 = vadd.f32 %v2187, %v2210
  %v2227 = vadd.f32 %v2188, %v2210
  %v2228 = vadd.f32 %v2189, %v2210
  %v2229 = vadd.f32 %v2190, %v2210
  %v2230 = vadd.f32 %v2191, %v2210
  %v2231 = vadd.f32 %v2192, %v2210
  %v2232 = vadd.f32 %v2193, %v2210
  %v2233 = vadd.f32 %v2194, %v2210
  %v2234 = vadd.f32 %v2195, %v2210
  %v2235 = vadd.f32 %v2196, %v2210
  %v2236 = vadd.f32 %v2197, %v2210
  %v2237 = vadd.f32 %v2198, %v2210
  %v2238 = vadd.f32 %v2199, %v2210
  %v2239 = vadd.f32 %v2200, %v2210
  %v2240 = vadd.f32 %v2201, %v2210
  %v2241 = vadd.f32 %v2202, %v2210
  %v2242 = vadd.f32 %v2203, %v2210
  %v2243 = vadd.f32 %v2204, %v2210
  %v2244 = vmax.f32 %v2212, 0.0
  %v2245 = vmax.f32 %v2213, 0.0
  %v2246 = vmax.f32 %v2214, 0.0
  %v2247 = vmax.f32 %v2215, 0.0
  %v2248 = vmax.f32 %v2216, 0.0
  %v2249 = vmax.f32 %v2217, 0.0
  %v2250 = vmax.f32 %v2218, 0.0
  %v2251 = vmax.f32 %v2219, 0.0
  %v2252 = vmax.f32 %v2220, 0.0
  %v2253 = vmax.f32 %v2221, 0.0
  %v2254 = vmax.f32 %v2222, 0.0
  %v2255 = vmax.f32 %v2223, 0.0
  %v2256 = vmax.f32 %v2224, 0.0
  %v2257 = vmax.f32 %v2225, 0.0
  %v2258 = vmax.f32 %v2226, 0.0
  %v2259 = vmax.f32 %v2227, 0.0
  %v2260 = vmax.f32 %v2228, 0.0
  %v2261 = vmax.f32 %v2229, 0.0
  %v2262 = vmax.f32 %v2230, 0.0
  %v2263 = vmax.f32 %v2231, 0.0
  %v2264 = vmax.f32 %v2232, 0.0
  %v2265 = vmax.f32 %v2233, 0.0
  %v2266 = vmax.f32 %v2234, 0.0
  %v2267 = vmax.f32 %v2235, 0.0
  %v2268 = vmax.f32 %v2236, 0.0
  %v2269 = vmax.f32 %v2237, 0.0
  %v2270 = vmax.f32 %v2238, 0.0
  %v2271 = vmax.f32 %v2239, 0.0
  %v2272 = vmax.f32 %v2240, 0.0
  %v2273 = vmax.f32 %v2241, 0.0
  %v2274 = vmax.f32 %v2242, 0.0
  %v2275 = vmax.f32 %v2243, 0.0
  %v2276 = vpack.c.bf16 %v2245, %v2244
  %v2277 = vpack.c.bf16 %v2247, %v2246
  %v2278 = vpack.c.bf16 %v2249, %v2248
  %v2279 = vpack.c.bf16 %v2251, %v2250
  %v2280 = vpack.c.bf16 %v2253, %v2252
  %v2281 = vpack.c.bf16 %v2255, %v2254
  %v2282 = vpack.c.bf16 %v2257, %v2256
  %v2283 = vpack.c.bf16 %v2259, %v2258
  %v2284 = vpack.c.bf16 %v2261, %v2260
  %v2285 = vpack.c.bf16 %v2263, %v2262
  %v2286 = vpack.c.bf16 %v2265, %v2264
  %v2287 = vpack.c.bf16 %v2267, %v2266
  %v2288 = vpack.c.bf16 %v2269, %v2268
  %v2289 = vpack.c.bf16 %v2271, %v2270
  %v2290 = vpack.c.bf16 %v2273, %v2272
  %v2291 = vpack.c.bf16 %v2275, %v2274
  %v2308 = vunpack.c.l.b16 %v2276
  %v2309 = vunpack.c.h.b16 %v2276
  %v2310 = vunpack.c.l.b16 %v2277
  %v2311 = vunpack.c.h.b16 %v2277
  %v2312 = vunpack.c.l.b16 %v2278
  %v2313 = vunpack.c.h.b16 %v2278
  %v2314 = vunpack.c.l.b16 %v2279
  %v2315 = vunpack.c.h.b16 %v2279
  %v2316 = vunpack.c.l.b16 %v2280
  %v2317 = vunpack.c.h.b16 %v2280
  %v2318 = vunpack.c.l.b16 %v2281
  %v2319 = vunpack.c.h.b16 %v2281
  %v2320 = vunpack.c.l.b16 %v2282
  %v2321 = vunpack.c.h.b16 %v2282
  %v2322 = vunpack.c.l.b16 %v2283
  %v2323 = vunpack.c.h.b16 %v2283
  %v2324 = vunpack.c.l.b16 %v2284
  %v2325 = vunpack.c.h.b16 %v2284
  %v2326 = vunpack.c.l.b16 %v2285
  %v2327 = vunpack.c.h.b16 %v2285
  %v2328 = vunpack.c.l.b16 %v2286
  %v2329 = vunpack.c.h.b16 %v2286
  %v2330 = vunpack.c.l.b16 %v2287
  %v2331 = vunpack.c.h.b16 %v2287
  %v2332 = vunpack.c.l.b16 %v2288
  %v2333 = vunpack.c.h.b16 %v2288
  %v2334 = vunpack.c.l.b16 %v2289
  %v2335 = vunpack.c.h.b16 %v2289
  %v2336 = vunpack.c.l.b16 %v2290
  %v2337 = vunpack.c.h.b16 %v2290
  %v2338 = vunpack.c.l.b16 %v2291
  %v2339 = vunpack.c.h.b16 %v2291
  %v2340 = vpack.c.b16 %v2308, %v2308
  %v2341 = vpack.c.b16 %v2309, %v2309
  %v2342 = vpack.c.b16 %v2310, %v2310
  %v2343 = vpack.c.b16 %v2311, %v2311
  %v2344 = vpack.c.b16 %v2312, %v2312
  %v2345 = vpack.c.b16 %v2313, %v2313
  %v2346 = vpack.c.b16 %v2314, %v2314
  %v2347 = vpack.c.b16 %v2315, %v2315
  %v2348 = vpack.c.b16 %v2316, %v2316
  %v2349 = vpack.c.b16 %v2317, %v2317
  %v2350 = vpack.c.b16 %v2318, %v2318
  %v2351 = vpack.c.b16 %v2319, %v2319
  %v2352 = vpack.c.b16 %v2320, %v2320
  %v2353 = vpack.c.b16 %v2321, %v2321
  %v2354 = vpack.c.b16 %v2322, %v2322
  %v2355 = vpack.c.b16 %v2323, %v2323
  %v2356 = vpack.c.b16 %v2324, %v2324
  %v2357 = vpack.c.b16 %v2325, %v2325
  %v2358 = vpack.c.b16 %v2326, %v2326
  %v2359 = vpack.c.b16 %v2327, %v2327
  %v2360 = vpack.c.b16 %v2328, %v2328
  %v2361 = vpack.c.b16 %v2329, %v2329
  %v2362 = vpack.c.b16 %v2330, %v2330
  %v2363 = vpack.c.b16 %v2331, %v2331
  %v2364 = vpack.c.b16 %v2332, %v2332
  %v2365 = vpack.c.b16 %v2333, %v2333
  %v2366 = vpack.c.b16 %v2334, %v2334
  %v2367 = vpack.c.b16 %v2335, %v2335
  %v2368 = vpack.c.b16 %v2336, %v2336
  %v2369 = vpack.c.b16 %v2337, %v2337
  %v2370 = vpack.c.b16 %v2338, %v2338
  %v2371 = vpack.c.b16 %v2339, %v2339
  %2404 = vst [vmem:[%s3] sm:$0xf] %v2340
  %2405 = vst [vmem:[%s3 + $0x4] sm:$0xf] %v2341
  %2406 = vst [vmem:[%s3 + $0x8] sm:$0xf] %v2342
  %2407 = vst [vmem:[%s3 + $0xc] sm:$0xf] %v2343
  %2408 = vst [vmem:[%s3 + $0x10] sm:$0xf] %v2344
  %2409 = vst [vmem:[%s3 + $0x14] sm:$0xf] %v2345
  %2410 = vst [vmem:[%s3 + $0x18] sm:$0xf] %v2346
  %2411 = vst [vmem:[%s3 + $0x1c] sm:$0xf] %v2347
  %2412 = vst [vmem:[%s3 + $0x20] sm:$0xf] %v2348
  %2413 = vst [vmem:[%s3 + $0x24] sm:$0xf] %v2349
  %2414 = vst [vmem:[%s3 + $0x28] sm:$0xf] %v2350
  %2415 = vst [vmem:[%s3 + $0x2c] sm:$0xf] %v2351
  %2416 = vst [vmem:[%s3 + $0x30] sm:$0xf] %v2352
  %2417 = vst [vmem:[%s3 + $0x34] sm:$0xf] %v2353
  %2418 = vst [vmem:[%s3 + $0x38] sm:$0xf] %v2354
  %2419 = vst [vmem:[%s3 + $0x3c] sm:$0xf] %v2355
  %2420 = vst [vmem:[%s3 + $0x40] sm:$0xf] %v2356
  %2421 = vst [vmem:[%s3 + $0x44] sm:$0xf] %v2357
  %2422 = vst [vmem:[%s3 + $0x48] sm:$0xf] %v2358
  %2423 = vst [vmem:[%s3 + $0x4c] sm:$0xf] %v2359
  %2424 = vst [vmem:[%s3 + $0x50] sm:$0xf] %v2360
  %2425 = vst [vmem:[%s3 + $0x54] sm:$0xf] %v2361
  %2426 = vst [vmem:[%s3 + $0x58] sm:$0xf] %v2362
  %2427 = vst [vmem:[%s3 + $0x5c] sm:$0xf] %v2363
  %2428 = vst [vmem:[%s3 + $0x60] sm:$0xf] %v2364
  %2429 = vst [vmem:[%s3 + $0x64] sm:$0xf] %v2365
  %2430 = vst [vmem:[%s3 + $0x68] sm:$0xf] %v2366
  %2431 = vst [vmem:[%s3 + $0x6c] sm:$0xf] %v2367
  %2432 = vst [vmem:[%s3 + $0x70] sm:$0xf] %v2368
  %2433 = vst [vmem:[%s3 + $0x74] sm:$0xf] %v2369
  %2434 = vst [vmem:[%s3 + $0x78] sm:$0xf] %v2370
  %2435 = vst [vmem:[%s3 + $0x7c] sm:$0xf] %v2371
  // Predicated region
  $region14: #{_lambda_.2} parent=0 // pred_check
    _
  $region15: #{_lambda_.2} parent=0 // pred_check_branch
    %2437 = sbr.rel (0) target = $region17
  $region16: #{_lambda_.2} parent=0 // pred_region
    _
  $region17: #{_lambda_.2} parent=0 // pred_fallthru
    _
  // Predicated region
  $region18: #{_lambda_.2} parent=0 // pred_check
    _
  $region19: #{_lambda_.2} parent=0 // pred_check_branch
    %2439 = sbr.rel (0) target = $region21
  $region20: #{_lambda_.2} parent=0 // pred_region
    _
  $region21: #{_lambda_.2} parent=0 // pred_fallthru
    _

// kernel: _lambda_.3
$region0: #{_lambda_.3}
  #allocation0 [shape = 'u32[]', space=smem, size = 0x4, offset = 0x4, fixed_abs, tag = 'smem constant byte address 0x4 - core index']
  #allocation1 [shape = 'u32[144,128]{1,0:T(1,128)}', space=vmem, size = 0x12000, scoped, tag = 'internal scratch']
  %s0 = inlined_call_operand.vmem [shape: bf16[4,5,5,512], index: 0, kind: input, shape index: {}]
  %s1 = inlined_call_operand.vmem [shape: bf16[2048,128], index: 1, kind: input, shape index: {}]
  %s2 = inlined_call_operand.vmem [shape: f32[1,128], index: 2, kind: input, shape index: {}]
  %s3 = inlined_call_operand.vmem [shape: bf16[64,128], index: 3, kind: output, shape index: {}]
  %s4 = sld [smem:[#allocation0]]
  $region22: #{_lambda_.3} parent=0
    _
  %s6 = ssub.s32 1, %s4
  %s7 = scalar_select 0, %s6, %s4
  // Predicated region
  $region2: #{_lambda_.3} parent=0 // pred_check
    _
  $region3: #{_lambda_.3} parent=0 // pred_check_branch
    %9 = sbr.rel (0) target = $region5
  $region4: #{_lambda_.3} parent=0 // pred_region
    _
  $region5: #{_lambda_.3} parent=0 // pred_fallthru
    _
  // Predicated region
  $region6: #{_lambda_.3} parent=0 // pred_check
    _
  $region7: #{_lambda_.3} parent=0 // pred_check_branch
    %11 = sbr.rel (0) target = $region9
  $region8: #{_lambda_.3} parent=0 // pred_region
    _
  $region9: #{_lambda_.3} parent=0 // pred_fallthru
    _
  // Predicated region
  $region10: #{_lambda_.3} parent=0 // pred_check
    _
  $region11: #{_lambda_.3} parent=0 // pred_check_branch
    %13 = sbr.rel (0) target = $region13
  $region12: #{_lambda_.3} parent=0 // pred_region
    _
  $region13: #{_lambda_.3} parent=0 // pred_fallthru
    _
  %v15 = vld [vmem:[%s0] sm:$0x33]
  %v16 = vld [vmem:[%s0 + $0x8] sm:$0x33]
  %v17 = vld [vmem:[%s0 + $0x10] sm:$0x33]
  %v18 = vld [vmem:[%s0 + $0x18] sm:$0x33]
  %v19 = vld [vmem:[%s0 + $0x20] sm:$0x33]
  %v20 = vld [vmem:[%s0 + $0x28] sm:$0x33]
  %v21 = vld [vmem:[%s0 + $0x30] sm:$0x33]
  %v22 = vld [vmem:[%s0 + $0x38] sm:$0x33]
  %v23 = vld [vmem:[%s0 + $0x50] sm:$0x33]
  %v24 = vld [vmem:[%s0 + $0x58] sm:$0x33]
  %v25 = vld [vmem:[%s0 + $0x60] sm:$0x33]
  %v26 = vld [vmem:[%s0 + $0x68] sm:$0x33]
  %v27 = vld [vmem:[%s0 + $0x70] sm:$0x33]
  %v28 = vld [vmem:[%s0 + $0x78] sm:$0x33]
  %v29 = vld [vmem:[%s0 + $0x80] sm:$0x33]
  %v30 = vld [vmem:[%s0 + $0x88] sm:$0x33]
  %v31 = vld [vmem:[%s0 + $0xa0] sm:$0x33]
  %v32 = vld [vmem:[%s0 + $0xa8] sm:$0x33]
  %v33 = vld [vmem:[%s0 + $0xb0] sm:$0x33]
  %v34 = vld [vmem:[%s0 + $0xb8] sm:$0x33]
  %v35 = vld [vmem:[%s0 + $0xc0] sm:$0x33]
  %v36 = vld [vmem:[%s0 + $0xc8] sm:$0x33]
  %v37 = vld [vmem:[%s0 + $0xd0] sm:$0x33]
  %v38 = vld [vmem:[%s0 + $0xd8] sm:$0x33]
  %v39 = vld [vmem:[%s0 + $0xf0] sm:$0x33]
  %v40 = vld [vmem:[%s0 + $0xf8] sm:$0x33]
  %v41 = vld [vmem:[%s0 + $0x100] sm:$0x33]
  %v42 = vld [vmem:[%s0 + $0x108] sm:$0x33]
  %v43 = vld [vmem:[%s0 + $0x110] sm:$0x33]
  %v44 = vld [vmem:[%s0 + $0x118] sm:$0x33]
  %v45 = vld [vmem:[%s0 + $0x120] sm:$0x33]
  %v46 = vld [vmem:[%s0 + $0x128] sm:$0x33]
  %v80 = vunpack.c.l.s4 1983009808
  %v81 = vunpack.c.0.s8 %v80
  %v82 = vlaneseq
  %v83 = vshrl.u32 %v82, 7
  %v84 = vsub.s32 %v81, %v83
  %v85 = vrot.slane %v15, %v84
  %v87 = vunpack.c.l.s4 1983009808
  %v88 = vunpack.c.0.s8 %v87
  %v89 = vlaneseq
  %v90 = vshrl.u32 %v89, 7
  %v91 = vsub.s32 %v88, %v90
  %v92 = vrot.slane %v16, %v91
  %v93 = vcombine.low %v85, %v92
  %v95 = vunpack.c.l.s4 1983009808
  %v96 = vunpack.c.0.s8 %v95
  %v97 = vlaneseq
  %v98 = vshrl.u32 %v97, 7
  %v99 = vsub.s32 %v96, %v98
  %v100 = vrot.slane %v17, %v99
  %v102 = vunpack.c.l.s4 1983009808
  %v103 = vunpack.c.0.s8 %v102
  %v104 = vlaneseq
  %v105 = vshrl.u32 %v104, 7
  %v106 = vsub.s32 %v103, %v105
  %v107 = vrot.slane %v18, %v106
  %v108 = vcombine.low %v100, %v107
  %v110 = vunpack.c.l.s4 1983009808
  %v111 = vunpack.c.0.s8 %v110
  %v112 = vlaneseq
  %v113 = vshrl.u32 %v112, 7
  %v114 = vsub.s32 %v111, %v113
  %v115 = vrot.slane %v19, %v114
  %v117 = vunpack.c.l.s4 1983009808
  %v118 = vunpack.c.0.s8 %v117
  %v119 = vlaneseq
  %v120 = vshrl.u32 %v119, 7
  %v121 = vsub.s32 %v118, %v120
  %v122 = vrot.slane %v20, %v121
  %v123 = vcombine.low %v115, %v122
  %v125 = vunpack.c.l.s4 1983009808
  %v126 = vunpack.c.0.s8 %v125
  %v127 = vlaneseq
  %v128 = vshrl.u32 %v127, 7
  %v129 = vsub.s32 %v126, %v128
  %v130 = vrot.slane %v21, %v129
  %v132 = vunpack.c.l.s4 1983009808
  %v133 = vunpack.c.0.s8 %v132
  %v134 = vlaneseq
  %v135 = vshrl.u32 %v134, 7
  %v136 = vsub.s32 %v133, %v135
  %v137 = vrot.slane %v22, %v136
  %v138 = vcombine.low %v130, %v137
  %v140 = vunpack.c.l.s4 1983009808
  %v141 = vunpack.c.0.s8 %v140
  %v142 = vlaneseq
  %v143 = vshrl.u32 %v142, 7
  %v144 = vsub.s32 %v141, %v143
  %v145 = vrot.slane %v23, %v144
  %v147 = vunpack.c.l.s4 1983009808
  %v148 = vunpack.c.0.s8 %v147
  %v149 = vlaneseq
  %v150 = vshrl.u32 %v149, 7
  %v151 = vsub.s32 %v148, %v150
  %v152 = vrot.slane %v24, %v151
  %v153 = vcombine.low %v145, %v152
  %v155 = vunpack.c.l.s4 1983009808
  %v156 = vunpack.c.0.s8 %v155
  %v157 = vlaneseq
  %v158 = vshrl.u32 %v157, 7
  %v159 = vsub.s32 %v156, %v158
  %v160 = vrot.slane %v25, %v159
  %v162 = vunpack.c.l.s4 1983009808
  %v163 = vunpack.c.0.s8 %v162
  %v164 = vlaneseq
  %v165 = vshrl.u32 %v164, 7
  %v166 = vsub.s32 %v163, %v165
  %v167 = vrot.slane %v26, %v166
  %v168 = vcombine.low %v160, %v167
  %v170 = vunpack.c.l.s4 1983009808
  %v171 = vunpack.c.0.s8 %v170
  %v172 = vlaneseq
  %v173 = vshrl.u32 %v172, 7
  %v174 = vsub.s32 %v171, %v173
  %v175 = vrot.slane %v27, %v174
  %v177 = vunpack.c.l.s4 1983009808
  %v178 = vunpack.c.0.s8 %v177
  %v179 = vlaneseq
  %v180 = vshrl.u32 %v179, 7
  %v181 = vsub.s32 %v178, %v180
  %v182 = vrot.slane %v28, %v181
  %v183 = vcombine.low %v175, %v182
  %v185 = vunpack.c.l.s4 1983009808
  %v186 = vunpack.c.0.s8 %v185
  %v187 = vlaneseq
  %v188 = vshrl.u32 %v187, 7
  %v189 = vsub.s32 %v186, %v188
  %v190 = vrot.slane %v29, %v189
  %v192 = vunpack.c.l.s4 1983009808
  %v193 = vunpack.c.0.s8 %v192
  %v194 = vlaneseq
  %v195 = vshrl.u32 %v194, 7
  %v196 = vsub.s32 %v193, %v195
  %v197 = vrot.slane %v30, %v196
  %v198 = vcombine.low %v190, %v197
  %v200 = vunpack.c.l.s4 1983009808
  %v201 = vunpack.c.0.s8 %v200
  %v202 = vlaneseq
  %v203 = vshrl.u32 %v202, 7
  %v204 = vsub.s32 %v201, %v203
  %v205 = vrot.slane %v31, %v204
  %v207 = vunpack.c.l.s4 1983009808
  %v208 = vunpack.c.0.s8 %v207
  %v209 = vlaneseq
  %v210 = vshrl.u32 %v209, 7
  %v211 = vsub.s32 %v208, %v210
  %v212 = vrot.slane %v32, %v211
  %v213 = vcombine.low %v205, %v212
  %v215 = vunpack.c.l.s4 1983009808
  %v216 = vunpack.c.0.s8 %v215
  %v217 = vlaneseq
  %v218 = vshrl.u32 %v217, 7
  %v219 = vsub.s32 %v216, %v218
  %v220 = vrot.slane %v33, %v219
  %v222 = vunpack.c.l.s4 1983009808
  %v223 = vunpack.c.0.s8 %v222
  %v224 = vlaneseq
  %v225 = vshrl.u32 %v224, 7
  %v226 = vsub.s32 %v223, %v225
  %v227 = vrot.slane %v34, %v226
  %v228 = vcombine.low %v220, %v227
  %v230 = vunpack.c.l.s4 1983009808
  %v231 = vunpack.c.0.s8 %v230
  %v232 = vlaneseq
  %v233 = vshrl.u32 %v232, 7
  %v234 = vsub.s32 %v231, %v233
  %v235 = vrot.slane %v35, %v234
  %v237 = vunpack.c.l.s4 1983009808
  %v238 = vunpack.c.0.s8 %v237
  %v239 = vlaneseq
  %v240 = vshrl.u32 %v239, 7
  %v241 = vsub.s32 %v238, %v240
  %v242 = vrot.slane %v36, %v241
  %v243 = vcombine.low %v235, %v242
  %v245 = vunpack.c.l.s4 1983009808
  %v246 = vunpack.c.0.s8 %v245
  %v247 = vlaneseq
  %v248 = vshrl.u32 %v247, 7
  %v249 = vsub.s32 %v246, %v248
  %v250 = vrot.slane %v37, %v249
  %v252 = vunpack.c.l.s4 1983009808
  %v253 = vunpack.c.0.s8 %v252
  %v254 = vlaneseq
  %v255 = vshrl.u32 %v254, 7
  %v256 = vsub.s32 %v253, %v255
  %v257 = vrot.slane %v38, %v256
  %v258 = vcombine.low %v250, %v257
  %v260 = vunpack.c.l.s4 1983009808
  %v261 = vunpack.c.0.s8 %v260
  %v262 = vlaneseq
  %v263 = vshrl.u32 %v262, 7
  %v264 = vsub.s32 %v261, %v263
  %v265 = vrot.slane %v39, %v264
  %v267 = vunpack.c.l.s4 1983009808
  %v268 = vunpack.c.0.s8 %v267
  %v269 = vlaneseq
  %v270 = vshrl.u32 %v269, 7
  %v271 = vsub.s32 %v268, %v270
  %v272 = vrot.slane %v40, %v271
  %v273 = vcombine.low %v265, %v272
  %v275 = vunpack.c.l.s4 1983009808
  %v276 = vunpack.c.0.s8 %v275
  %v277 = vlaneseq
  %v278 = vshrl.u32 %v277, 7
  %v279 = vsub.s32 %v276, %v278
  %v280 = vrot.slane %v41, %v279
  %v282 = vunpack.c.l.s4 1983009808
  %v283 = vunpack.c.0.s8 %v282
  %v284 = vlaneseq
  %v285 = vshrl.u32 %v284, 7
  %v286 = vsub.s32 %v283, %v285
  %v287 = vrot.slane %v42, %v286
  %v288 = vcombine.low %v280, %v287
  %v290 = vunpack.c.l.s4 1983009808
  %v291 = vunpack.c.0.s8 %v290
  %v292 = vlaneseq
  %v293 = vshrl.u32 %v292, 7
  %v294 = vsub.s32 %v291, %v293
  %v295 = vrot.slane %v43, %v294
  %v297 = vunpack.c.l.s4 1983009808
  %v298 = vunpack.c.0.s8 %v297
  %v299 = vlaneseq
  %v300 = vshrl.u32 %v299, 7
  %v301 = vsub.s32 %v298, %v300
  %v302 = vrot.slane %v44, %v301
  %v303 = vcombine.low %v295, %v302
  %v305 = vunpack.c.l.s4 1983009808
  %v306 = vunpack.c.0.s8 %v305
  %v307 = vlaneseq
  %v308 = vshrl.u32 %v307, 7
  %v309 = vsub.s32 %v306, %v308
  %v310 = vrot.slane %v45, %v309
  %v312 = vunpack.c.l.s4 1983009808
  %v313 = vunpack.c.0.s8 %v312
  %v314 = vlaneseq
  %v315 = vshrl.u32 %v314, 7
  %v316 = vsub.s32 %v313, %v315
  %v317 = vrot.slane %v46, %v316
  %v318 = vcombine.low %v310, %v317
  %v319 = vld [vmem:[%s0] sm:$0x77]
  %v320 = vld [vmem:[%s0 + $0x8] sm:$0x77]
  %v321 = vld [vmem:[%s0 + $0x10] sm:$0x77]
  %v322 = vld [vmem:[%s0 + $0x18] sm:$0x77]
  %v323 = vld [vmem:[%s0 + $0x20] sm:$0x77]
  %v324 = vld [vmem:[%s0 + $0x28] sm:$0x77]
  %v325 = vld [vmem:[%s0 + $0x30] sm:$0x77]
  %v326 = vld [vmem:[%s0 + $0x38] sm:$0x77]
  %v327 = vld [vmem:[%s0 + $0x50] sm:$0x77]
  %v328 = vld [vmem:[%s0 + $0x58] sm:$0x77]
  %v329 = vld [vmem:[%s0 + $0x60] sm:$0x77]
  %v330 = vld [vmem:[%s0 + $0x68] sm:$0x77]
  %v331 = vld [vmem:[%s0 + $0x70] sm:$0x77]
  %v332 = vld [vmem:[%s0 + $0x78] sm:$0x77]
  %v333 = vld [vmem:[%s0 + $0x80] sm:$0x77]
  %v334 = vld [vmem:[%s0 + $0x88] sm:$0x77]
  %v335 = vld [vmem:[%s0 + $0xa0] sm:$0x77]
  %v336 = vld [vmem:[%s0 + $0xa8] sm:$0x77]
  %v337 = vld [vmem:[%s0 + $0xb0] sm:$0x77]
  %v338 = vld [vmem:[%s0 + $0xb8] sm:$0x77]
  %v339 = vld [vmem:[%s0 + $0xc0] sm:$0x77]
  %v340 = vld [vmem:[%s0 + $0xc8] sm:$0x77]
  %v341 = vld [vmem:[%s0 + $0xd0] sm:$0x77]
  %v342 = vld [vmem:[%s0 + $0xd8] sm:$0x77]
  %v343 = vld [vmem:[%s0 + $0xf0] sm:$0x77]
  %v344 = vld [vmem:[%s0 + $0xf8] sm:$0x77]
  %v345 = vld [vmem:[%s0 + $0x100] sm:$0x77]
  %v346 = vld [vmem:[%s0 + $0x108] sm:$0x77]
  %v347 = vld [vmem:[%s0 + $0x110] sm:$0x77]
  %v348 = vld [vmem:[%s0 + $0x118] sm:$0x77]
  %v349 = vld [vmem:[%s0 + $0x120] sm:$0x77]
  %v350 = vld [vmem:[%s0 + $0x128] sm:$0x77]
  %v384 = vunpack.c.l.s4 1983009808
  %v385 = vunpack.c.0.s8 %v384
  %v386 = vlaneseq
  %v387 = vshrl.u32 %v386, 7
  %v388 = vsub.s32 %v385, %v387
  %v389 = vrot.slane %v319, %v388
  %v391 = vunpack.c.l.s4 1983009808
  %v392 = vunpack.c.0.s8 %v391
  %v393 = vlaneseq
  %v394 = vshrl.u32 %v393, 7
  %v395 = vsub.s32 %v392, %v394
  %v396 = vrot.slane %v320, %v395
  %v397 = vcombine.low %v389, %v396
  %v398 = vcombine.high %v389, %v396
  %v400 = vunpack.c.l.s4 1983009808
  %v401 = vunpack.c.0.s8 %v400
  %v402 = vlaneseq
  %v403 = vshrl.u32 %v402, 7
  %v404 = vsub.s32 %v401, %v403
  %v405 = vrot.slane %v321, %v404
  %v407 = vunpack.c.l.s4 1983009808
  %v408 = vunpack.c.0.s8 %v407
  %v409 = vlaneseq
  %v410 = vshrl.u32 %v409, 7
  %v411 = vsub.s32 %v408, %v410
  %v412 = vrot.slane %v322, %v411
  %v413 = vcombine.low %v405, %v412
  %v414 = vcombine.high %v405, %v412
  %v416 = vunpack.c.l.s4 1983009808
  %v417 = vunpack.c.0.s8 %v416
  %v418 = vlaneseq
  %v419 = vshrl.u32 %v418, 7
  %v420 = vsub.s32 %v417, %v419
  %v421 = vrot.slane %v323, %v420
  %v423 = vunpack.c.l.s4 1983009808
  %v424 = vunpack.c.0.s8 %v423
  %v425 = vlaneseq
  %v426 = vshrl.u32 %v425, 7
  %v427 = vsub.s32 %v424, %v426
  %v428 = vrot.slane %v324, %v427
  %v429 = vcombine.low %v421, %v428
  %v430 = vcombine.high %v421, %v428
  %v432 = vunpack.c.l.s4 1983009808
  %v433 = vunpack.c.0.s8 %v432
  %v434 = vlaneseq
  %v435 = vshrl.u32 %v434, 7
  %v436 = vsub.s32 %v433, %v435
  %v437 = vrot.slane %v325, %v436
  %v439 = vunpack.c.l.s4 1983009808
  %v440 = vunpack.c.0.s8 %v439
  %v441 = vlaneseq
  %v442 = vshrl.u32 %v441, 7
  %v443 = vsub.s32 %v440, %v442
  %v444 = vrot.slane %v326, %v443
  %v445 = vcombine.low %v437, %v444
  %v446 = vcombine.high %v437, %v444
  %v448 = vunpack.c.l.s4 1983009808
  %v449 = vunpack.c.0.s8 %v448
  %v450 = vlaneseq
  %v451 = vshrl.u32 %v450, 7
  %v452 = vsub.s32 %v449, %v451
  %v453 = vrot.slane %v327, %v452
  %v455 = vunpack.c.l.s4 1983009808
  %v456 = vunpack.c.0.s8 %v455
  %v457 = vlaneseq
  %v458 = vshrl.u32 %v457, 7
  %v459 = vsub.s32 %v456, %v458
  %v460 = vrot.slane %v328, %v459
  %v461 = vcombine.low %v453, %v460
  %v462 = vcombine.high %v453, %v460
  %v464 = vunpack.c.l.s4 1983009808
  %v465 = vunpack.c.0.s8 %v464
  %v466 = vlaneseq
  %v467 = vshrl.u32 %v466, 7
  %v468 = vsub.s32 %v465, %v467
  %v469 = vrot.slane %v329, %v468
  %v471 = vunpack.c.l.s4 1983009808
  %v472 = vunpack.c.0.s8 %v471
  %v473 = vlaneseq
  %v474 = vshrl.u32 %v473, 7
  %v475 = vsub.s32 %v472, %v474
  %v476 = vrot.slane %v330, %v475
  %v477 = vcombine.low %v469, %v476
  %v478 = vcombine.high %v469, %v476
  %v480 = vunpack.c.l.s4 1983009808
  %v481 = vunpack.c.0.s8 %v480
  %v482 = vlaneseq
  %v483 = vshrl.u32 %v482, 7
  %v484 = vsub.s32 %v481, %v483
  %v485 = vrot.slane %v331, %v484
  %v487 = vunpack.c.l.s4 1983009808
  %v488 = vunpack.c.0.s8 %v487
  %v489 = vlaneseq
  %v490 = vshrl.u32 %v489, 7
  %v491 = vsub.s32 %v488, %v490
  %v492 = vrot.slane %v332, %v491
  %v493 = vcombine.low %v485, %v492
  %v494 = vcombine.high %v485, %v492
  %v496 = vunpack.c.l.s4 1983009808
  %v497 = vunpack.c.0.s8 %v496
  %v498 = vlaneseq
  %v499 = vshrl.u32 %v498, 7
  %v500 = vsub.s32 %v497, %v499
  %v501 = vrot.slane %v333, %v500
  %v503 = vunpack.c.l.s4 1983009808
  %v504 = vunpack.c.0.s8 %v503
  %v505 = vlaneseq
  %v506 = vshrl.u32 %v505, 7
  %v507 = vsub.s32 %v504, %v506
  %v508 = vrot.slane %v334, %v507
  %v509 = vcombine.low %v501, %v508
  %v510 = vcombine.high %v501, %v508
  %v512 = vunpack.c.l.s4 1983009808
  %v513 = vunpack.c.0.s8 %v512
  %v514 = vlaneseq
  %v515 = vshrl.u32 %v514, 7
  %v516 = vsub.s32 %v513, %v515
  %v517 = vrot.slane %v335, %v516
  %v519 = vunpack.c.l.s4 1983009808
  %v520 = vunpack.c.0.s8 %v519
  %v521 = vlaneseq
  %v522 = vshrl.u32 %v521, 7
  %v523 = vsub.s32 %v520, %v522
  %v524 = vrot.slane %v336, %v523
  %v525 = vcombine.low %v517, %v524
  %v526 = vcombine.high %v517, %v524
  %v528 = vunpack.c.l.s4 1983009808
  %v529 = vunpack.c.0.s8 %v528
  %v530 = vlaneseq
  %v531 = vshrl.u32 %v530, 7
  %v532 = vsub.s32 %v529, %v531
  %v533 = vrot.slane %v337, %v532
  %v535 = vunpack.c.l.s4 1983009808
  %v536 = vunpack.c.0.s8 %v535
  %v537 = vlaneseq
  %v538 = vshrl.u32 %v537, 7
  %v539 = vsub.s32 %v536, %v538
  %v540 = vrot.slane %v338, %v539
  %v541 = vcombine.low %v533, %v540
  %v542 = vcombine.high %v533, %v540
  %v544 = vunpack.c.l.s4 1983009808
  %v545 = vunpack.c.0.s8 %v544
  %v546 = vlaneseq
  %v547 = vshrl.u32 %v546, 7
  %v548 = vsub.s32 %v545, %v547
  %v549 = vrot.slane %v339, %v548
  %v551 = vunpack.c.l.s4 1983009808
  %v552 = vunpack.c.0.s8 %v551
  %v553 = vlaneseq
  %v554 = vshrl.u32 %v553, 7
  %v555 = vsub.s32 %v552, %v554
  %v556 = vrot.slane %v340, %v555
  %v557 = vcombine.low %v549, %v556
  %v558 = vcombine.high %v549, %v556
  %v560 = vunpack.c.l.s4 1983009808
  %v561 = vunpack.c.0.s8 %v560
  %v562 = vlaneseq
  %v563 = vshrl.u32 %v562, 7
  %v564 = vsub.s32 %v561, %v563
  %v565 = vrot.slane %v341, %v564
  %v567 = vunpack.c.l.s4 1983009808
  %v568 = vunpack.c.0.s8 %v567
  %v569 = vlaneseq
  %v570 = vshrl.u32 %v569, 7
  %v571 = vsub.s32 %v568, %v570
  %v572 = vrot.slane %v342, %v571
  %v573 = vcombine.low %v565, %v572
  %v574 = vcombine.high %v565, %v572
  %v576 = vunpack.c.l.s4 1983009808
  %v577 = vunpack.c.0.s8 %v576
  %v578 = vlaneseq
  %v579 = vshrl.u32 %v578, 7
  %v580 = vsub.s32 %v577, %v579
  %v581 = vrot.slane %v343, %v580
  %v583 = vunpack.c.l.s4 1983009808
  %v584 = vunpack.c.0.s8 %v583
  %v585 = vlaneseq
  %v586 = vshrl.u32 %v585, 7
  %v587 = vsub.s32 %v584, %v586
  %v588 = vrot.slane %v344, %v587
  %v589 = vcombine.low %v581, %v588
  %v590 = vcombine.high %v581, %v588
  %v592 = vunpack.c.l.s4 1983009808
  %v593 = vunpack.c.0.s8 %v592
  %v594 = vlaneseq
  %v595 = vshrl.u32 %v594, 7
  %v596 = vsub.s32 %v593, %v595
  %v597 = vrot.slane %v345, %v596
  %v599 = vunpack.c.l.s4 1983009808
  %v600 = vunpack.c.0.s8 %v599
  %v601 = vlaneseq
  %v602 = vshrl.u32 %v601, 7
  %v603 = vsub.s32 %v600, %v602
  %v604 = vrot.slane %v346, %v603
  %v605 = vcombine.low %v597, %v604
  %v606 = vcombine.high %v597, %v604
  %v608 = vunpack.c.l.s4 1983009808
  %v609 = vunpack.c.0.s8 %v608
  %v610 = vlaneseq
  %v611 = vshrl.u32 %v610, 7
  %v612 = vsub.s32 %v609, %v611
  %v613 = vrot.slane %v347, %v612
  %v615 = vunpack.c.l.s4 1983009808
  %v616 = vunpack.c.0.s8 %v615
  %v617 = vlaneseq
  %v618 = vshrl.u32 %v617, 7
  %v619 = vsub.s32 %v616, %v618
  %v620 = vrot.slane %v348, %v619
  %v621 = vcombine.low %v613, %v620
  %v622 = vcombine.high %v613, %v620
  %v624 = vunpack.c.l.s4 1983009808
  %v625 = vunpack.c.0.s8 %v624
  %v626 = vlaneseq
  %v627 = vshrl.u32 %v626, 7
  %v628 = vsub.s32 %v625, %v627
  %v629 = vrot.slane %v349, %v628
  %v631 = vunpack.c.l.s4 1983009808
  %v632 = vunpack.c.0.s8 %v631
  %v633 = vlaneseq
  %v634 = vshrl.u32 %v633, 7
  %v635 = vsub.s32 %v632, %v634
  %v636 = vrot.slane %v350, %v635
  %v637 = vcombine.low %v629, %v636
  %v638 = vcombine.high %v629, %v636
  %vm639 = vsmask.f32 1280
  %vm640 = vsmask.f32 3336
  %vm641 = vmor %vm639, %vm640
  %vm642 = vsmask.f32 5392
  %vm643 = vmor %vm641, %vm642
  %vm644 = vsmask.f32 7448
  %vm645 = vmor %vm643, %vm644
  %v647 = vshrl.u32 %v397, 16
  %v649 = vrot.slane %v647, 6
  %v650 = vshll.u32 %v397, 16
  %v652 = vrot.slane %v650, 7
  %v653 = vor.u32 %v649, %v652
  %v654 = vrot.slane %v653, 2
  %v656 = vshll.u32 %v398, 16
  %v658 = vrot.slane %v656, 7
  %v659 = vsel %vm645, %v654, %v658
  %v661 = vshrl.u32 %v413, 16
  %v663 = vrot.slane %v661, 6
  %v664 = vshll.u32 %v413, 16
  %v666 = vrot.slane %v664, 7
  %v667 = vor.u32 %v663, %v666
  %v668 = vrot.slane %v667, 2
  %v670 = vshll.u32 %v414, 16
  %v672 = vrot.slane %v670, 7
  %v673 = vsel %vm645, %v668, %v672
  %v675 = vshrl.u32 %v429, 16
  %v677 = vrot.slane %v675, 6
  %v678 = vshll.u32 %v429, 16
  %v680 = vrot.slane %v678, 7
  %v681 = vor.u32 %v677, %v680
  %v682 = vrot.slane %v681, 2
  %v684 = vshll.u32 %v430, 16
  %v686 = vrot.slane %v684, 7
  %v687 = vsel %vm645, %v682, %v686
  %v689 = vshrl.u32 %v445, 16
  %v691 = vrot.slane %v689, 6
  %v692 = vshll.u32 %v445, 16
  %v694 = vrot.slane %v692, 7
  %v695 = vor.u32 %v691, %v694
  %v696 = vrot.slane %v695, 2
  %v698 = vshll.u32 %v446, 16
  %v700 = vrot.slane %v698, 7
  %v701 = vsel %vm645, %v696, %v700
  %v703 = vshrl.u32 %v461, 16
  %v705 = vrot.slane %v703, 6
  %v706 = vshll.u32 %v461, 16
  %v708 = vrot.slane %v706, 7
  %v709 = vor.u32 %v705, %v708
  %v710 = vrot.slane %v709, 2
  %v712 = vshll.u32 %v462, 16
  %v714 = vrot.slane %v712, 7
  %v715 = vsel %vm645, %v710, %v714
  %v717 = vshrl.u32 %v477, 16
  %v719 = vrot.slane %v717, 6
  %v720 = vshll.u32 %v477, 16
  %v722 = vrot.slane %v720, 7
  %v723 = vor.u32 %v719, %v722
  %v724 = vrot.slane %v723, 2
  %v726 = vshll.u32 %v478, 16
  %v728 = vrot.slane %v726, 7
  %v729 = vsel %vm645, %v724, %v728
  %v731 = vshrl.u32 %v493, 16
  %v733 = vrot.slane %v731, 6
  %v734 = vshll.u32 %v493, 16
  %v736 = vrot.slane %v734, 7
  %v737 = vor.u32 %v733, %v736
  %v738 = vrot.slane %v737, 2
  %v740 = vshll.u32 %v494, 16
  %v742 = vrot.slane %v740, 7
  %v743 = vsel %vm645, %v738, %v742
  %v745 = vshrl.u32 %v509, 16
  %v747 = vrot.slane %v745, 6
  %v748 = vshll.u32 %v509, 16
  %v750 = vrot.slane %v748, 7
  %v751 = vor.u32 %v747, %v750
  %v752 = vrot.slane %v751, 2
  %v754 = vshll.u32 %v510, 16
  %v756 = vrot.slane %v754, 7
  %v757 = vsel %vm645, %v752, %v756
  %v759 = vshrl.u32 %v525, 16
  %v761 = vrot.slane %v759, 6
  %v762 = vshll.u32 %v525, 16
  %v764 = vrot.slane %v762, 7
  %v765 = vor.u32 %v761, %v764
  %v766 = vrot.slane %v765, 2
  %v768 = vshll.u32 %v526, 16
  %v770 = vrot.slane %v768, 7
  %v771 = vsel %vm645, %v766, %v770
  %v773 = vshrl.u32 %v541, 16
  %v775 = vrot.slane %v773, 6
  %v776 = vshll.u32 %v541, 16
  %v778 = vrot.slane %v776, 7
  %v779 = vor.u32 %v775, %v778
  %v780 = vrot.slane %v779, 2
  %v782 = vshll.u32 %v542, 16
  %v784 = vrot.slane %v782, 7
  %v785 = vsel %vm645, %v780, %v784
  %v787 = vshrl.u32 %v557, 16
  %v789 = vrot.slane %v787, 6
  %v790 = vshll.u32 %v557, 16
  %v792 = vrot.slane %v790, 7
  %v793 = vor.u32 %v789, %v792
  %v794 = vrot.slane %v793, 2
  %v796 = vshll.u32 %v558, 16
  %v798 = vrot.slane %v796, 7
  %v799 = vsel %vm645, %v794, %v798
  %v801 = vshrl.u32 %v573, 16
  %v803 = vrot.slane %v801, 6
  %v804 = vshll.u32 %v573, 16
  %v806 = vrot.slane %v804, 7
  %v807 = vor.u32 %v803, %v806
  %v808 = vrot.slane %v807, 2
  %v810 = vshll.u32 %v574, 16
  %v812 = vrot.slane %v810, 7
  %v813 = vsel %vm645, %v808, %v812
  %v815 = vshrl.u32 %v589, 16
  %v817 = vrot.slane %v815, 6
  %v818 = vshll.u32 %v589, 16
  %v820 = vrot.slane %v818, 7
  %v821 = vor.u32 %v817, %v820
  %v822 = vrot.slane %v821, 2
  %v824 = vshll.u32 %v590, 16
  %v826 = vrot.slane %v824, 7
  %v827 = vsel %vm645, %v822, %v826
  %v829 = vshrl.u32 %v605, 16
  %v831 = vrot.slane %v829, 6
  %v832 = vshll.u32 %v605, 16
  %v834 = vrot.slane %v832, 7
  %v835 = vor.u32 %v831, %v834
  %v836 = vrot.slane %v835, 2
  %v838 = vshll.u32 %v606, 16
  %v840 = vrot.slane %v838, 7
  %v841 = vsel %vm645, %v836, %v840
  %v843 = vshrl.u32 %v621, 16
  %v845 = vrot.slane %v843, 6
  %v846 = vshll.u32 %v621, 16
  %v848 = vrot.slane %v846, 7
  %v849 = vor.u32 %v845, %v848
  %v850 = vrot.slane %v849, 2
  %v852 = vshll.u32 %v622, 16
  %v854 = vrot.slane %v852, 7
  %v855 = vsel %vm645, %v850, %v854
  %v857 = vshrl.u32 %v637, 16
  %v859 = vrot.slane %v857, 6
  %v860 = vshll.u32 %v637, 16
  %v862 = vrot.slane %v860, 7
  %v863 = vor.u32 %v859, %v862
  %v864 = vrot.slane %v863, 2
  %v866 = vshll.u32 %v638, 16
  %v868 = vrot.slane %v866, 7
  %v869 = vsel %vm645, %v864, %v868
  %s870 = scalar_lea.vmem %s0, 16
  %v871 = vld [vmem:[%s870] sm:$0x33]
  %v872 = vld [vmem:[%s870 + $0x8] sm:$0x33]
  %v873 = vld [vmem:[%s870 + $0x10] sm:$0x33]
  %v874 = vld [vmem:[%s870 + $0x18] sm:$0x33]
  %v875 = vld [vmem:[%s870 + $0x20] sm:$0x33]
  %v876 = vld [vmem:[%s870 + $0x28] sm:$0x33]
  %v877 = vld [vmem:[%s870 + $0x30] sm:$0x33]
  %v878 = vld [vmem:[%s870 + $0x38] sm:$0x33]
  %v879 = vld [vmem:[%s870 + $0x50] sm:$0x33]
  %v880 = vld [vmem:[%s870 + $0x58] sm:$0x33]
  %v881 = vld [vmem:[%s870 + $0x60] sm:$0x33]
  %v882 = vld [vmem:[%s870 + $0x68] sm:$0x33]
  %v883 = vld [vmem:[%s870 + $0x70] sm:$0x33]
  %v884 = vld [vmem:[%s870 + $0x78] sm:$0x33]
  %v885 = vld [vmem:[%s870 + $0x80] sm:$0x33]
  %v886 = vld [vmem:[%s870 + $0x88] sm:$0x33]
  %v887 = vld [vmem:[%s870 + $0xa0] sm:$0x33]
  %v888 = vld [vmem:[%s870 + $0xa8] sm:$0x33]
  %v889 = vld [vmem:[%s870 + $0xb0] sm:$0x33]
  %v890 = vld [vmem:[%s870 + $0xb8] sm:$0x33]
  %v891 = vld [vmem:[%s870 + $0xc0] sm:$0x33]
  %v892 = vld [vmem:[%s870 + $0xc8] sm:$0x33]
  %v893 = vld [vmem:[%s870 + $0xd0] sm:$0x33]
  %v894 = vld [vmem:[%s870 + $0xd8] sm:$0x33]
  %v895 = vld [vmem:[%s870 + $0xf0] sm:$0x33]
  %v896 = vld [vmem:[%s870 + $0xf8] sm:$0x33]
  %v897 = vld [vmem:[%s870 + $0x100] sm:$0x33]
  %v898 = vld [vmem:[%s870 + $0x108] sm:$0x33]
  %v899 = vld [vmem:[%s870 + $0x110] sm:$0x33]
  %v900 = vld [vmem:[%s870 + $0x118] sm:$0x33]
  %v901 = vld [vmem:[%s870 + $0x120] sm:$0x33]
  %v902 = vld [vmem:[%s870 + $0x128] sm:$0x33]
  %v936 = vunpack.c.l.s4 1983009808
  %v937 = vunpack.c.0.s8 %v936
  %v938 = vlaneseq
  %v939 = vshrl.u32 %v938, 7
  %v940 = vsub.s32 %v937, %v939
  %v941 = vrot.slane %v871, %v940
  %v943 = vunpack.c.l.s4 1983009808
  %v944 = vunpack.c.0.s8 %v943
  %v945 = vlaneseq
  %v946 = vshrl.u32 %v945, 7
  %v947 = vsub.s32 %v944, %v946
  %v948 = vrot.slane %v872, %v947
  %v949 = vcombine.low %v941, %v948
  %v951 = vunpack.c.l.s4 1983009808
  %v952 = vunpack.c.0.s8 %v951
  %v953 = vlaneseq
  %v954 = vshrl.u32 %v953, 7
  %v955 = vsub.s32 %v952, %v954
  %v956 = vrot.slane %v873, %v955
  %v958 = vunpack.c.l.s4 1983009808
  %v959 = vunpack.c.0.s8 %v958
  %v960 = vlaneseq
  %v961 = vshrl.u32 %v960, 7
  %v962 = vsub.s32 %v959, %v961
  %v963 = vrot.slane %v874, %v962
  %v964 = vcombine.low %v956, %v963
  %v966 = vunpack.c.l.s4 1983009808
  %v967 = vunpack.c.0.s8 %v966
  %v968 = vlaneseq
  %v969 = vshrl.u32 %v968, 7
  %v970 = vsub.s32 %v967, %v969
  %v971 = vrot.slane %v875, %v970
  %v973 = vunpack.c.l.s4 1983009808
  %v974 = vunpack.c.0.s8 %v973
  %v975 = vlaneseq
  %v976 = vshrl.u32 %v975, 7
  %v977 = vsub.s32 %v974, %v976
  %v978 = vrot.slane %v876, %v977
  %v979 = vcombine.low %v971, %v978
  %v981 = vunpack.c.l.s4 1983009808
  %v982 = vunpack.c.0.s8 %v981
  %v983 = vlaneseq
  %v984 = vshrl.u32 %v983, 7
  %v985 = vsub.s32 %v982, %v984
  %v986 = vrot.slane %v877, %v985
  %v988 = vunpack.c.l.s4 1983009808
  %v989 = vunpack.c.0.s8 %v988
  %v990 = vlaneseq
  %v991 = vshrl.u32 %v990, 7
  %v992 = vsub.s32 %v989, %v991
  %v993 = vrot.slane %v878, %v992
  %v994 = vcombine.low %v986, %v993
  %v996 = vunpack.c.l.s4 1983009808
  %v997 = vunpack.c.0.s8 %v996
  %v998 = vlaneseq
  %v999 = vshrl.u32 %v998, 7
  %v1000 = vsub.s32 %v997, %v999
  %v1001 = vrot.slane %v879, %v1000
  %v1003 = vunpack.c.l.s4 1983009808
  %v1004 = vunpack.c.0.s8 %v1003
  %v1005 = vlaneseq
  %v1006 = vshrl.u32 %v1005, 7
  %v1007 = vsub.s32 %v1004, %v1006
  %v1008 = vrot.slane %v880, %v1007
  %v1009 = vcombine.low %v1001, %v1008
  %v1011 = vunpack.c.l.s4 1983009808
  %v1012 = vunpack.c.0.s8 %v1011
  %v1013 = vlaneseq
  %v1014 = vshrl.u32 %v1013, 7
  %v1015 = vsub.s32 %v1012, %v1014
  %v1016 = vrot.slane %v881, %v1015
  %v1018 = vunpack.c.l.s4 1983009808
  %v1019 = vunpack.c.0.s8 %v1018
  %v1020 = vlaneseq
  %v1021 = vshrl.u32 %v1020, 7
  %v1022 = vsub.s32 %v1019, %v1021
  %v1023 = vrot.slane %v882, %v1022
  %v1024 = vcombine.low %v1016, %v1023
  %v1026 = vunpack.c.l.s4 1983009808
  %v1027 = vunpack.c.0.s8 %v1026
  %v1028 = vlaneseq
  %v1029 = vshrl.u32 %v1028, 7
  %v1030 = vsub.s32 %v1027, %v1029
  %v1031 = vrot.slane %v883, %v1030
  %v1033 = vunpack.c.l.s4 1983009808
  %v1034 = vunpack.c.0.s8 %v1033
  %v1035 = vlaneseq
  %v1036 = vshrl.u32 %v1035, 7
  %v1037 = vsub.s32 %v1034, %v1036
  %v1038 = vrot.slane %v884, %v1037
  %v1039 = vcombine.low %v1031, %v1038
  %v1041 = vunpack.c.l.s4 1983009808
  %v1042 = vunpack.c.0.s8 %v1041
  %v1043 = vlaneseq
  %v1044 = vshrl.u32 %v1043, 7
  %v1045 = vsub.s32 %v1042, %v1044
  %v1046 = vrot.slane %v885, %v1045
  %v1048 = vunpack.c.l.s4 1983009808
  %v1049 = vunpack.c.0.s8 %v1048
  %v1050 = vlaneseq
  %v1051 = vshrl.u32 %v1050, 7
  %v1052 = vsub.s32 %v1049, %v1051
  %v1053 = vrot.slane %v886, %v1052
  %v1054 = vcombine.low %v1046, %v1053
  %v1056 = vunpack.c.l.s4 1983009808
  %v1057 = vunpack.c.0.s8 %v1056
  %v1058 = vlaneseq
  %v1059 = vshrl.u32 %v1058, 7
  %v1060 = vsub.s32 %v1057, %v1059
  %v1061 = vrot.slane %v887, %v1060
  %v1063 = vunpack.c.l.s4 1983009808
  %v1064 = vunpack.c.0.s8 %v1063
  %v1065 = vlaneseq
  %v1066 = vshrl.u32 %v1065, 7
  %v1067 = vsub.s32 %v1064, %v1066
  %v1068 = vrot.slane %v888, %v1067
  %v1069 = vcombine.low %v1061, %v1068
  %v1071 = vunpack.c.l.s4 1983009808
  %v1072 = vunpack.c.0.s8 %v1071
  %v1073 = vlaneseq
  %v1074 = vshrl.u32 %v1073, 7
  %v1075 = vsub.s32 %v1072, %v1074
  %v1076 = vrot.slane %v889, %v1075
  %v1078 = vunpack.c.l.s4 1983009808
  %v1079 = vunpack.c.0.s8 %v1078
  %v1080 = vlaneseq
  %v1081 = vshrl.u32 %v1080, 7
  %v1082 = vsub.s32 %v1079, %v1081
  %v1083 = vrot.slane %v890, %v1082
  %v1084 = vcombine.low %v1076, %v1083
  %v1086 = vunpack.c.l.s4 1983009808
  %v1087 = vunpack.c.0.s8 %v1086
  %v1088 = vlaneseq
  %v1089 = vshrl.u32 %v1088, 7
  %v1090 = vsub.s32 %v1087, %v1089
  %v1091 = vrot.slane %v891, %v1090
  %v1093 = vunpack.c.l.s4 1983009808
  %v1094 = vunpack.c.0.s8 %v1093
  %v1095 = vlaneseq
  %v1096 = vshrl.u32 %v1095, 7
  %v1097 = vsub.s32 %v1094, %v1096
  %v1098 = vrot.slane %v892, %v1097
  %v1099 = vcombine.low %v1091, %v1098
  %v1101 = vunpack.c.l.s4 1983009808
  %v1102 = vunpack.c.0.s8 %v1101
  %v1103 = vlaneseq
  %v1104 = vshrl.u32 %v1103, 7
  %v1105 = vsub.s32 %v1102, %v1104
  %v1106 = vrot.slane %v893, %v1105
  %v1108 = vunpack.c.l.s4 1983009808
  %v1109 = vunpack.c.0.s8 %v1108
  %v1110 = vlaneseq
  %v1111 = vshrl.u32 %v1110, 7
  %v1112 = vsub.s32 %v1109, %v1111
  %v1113 = vrot.slane %v894, %v1112
  %v1114 = vcombine.low %v1106, %v1113
  %v1116 = vunpack.c.l.s4 1983009808
  %v1117 = vunpack.c.0.s8 %v1116
  %v1118 = vlaneseq
  %v1119 = vshrl.u32 %v1118, 7
  %v1120 = vsub.s32 %v1117, %v1119
  %v1121 = vrot.slane %v895, %v1120
  %v1123 = vunpack.c.l.s4 1983009808
  %v1124 = vunpack.c.0.s8 %v1123
  %v1125 = vlaneseq
  %v1126 = vshrl.u32 %v1125, 7
  %v1127 = vsub.s32 %v1124, %v1126
  %v1128 = vrot.slane %v896, %v1127
  %v1129 = vcombine.low %v1121, %v1128
  %v1131 = vunpack.c.l.s4 1983009808
  %v1132 = vunpack.c.0.s8 %v1131
  %v1133 = vlaneseq
  %v1134 = vshrl.u32 %v1133, 7
  %v1135 = vsub.s32 %v1132, %v1134
  %v1136 = vrot.slane %v897, %v1135
  %v1138 = vunpack.c.l.s4 1983009808
  %v1139 = vunpack.c.0.s8 %v1138
  %v1140 = vlaneseq
  %v1141 = vshrl.u32 %v1140, 7
  %v1142 = vsub.s32 %v1139, %v1141
  %v1143 = vrot.slane %v898, %v1142
  %v1144 = vcombine.low %v1136, %v1143
  %v1146 = vunpack.c.l.s4 1983009808
  %v1147 = vunpack.c.0.s8 %v1146
  %v1148 = vlaneseq
  %v1149 = vshrl.u32 %v1148, 7
  %v1150 = vsub.s32 %v1147, %v1149
  %v1151 = vrot.slane %v899, %v1150
  %v1153 = vunpack.c.l.s4 1983009808
  %v1154 = vunpack.c.0.s8 %v1153
  %v1155 = vlaneseq
  %v1156 = vshrl.u32 %v1155, 7
  %v1157 = vsub.s32 %v1154, %v1156
  %v1158 = vrot.slane %v900, %v1157
  %v1159 = vcombine.low %v1151, %v1158
  %v1161 = vunpack.c.l.s4 1983009808
  %v1162 = vunpack.c.0.s8 %v1161
  %v1163 = vlaneseq
  %v1164 = vshrl.u32 %v1163, 7
  %v1165 = vsub.s32 %v1162, %v1164
  %v1166 = vrot.slane %v901, %v1165
  %v1168 = vunpack.c.l.s4 1983009808
  %v1169 = vunpack.c.0.s8 %v1168
  %v1170 = vlaneseq
  %v1171 = vshrl.u32 %v1170, 7
  %v1172 = vsub.s32 %v1169, %v1171
  %v1173 = vrot.slane %v902, %v1172
  %v1174 = vcombine.low %v1166, %v1173
  %v1175 = vld [vmem:[%s870] sm:$0x77]
  %v1176 = vld [vmem:[%s870 + $0x8] sm:$0x77]
  %v1177 = vld [vmem:[%s870 + $0x10] sm:$0x77]
  %v1178 = vld [vmem:[%s870 + $0x18] sm:$0x77]
  %v1179 = vld [vmem:[%s870 + $0x20] sm:$0x77]
  %v1180 = vld [vmem:[%s870 + $0x28] sm:$0x77]
  %v1181 = vld [vmem:[%s870 + $0x30] sm:$0x77]
  %v1182 = vld [vmem:[%s870 + $0x38] sm:$0x77]
  %v1183 = vld [vmem:[%s870 + $0x50] sm:$0x77]
  %v1184 = vld [vmem:[%s870 + $0x58] sm:$0x77]
  %v1185 = vld [vmem:[%s870 + $0x60] sm:$0x77]
  %v1186 = vld [vmem:[%s870 + $0x68] sm:$0x77]
  %v1187 = vld [vmem:[%s870 + $0x70] sm:$0x77]
  %v1188 = vld [vmem:[%s870 + $0x78] sm:$0x77]
  %v1189 = vld [vmem:[%s870 + $0x80] sm:$0x77]
  %v1190 = vld [vmem:[%s870 + $0x88] sm:$0x77]
  %v1191 = vld [vmem:[%s870 + $0xa0] sm:$0x77]
  %v1192 = vld [vmem:[%s870 + $0xa8] sm:$0x77]
  %v1193 = vld [vmem:[%s870 + $0xb0] sm:$0x77]
  %v1194 = vld [vmem:[%s870 + $0xb8] sm:$0x77]
  %v1195 = vld [vmem:[%s870 + $0xc0] sm:$0x77]
  %v1196 = vld [vmem:[%s870 + $0xc8] sm:$0x77]
  %v1197 = vld [vmem:[%s870 + $0xd0] sm:$0x77]
  %v1198 = vld [vmem:[%s870 + $0xd8] sm:$0x77]
  %v1199 = vld [vmem:[%s870 + $0xf0] sm:$0x77]
  %v1200 = vld [vmem:[%s870 + $0xf8] sm:$0x77]
  %v1201 = vld [vmem:[%s870 + $0x100] sm:$0x77]
  %v1202 = vld [vmem:[%s870 + $0x108] sm:$0x77]
  %v1203 = vld [vmem:[%s870 + $0x110] sm:$0x77]
  %v1204 = vld [vmem:[%s870 + $0x118] sm:$0x77]
  %v1205 = vld [vmem:[%s870 + $0x120] sm:$0x77]
  %v1206 = vld [vmem:[%s870 + $0x128] sm:$0x77]
  %v1240 = vunpack.c.l.s4 1983009808
  %v1241 = vunpack.c.0.s8 %v1240
  %v1242 = vlaneseq
  %v1243 = vshrl.u32 %v1242, 7
  %v1244 = vsub.s32 %v1241, %v1243
  %v1245 = vrot.slane %v1175, %v1244
  %v1247 = vunpack.c.l.s4 1983009808
  %v1248 = vunpack.c.0.s8 %v1247
  %v1249 = vlaneseq
  %v1250 = vshrl.u32 %v1249, 7
  %v1251 = vsub.s32 %v1248, %v1250
  %v1252 = vrot.slane %v1176, %v1251
  %v1253 = vcombine.low %v1245, %v1252
  %v1254 = vcombine.high %v1245, %v1252
  %v1256 = vunpack.c.l.s4 1983009808
  %v1257 = vunpack.c.0.s8 %v1256
  %v1258 = vlaneseq
  %v1259 = vshrl.u32 %v1258, 7
  %v1260 = vsub.s32 %v1257, %v1259
  %v1261 = vrot.slane %v1177, %v1260
  %v1263 = vunpack.c.l.s4 1983009808
  %v1264 = vunpack.c.0.s8 %v1263
  %v1265 = vlaneseq
  %v1266 = vshrl.u32 %v1265, 7
  %v1267 = vsub.s32 %v1264, %v1266
  %v1268 = vrot.slane %v1178, %v1267
  %v1269 = vcombine.low %v1261, %v1268
  %v1270 = vcombine.high %v1261, %v1268
  %v1272 = vunpack.c.l.s4 1983009808
  %v1273 = vunpack.c.0.s8 %v1272
  %v1274 = vlaneseq
  %v1275 = vshrl.u32 %v1274, 7
  %v1276 = vsub.s32 %v1273, %v1275
  %v1277 = vrot.slane %v1179, %v1276
  %v1279 = vunpack.c.l.s4 1983009808
  %v1280 = vunpack.c.0.s8 %v1279
  %v1281 = vlaneseq
  %v1282 = vshrl.u32 %v1281, 7
  %v1283 = vsub.s32 %v1280, %v1282
  %v1284 = vrot.slane %v1180, %v1283
  %v1285 = vcombine.low %v1277, %v1284
  %v1286 = vcombine.high %v1277, %v1284
  %v1288 = vunpack.c.l.s4 1983009808
  %v1289 = vunpack.c.0.s8 %v1288
  %v1290 = vlaneseq
  %v1291 = vshrl.u32 %v1290, 7
  %v1292 = vsub.s32 %v1289, %v1291
  %v1293 = vrot.slane %v1181, %v1292
  %v1295 = vunpack.c.l.s4 1983009808
  %v1296 = vunpack.c.0.s8 %v1295
  %v1297 = vlaneseq
  %v1298 = vshrl.u32 %v1297, 7
  %v1299 = vsub.s32 %v1296, %v1298
  %v1300 = vrot.slane %v1182, %v1299
  %v1301 = vcombine.low %v1293, %v1300
  %v1302 = vcombine.high %v1293, %v1300
  %v1304 = vunpack.c.l.s4 1983009808
  %v1305 = vunpack.c.0.s8 %v1304
  %v1306 = vlaneseq
  %v1307 = vshrl.u32 %v1306, 7
  %v1308 = vsub.s32 %v1305, %v1307
  %v1309 = vrot.slane %v1183, %v1308
  %v1311 = vunpack.c.l.s4 1983009808
  %v1312 = vunpack.c.0.s8 %v1311
  %v1313 = vlaneseq
  %v1314 = vshrl.u32 %v1313, 7
  %v1315 = vsub.s32 %v1312, %v1314
  %v1316 = vrot.slane %v1184, %v1315
  %v1317 = vcombine.low %v1309, %v1316
  %v1318 = vcombine.high %v1309, %v1316
  %v1320 = vunpack.c.l.s4 1983009808
  %v1321 = vunpack.c.0.s8 %v1320
  %v1322 = vlaneseq
  %v1323 = vshrl.u32 %v1322, 7
  %v1324 = vsub.s32 %v1321, %v1323
  %v1325 = vrot.slane %v1185, %v1324
  %v1327 = vunpack.c.l.s4 1983009808
  %v1328 = vunpack.c.0.s8 %v1327
  %v1329 = vlaneseq
  %v1330 = vshrl.u32 %v1329, 7
  %v1331 = vsub.s32 %v1328, %v1330
  %v1332 = vrot.slane %v1186, %v1331
  %v1333 = vcombine.low %v1325, %v1332
  %v1334 = vcombine.high %v1325, %v1332
  %v1336 = vunpack.c.l.s4 1983009808
  %v1337 = vunpack.c.0.s8 %v1336
  %v1338 = vlaneseq
  %v1339 = vshrl.u32 %v1338, 7
  %v1340 = vsub.s32 %v1337, %v1339
  %v1341 = vrot.slane %v1187, %v1340
  %v1343 = vunpack.c.l.s4 1983009808
  %v1344 = vunpack.c.0.s8 %v1343
  %v1345 = vlaneseq
  %v1346 = vshrl.u32 %v1345, 7
  %v1347 = vsub.s32 %v1344, %v1346
  %v1348 = vrot.slane %v1188, %v1347
  %v1349 = vcombine.low %v1341, %v1348
  %v1350 = vcombine.high %v1341, %v1348
  %v1352 = vunpack.c.l.s4 1983009808
  %v1353 = vunpack.c.0.s8 %v1352
  %v1354 = vlaneseq
  %v1355 = vshrl.u32 %v1354, 7
  %v1356 = vsub.s32 %v1353, %v1355
  %v1357 = vrot.slane %v1189, %v1356
  %v1359 = vunpack.c.l.s4 1983009808
  %v1360 = vunpack.c.0.s8 %v1359
  %v1361 = vlaneseq
  %v1362 = vshrl.u32 %v1361, 7
  %v1363 = vsub.s32 %v1360, %v1362
  %v1364 = vrot.slane %v1190, %v1363
  %v1365 = vcombine.low %v1357, %v1364
  %v1366 = vcombine.high %v1357, %v1364
  %v1368 = vunpack.c.l.s4 1983009808
  %v1369 = vunpack.c.0.s8 %v1368
  %v1370 = vlaneseq
  %v1371 = vshrl.u32 %v1370, 7
  %v1372 = vsub.s32 %v1369, %v1371
  %v1373 = vrot.slane %v1191, %v1372
  %v1375 = vunpack.c.l.s4 1983009808
  %v1376 = vunpack.c.0.s8 %v1375
  %v1377 = vlaneseq
  %v1378 = vshrl.u32 %v1377, 7
  %v1379 = vsub.s32 %v1376, %v1378
  %v1380 = vrot.slane %v1192, %v1379
  %v1381 = vcombine.low %v1373, %v1380
  %v1382 = vcombine.high %v1373, %v1380
  %v1384 = vunpack.c.l.s4 1983009808
  %v1385 = vunpack.c.0.s8 %v1384
  %v1386 = vlaneseq
  %v1387 = vshrl.u32 %v1386, 7
  %v1388 = vsub.s32 %v1385, %v1387
  %v1389 = vrot.slane %v1193, %v1388
  %v1391 = vunpack.c.l.s4 1983009808
  %v1392 = vunpack.c.0.s8 %v1391
  %v1393 = vlaneseq
  %v1394 = vshrl.u32 %v1393, 7
  %v1395 = vsub.s32 %v1392, %v1394
  %v1396 = vrot.slane %v1194, %v1395
  %v1397 = vcombine.low %v1389, %v1396
  %v1398 = vcombine.high %v1389, %v1396
  %v1400 = vunpack.c.l.s4 1983009808
  %v1401 = vunpack.c.0.s8 %v1400
  %v1402 = vlaneseq
  %v1403 = vshrl.u32 %v1402, 7
  %v1404 = vsub.s32 %v1401, %v1403
  %v1405 = vrot.slane %v1195, %v1404
  %v1407 = vunpack.c.l.s4 1983009808
  %v1408 = vunpack.c.0.s8 %v1407
  %v1409 = vlaneseq
  %v1410 = vshrl.u32 %v1409, 7
  %v1411 = vsub.s32 %v1408, %v1410
  %v1412 = vrot.slane %v1196, %v1411
  %v1413 = vcombine.low %v1405, %v1412
  %v1414 = vcombine.high %v1405, %v1412
  %v1416 = vunpack.c.l.s4 1983009808
  %v1417 = vunpack.c.0.s8 %v1416
  %v1418 = vlaneseq
  %v1419 = vshrl.u32 %v1418, 7
  %v1420 = vsub.s32 %v1417, %v1419
  %v1421 = vrot.slane %v1197, %v1420
  %v1423 = vunpack.c.l.s4 1983009808
  %v1424 = vunpack.c.0.s8 %v1423
  %v1425 = vlaneseq
  %v1426 = vshrl.u32 %v1425, 7
  %v1427 = vsub.s32 %v1424, %v1426
  %v1428 = vrot.slane %v1198, %v1427
  %v1429 = vcombine.low %v1421, %v1428
  %v1430 = vcombine.high %v1421, %v1428
  %v1432 = vunpack.c.l.s4 1983009808
  %v1433 = vunpack.c.0.s8 %v1432
  %v1434 = vlaneseq
  %v1435 = vshrl.u32 %v1434, 7
  %v1436 = vsub.s32 %v1433, %v1435
  %v1437 = vrot.slane %v1199, %v1436
  %v1439 = vunpack.c.l.s4 1983009808
  %v1440 = vunpack.c.0.s8 %v1439
  %v1441 = vlaneseq
  %v1442 = vshrl.u32 %v1441, 7
  %v1443 = vsub.s32 %v1440, %v1442
  %v1444 = vrot.slane %v1200, %v1443
  %v1445 = vcombine.low %v1437, %v1444
  %v1446 = vcombine.high %v1437, %v1444
  %v1448 = vunpack.c.l.s4 1983009808
  %v1449 = vunpack.c.0.s8 %v1448
  %v1450 = vlaneseq
  %v1451 = vshrl.u32 %v1450, 7
  %v1452 = vsub.s32 %v1449, %v1451
  %v1453 = vrot.slane %v1201, %v1452
  %v1455 = vunpack.c.l.s4 1983009808
  %v1456 = vunpack.c.0.s8 %v1455
  %v1457 = vlaneseq
  %v1458 = vshrl.u32 %v1457, 7
  %v1459 = vsub.s32 %v1456, %v1458
  %v1460 = vrot.slane %v1202, %v1459
  %v1461 = vcombine.low %v1453, %v1460
  %v1462 = vcombine.high %v1453, %v1460
  %v1464 = vunpack.c.l.s4 1983009808
  %v1465 = vunpack.c.0.s8 %v1464
  %v1466 = vlaneseq
  %v1467 = vshrl.u32 %v1466, 7
  %v1468 = vsub.s32 %v1465, %v1467
  %v1469 = vrot.slane %v1203, %v1468
  %v1471 = vunpack.c.l.s4 1983009808
  %v1472 = vunpack.c.0.s8 %v1471
  %v1473 = vlaneseq
  %v1474 = vshrl.u32 %v1473, 7
  %v1475 = vsub.s32 %v1472, %v1474
  %v1476 = vrot.slane %v1204, %v1475
  %v1477 = vcombine.low %v1469, %v1476
  %v1478 = vcombine.high %v1469, %v1476
  %v1480 = vunpack.c.l.s4 1983009808
  %v1481 = vunpack.c.0.s8 %v1480
  %v1482 = vlaneseq
  %v1483 = vshrl.u32 %v1482, 7
  %v1484 = vsub.s32 %v1481, %v1483
  %v1485 = vrot.slane %v1205, %v1484
  %v1487 = vunpack.c.l.s4 1983009808
  %v1488 = vunpack.c.0.s8 %v1487
  %v1489 = vlaneseq
  %v1490 = vshrl.u32 %v1489, 7
  %v1491 = vsub.s32 %v1488, %v1490
  %v1492 = vrot.slane %v1206, %v1491
  %v1493 = vcombine.low %v1485, %v1492
  %v1494 = vcombine.high %v1485, %v1492
  %v1496 = vshrl.u32 %v1253, 16
  %v1498 = vrot.slane %v1496, 6
  %v1499 = vshll.u32 %v1253, 16
  %v1501 = vrot.slane %v1499, 7
  %v1502 = vor.u32 %v1498, %v1501
  %v1503 = vrot.slane %v1502, 2
  %v1505 = vshll.u32 %v1254, 16
  %v1507 = vrot.slane %v1505, 7
  %v1508 = vsel %vm645, %v1503, %v1507
  %v1510 = vshrl.u32 %v1269, 16
  %v1512 = vrot.slane %v1510, 6
  %v1513 = vshll.u32 %v1269, 16
  %v1515 = vrot.slane %v1513, 7
  %v1516 = vor.u32 %v1512, %v1515
  %v1517 = vrot.slane %v1516, 2
  %v1519 = vshll.u32 %v1270, 16
  %v1521 = vrot.slane %v1519, 7
  %v1522 = vsel %vm645, %v1517, %v1521
  %v1524 = vshrl.u32 %v1285, 16
  %v1526 = vrot.slane %v1524, 6
  %v1527 = vshll.u32 %v1285, 16
  %v1529 = vrot.slane %v1527, 7
  %v1530 = vor.u32 %v1526, %v1529
  %v1531 = vrot.slane %v1530, 2
  %v1533 = vshll.u32 %v1286, 16
  %v1535 = vrot.slane %v1533, 7
  %v1536 = vsel %vm645, %v1531, %v1535
  %v1538 = vshrl.u32 %v1301, 16
  %v1540 = vrot.slane %v1538, 6
  %v1541 = vshll.u32 %v1301, 16
  %v1543 = vrot.slane %v1541, 7
  %v1544 = vor.u32 %v1540, %v1543
  %v1545 = vrot.slane %v1544, 2
  %v1547 = vshll.u32 %v1302, 16
  %v1549 = vrot.slane %v1547, 7
  %v1550 = vsel %vm645, %v1545, %v1549
  %v1552 = vshrl.u32 %v1317, 16
  %v1554 = vrot.slane %v1552, 6
  %v1555 = vshll.u32 %v1317, 16
  %v1557 = vrot.slane %v1555, 7
  %v1558 = vor.u32 %v1554, %v1557
  %v1559 = vrot.slane %v1558, 2
  %v1561 = vshll.u32 %v1318, 16
  %v1563 = vrot.slane %v1561, 7
  %v1564 = vsel %vm645, %v1559, %v1563
  %v1566 = vshrl.u32 %v1333, 16
  %v1568 = vrot.slane %v1566, 6
  %v1569 = vshll.u32 %v1333, 16
  %v1571 = vrot.slane %v1569, 7
  %v1572 = vor.u32 %v1568, %v1571
  %v1573 = vrot.slane %v1572, 2
  %v1575 = vshll.u32 %v1334, 16
  %v1577 = vrot.slane %v1575, 7
  %v1578 = vsel %vm645, %v1573, %v1577
  %v1580 = vshrl.u32 %v1349, 16
  %v1582 = vrot.slane %v1580, 6
  %v1583 = vshll.u32 %v1349, 16
  %v1585 = vrot.slane %v1583, 7
  %v1586 = vor.u32 %v1582, %v1585
  %v1587 = vrot.slane %v1586, 2
  %v1589 = vshll.u32 %v1350, 16
  %v1591 = vrot.slane %v1589, 7
  %v1592 = vsel %vm645, %v1587, %v1591
  %v1594 = vshrl.u32 %v1365, 16
  %v1596 = vrot.slane %v1594, 6
  %v1597 = vshll.u32 %v1365, 16
  %v1599 = vrot.slane %v1597, 7
  %v1600 = vor.u32 %v1596, %v1599
  %v1601 = vrot.slane %v1600, 2
  %v1603 = vshll.u32 %v1366, 16
  %v1605 = vrot.slane %v1603, 7
  %v1606 = vsel %vm645, %v1601, %v1605
  %v1608 = vshrl.u32 %v1381, 16
  %v1610 = vrot.slane %v1608, 6
  %v1611 = vshll.u32 %v1381, 16
  %v1613 = vrot.slane %v1611, 7
  %v1614 = vor.u32 %v1610, %v1613
  %v1615 = vrot.slane %v1614, 2
  %v1617 = vshll.u32 %v1382, 16
  %v1619 = vrot.slane %v1617, 7
  %v1620 = vsel %vm645, %v1615, %v1619
  %v1622 = vshrl.u32 %v1397, 16
  %v1624 = vrot.slane %v1622, 6
  %v1625 = vshll.u32 %v1397, 16
  %v1627 = vrot.slane %v1625, 7
  %v1628 = vor.u32 %v1624, %v1627
  %v1629 = vrot.slane %v1628, 2
  %v1631 = vshll.u32 %v1398, 16
  %v1633 = vrot.slane %v1631, 7
  %v1634 = vsel %vm645, %v1629, %v1633
  %v1636 = vshrl.u32 %v1413, 16
  %v1638 = vrot.slane %v1636, 6
  %v1639 = vshll.u32 %v1413, 16
  %v1641 = vrot.slane %v1639, 7
  %v1642 = vor.u32 %v1638, %v1641
  %v1643 = vrot.slane %v1642, 2
  %v1645 = vshll.u32 %v1414, 16
  %v1647 = vrot.slane %v1645, 7
  %v1648 = vsel %vm645, %v1643, %v1647
  %v1650 = vshrl.u32 %v1429, 16
  %v1652 = vrot.slane %v1650, 6
  %v1653 = vshll.u32 %v1429, 16
  %v1655 = vrot.slane %v1653, 7
  %v1656 = vor.u32 %v1652, %v1655
  %v1657 = vrot.slane %v1656, 2
  %v1659 = vshll.u32 %v1430, 16
  %v1661 = vrot.slane %v1659, 7
  %v1662 = vsel %vm645, %v1657, %v1661
  %v1664 = vshrl.u32 %v1445, 16
  %v1666 = vrot.slane %v1664, 6
  %v1667 = vshll.u32 %v1445, 16
  %v1669 = vrot.slane %v1667, 7
  %v1670 = vor.u32 %v1666, %v1669
  %v1671 = vrot.slane %v1670, 2
  %v1673 = vshll.u32 %v1446, 16
  %v1675 = vrot.slane %v1673, 7
  %v1676 = vsel %vm645, %v1671, %v1675
  %v1678 = vshrl.u32 %v1461, 16
  %v1680 = vrot.slane %v1678, 6
  %v1681 = vshll.u32 %v1461, 16
  %v1683 = vrot.slane %v1681, 7
  %v1684 = vor.u32 %v1680, %v1683
  %v1685 = vrot.slane %v1684, 2
  %v1687 = vshll.u32 %v1462, 16
  %v1689 = vrot.slane %v1687, 7
  %v1690 = vsel %vm645, %v1685, %v1689
  %v1692 = vshrl.u32 %v1477, 16
  %v1694 = vrot.slane %v1692, 6
  %v1695 = vshll.u32 %v1477, 16
  %v1697 = vrot.slane %v1695, 7
  %v1698 = vor.u32 %v1694, %v1697
  %v1699 = vrot.slane %v1698, 2
  %v1701 = vshll.u32 %v1478, 16
  %v1703 = vrot.slane %v1701, 7
  %v1704 = vsel %vm645, %v1699, %v1703
  %v1706 = vshrl.u32 %v1493, 16
  %v1708 = vrot.slane %v1706, 6
  %v1709 = vshll.u32 %v1493, 16
  %v1711 = vrot.slane %v1709, 7
  %v1712 = vor.u32 %v1708, %v1711
  %v1713 = vrot.slane %v1712, 2
  %v1715 = vshll.u32 %v1494, 16
  %v1717 = vrot.slane %v1715, 7
  %v1718 = vsel %vm645, %v1713, %v1717
  %v1719 = vcombine.low %v93, %v108
  %v1720 = vcombine.high %v93, %v108
  %v1721 = vcombine.low %v123, %v138
  %v1722 = vcombine.high %v123, %v138
  %v1724 = vunpack.c.l.s4 1983009808
  %v1725 = vunpack.c.0.s8 %v1724
  %v1726 = vlaneseq
  %v1727 = vshrl.u32 %v1726, 7
  %v1728 = vsub.s32 %v1725, %v1727
  %v1729 = vrot.slane %v1719, %v1728
  %v1731 = vunpack.c.l.s4 1983009808
  %v1732 = vunpack.c.0.s8 %v1731
  %v1733 = vlaneseq
  %v1734 = vshrl.u32 %v1733, 7
  %v1735 = vsub.s32 %v1732, %v1734
  %v1736 = vrot.slane %v1720, %v1735
  %v1738 = vunpack.c.l.s4 1983009808
  %v1739 = vunpack.c.0.s8 %v1738
  %v1740 = vlaneseq
  %v1741 = vshrl.u32 %v1740, 7
  %v1742 = vsub.s32 %v1739, %v1741
  %v1743 = vrot.slane %v1721, %v1742
  %v1745 = vunpack.c.l.s4 1983009808
  %v1746 = vunpack.c.0.s8 %v1745
  %v1747 = vlaneseq
  %v1748 = vshrl.u32 %v1747, 7
  %v1749 = vsub.s32 %v1746, %v1748
  %v1750 = vrot.slane %v1722, %v1749
  %v1751 = vcombine.low %v1729, %v1743
  %v1752 = vcombine.high %v1729, %v1743
  %v1753 = vcombine.low %v1736, %v1750
  %v1754 = vcombine.high %v1736, %v1750
  %v1755 = vcombine.low %v153, %v168
  %v1756 = vcombine.high %v153, %v168
  %v1757 = vcombine.low %v183, %v198
  %v1758 = vcombine.high %v183, %v198
  %v1760 = vunpack.c.l.s4 1983009808
  %v1761 = vunpack.c.0.s8 %v1760
  %v1762 = vlaneseq
  %v1763 = vshrl.u32 %v1762, 7
  %v1764 = vsub.s32 %v1761, %v1763
  %v1765 = vrot.slane %v1755, %v1764
  %v1767 = vunpack.c.l.s4 1983009808
  %v1768 = vunpack.c.0.s8 %v1767
  %v1769 = vlaneseq
  %v1770 = vshrl.u32 %v1769, 7
  %v1771 = vsub.s32 %v1768, %v1770
  %v1772 = vrot.slane %v1756, %v1771
  %v1774 = vunpack.c.l.s4 1983009808
  %v1775 = vunpack.c.0.s8 %v1774
  %v1776 = vlaneseq
  %v1777 = vshrl.u32 %v1776, 7
  %v1778 = vsub.s32 %v1775, %v1777
  %v1779 = vrot.slane %v1757, %v1778
  %v1781 = vunpack.c.l.s4 1983009808
  %v1782 = vunpack.c.0.s8 %v1781
  %v1783 = vlaneseq
  %v1784 = vshrl.u32 %v1783, 7
  %v1785 = vsub.s32 %v1782, %v1784
  %v1786 = vrot.slane %v1758, %v1785
  %v1787 = vcombine.low %v1765, %v1779
  %v1788 = vcombine.high %v1765, %v1779
  %v1789 = vcombine.low %v1772, %v1786
  %v1790 = vcombine.high %v1772, %v1786
  %v1791 = vcombine.low %v213, %v228
  %v1792 = vcombine.high %v213, %v228
  %v1793 = vcombine.low %v243, %v258
  %v1794 = vcombine.high %v243, %v258
  %v1796 = vunpack.c.l.s4 1983009808
  %v1797 = vunpack.c.0.s8 %v1796
  %v1798 = vlaneseq
  %v1799 = vshrl.u32 %v1798, 7
  %v1800 = vsub.s32 %v1797, %v1799
  %v1801 = vrot.slane %v1791, %v1800
  %v1803 = vunpack.c.l.s4 1983009808
  %v1804 = vunpack.c.0.s8 %v1803
  %v1805 = vlaneseq
  %v1806 = vshrl.u32 %v1805, 7
  %v1807 = vsub.s32 %v1804, %v1806
  %v1808 = vrot.slane %v1792, %v1807
  %v1810 = vunpack.c.l.s4 1983009808
  %v1811 = vunpack.c.0.s8 %v1810
  %v1812 = vlaneseq
  %v1813 = vshrl.u32 %v1812, 7
  %v1814 = vsub.s32 %v1811, %v1813
  %v1815 = vrot.slane %v1793, %v1814
  %v1817 = vunpack.c.l.s4 1983009808
  %v1818 = vunpack.c.0.s8 %v1817
  %v1819 = vlaneseq
  %v1820 = vshrl.u32 %v1819, 7
  %v1821 = vsub.s32 %v1818, %v1820
  %v1822 = vrot.slane %v1794, %v1821
  %v1823 = vcombine.low %v1801, %v1815
  %v1824 = vcombine.high %v1801, %v1815
  %v1825 = vcombine.low %v1808, %v1822
  %v1826 = vcombine.high %v1808, %v1822
  %v1827 = vcombine.low %v273, %v288
  %v1828 = vcombine.high %v273, %v288
  %v1829 = vcombine.low %v303, %v318
  %v1830 = vcombine.high %v303, %v318
  %v1832 = vunpack.c.l.s4 1983009808
  %v1833 = vunpack.c.0.s8 %v1832
  %v1834 = vlaneseq
  %v1835 = vshrl.u32 %v1834, 7
  %v1836 = vsub.s32 %v1833, %v1835
  %v1837 = vrot.slane %v1827, %v1836
  %v1839 = vunpack.c.l.s4 1983009808
  %v1840 = vunpack.c.0.s8 %v1839
  %v1841 = vlaneseq
  %v1842 = vshrl.u32 %v1841, 7
  %v1843 = vsub.s32 %v1840, %v1842
  %v1844 = vrot.slane %v1828, %v1843
  %v1846 = vunpack.c.l.s4 1983009808
  %v1847 = vunpack.c.0.s8 %v1846
  %v1848 = vlaneseq
  %v1849 = vshrl.u32 %v1848, 7
  %v1850 = vsub.s32 %v1847, %v1849
  %v1851 = vrot.slane %v1829, %v1850
  %v1853 = vunpack.c.l.s4 1983009808
  %v1854 = vunpack.c.0.s8 %v1853
  %v1855 = vlaneseq
  %v1856 = vshrl.u32 %v1855, 7
  %v1857 = vsub.s32 %v1854, %v1856
  %v1858 = vrot.slane %v1830, %v1857
  %v1859 = vcombine.low %v1837, %v1851
  %v1860 = vcombine.high %v1837, %v1851
  %v1861 = vcombine.low %v1844, %v1858
  %v1862 = vcombine.high %v1844, %v1858
  %v1879 = vcombine.low %v659, %v673
  %v1880 = vcombine.high %v659, %v673
  %v1881 = vcombine.low %v687, %v701
  %v1882 = vcombine.high %v687, %v701
  %v1884 = vunpack.c.l.s4 1983009808
  %v1885 = vunpack.c.0.s8 %v1884
  %v1886 = vlaneseq
  %v1887 = vshrl.u32 %v1886, 7
  %v1888 = vsub.s32 %v1885, %v1887
  %v1889 = vrot.slane %v1879, %v1888
  %v1891 = vunpack.c.l.s4 1983009808
  %v1892 = vunpack.c.0.s8 %v1891
  %v1893 = vlaneseq
  %v1894 = vshrl.u32 %v1893, 7
  %v1895 = vsub.s32 %v1892, %v1894
  %v1896 = vrot.slane %v1880, %v1895
  %v1898 = vunpack.c.l.s4 1983009808
  %v1899 = vunpack.c.0.s8 %v1898
  %v1900 = vlaneseq
  %v1901 = vshrl.u32 %v1900, 7
  %v1902 = vsub.s32 %v1899, %v1901
  %v1903 = vrot.slane %v1881, %v1902
  %v1905 = vunpack.c.l.s4 1983009808
  %v1906 = vunpack.c.0.s8 %v1905
  %v1907 = vlaneseq
  %v1908 = vshrl.u32 %v1907, 7
  %v1909 = vsub.s32 %v1906, %v1908
  %v1910 = vrot.slane %v1882, %v1909
  %v1911 = vcombine.low %v1889, %v1903
  %v1912 = vcombine.high %v1889, %v1903
  %v1913 = vcombine.low %v1896, %v1910
  %v1914 = vcombine.high %v1896, %v1910
  %v1915 = vcombine.low %v715, %v729
  %v1916 = vcombine.high %v715, %v729
  %v1917 = vcombine.low %v743, %v757
  %v1918 = vcombine.high %v743, %v757
  %v1920 = vunpack.c.l.s4 1983009808
  %v1921 = vunpack.c.0.s8 %v1920
  %v1922 = vlaneseq
  %v1923 = vshrl.u32 %v1922, 7
  %v1924 = vsub.s32 %v1921, %v1923
  %v1925 = vrot.slane %v1915, %v1924
  %v1927 = vunpack.c.l.s4 1983009808
  %v1928 = vunpack.c.0.s8 %v1927
  %v1929 = vlaneseq
  %v1930 = vshrl.u32 %v1929, 7
  %v1931 = vsub.s32 %v1928, %v1930
  %v1932 = vrot.slane %v1916, %v1931
  %v1934 = vunpack.c.l.s4 1983009808
  %v1935 = vunpack.c.0.s8 %v1934
  %v1936 = vlaneseq
  %v1937 = vshrl.u32 %v1936, 7
  %v1938 = vsub.s32 %v1935, %v1937
  %v1939 = vrot.slane %v1917, %v1938
  %v1941 = vunpack.c.l.s4 1983009808
  %v1942 = vunpack.c.0.s8 %v1941
  %v1943 = vlaneseq
  %v1944 = vshrl.u32 %v1943, 7
  %v1945 = vsub.s32 %v1942, %v1944
  %v1946 = vrot.slane %v1918, %v1945
  %v1947 = vcombine.low %v1925, %v1939
  %v1948 = vcombine.high %v1925, %v1939
  %v1949 = vcombine.low %v1932, %v1946
  %v1950 = vcombine.high %v1932, %v1946
  %v1951 = vcombine.low %v771, %v785
  %v1952 = vcombine.high %v771, %v785
  %v1953 = vcombine.low %v799, %v813
  %v1954 = vcombine.high %v799, %v813
  %v1956 = vunpack.c.l.s4 1983009808
  %v1957 = vunpack.c.0.s8 %v1956
  %v1958 = vlaneseq
  %v1959 = vshrl.u32 %v1958, 7
  %v1960 = vsub.s32 %v1957, %v1959
  %v1961 = vrot.slane %v1951, %v1960
  %v1963 = vunpack.c.l.s4 1983009808
  %v1964 = vunpack.c.0.s8 %v1963
  %v1965 = vlaneseq
  %v1966 = vshrl.u32 %v1965, 7
  %v1967 = vsub.s32 %v1964, %v1966
  %v1968 = vrot.slane %v1952, %v1967
  %v1970 = vunpack.c.l.s4 1983009808
  %v1971 = vunpack.c.0.s8 %v1970
  %v1972 = vlaneseq
  %v1973 = vshrl.u32 %v1972, 7
  %v1974 = vsub.s32 %v1971, %v1973
  %v1975 = vrot.slane %v1953, %v1974
  %v1977 = vunpack.c.l.s4 1983009808
  %v1978 = vunpack.c.0.s8 %v1977
  %v1979 = vlaneseq
  %v1980 = vshrl.u32 %v1979, 7
  %v1981 = vsub.s32 %v1978, %v1980
  %v1982 = vrot.slane %v1954, %v1981
  %v1983 = vcombine.low %v1961, %v1975
  %v1984 = vcombine.high %v1961, %v1975
  %v1985 = vcombine.low %v1968, %v1982
  %v1986 = vcombine.high %v1968, %v1982
  %v1987 = vcombine.low %v827, %v841
  %v1988 = vcombine.high %v827, %v841
  %v1989 = vcombine.low %v855, %v869
  %v1990 = vcombine.high %v855, %v869
  %v1992 = vunpack.c.l.s4 1983009808
  %v1993 = vunpack.c.0.s8 %v1992
  %v1994 = vlaneseq
  %v1995 = vshrl.u32 %v1994, 7
  %v1996 = vsub.s32 %v1993, %v1995
  %v1997 = vrot.slane %v1987, %v1996
  %v1999 = vunpack.c.l.s4 1983009808
  %v2000 = vunpack.c.0.s8 %v1999
  %v2001 = vlaneseq
  %v2002 = vshrl.u32 %v2001, 7
  %v2003 = vsub.s32 %v2000, %v2002
  %v2004 = vrot.slane %v1988, %v2003
  %v2006 = vunpack.c.l.s4 1983009808
  %v2007 = vunpack.c.0.s8 %v2006
  %v2008 = vlaneseq
  %v2009 = vshrl.u32 %v2008, 7
  %v2010 = vsub.s32 %v2007, %v2009
  %v2011 = vrot.slane %v1989, %v2010
  %v2013 = vunpack.c.l.s4 1983009808
  %v2014 = vunpack.c.0.s8 %v2013
  %v2015 = vlaneseq
  %v2016 = vshrl.u32 %v2015, 7
  %v2017 = vsub.s32 %v2014, %v2016
  %v2018 = vrot.slane %v1990, %v2017
  %v2019 = vcombine.low %v1997, %v2011
  %v2020 = vcombine.high %v1997, %v2011
  %v2021 = vcombine.low %v2004, %v2018
  %v2022 = vcombine.high %v2004, %v2018
  %v2039 = vcombine.low %v949, %v964
  %v2040 = vcombine.high %v949, %v964
  %v2041 = vcombine.low %v979, %v994
  %v2042 = vcombine.high %v979, %v994
  %v2044 = vunpack.c.l.s4 1983009808
  %v2045 = vunpack.c.0.s8 %v2044
  %v2046 = vlaneseq
  %v2047 = vshrl.u32 %v2046, 7
  %v2048 = vsub.s32 %v2045, %v2047
  %v2049 = vrot.slane %v2039, %v2048
  %v2051 = vunpack.c.l.s4 1983009808
  %v2052 = vunpack.c.0.s8 %v2051
  %v2053 = vlaneseq
  %v2054 = vshrl.u32 %v2053, 7
  %v2055 = vsub.s32 %v2052, %v2054
  %v2056 = vrot.slane %v2040, %v2055
  %v2058 = vunpack.c.l.s4 1983009808
  %v2059 = vunpack.c.0.s8 %v2058
  %v2060 = vlaneseq
  %v2061 = vshrl.u32 %v2060, 7
  %v2062 = vsub.s32 %v2059, %v2061
  %v2063 = vrot.slane %v2041, %v2062
  %v2065 = vunpack.c.l.s4 1983009808
  %v2066 = vunpack.c.0.s8 %v2065
  %v2067 = vlaneseq
  %v2068 = vshrl.u32 %v2067, 7
  %v2069 = vsub.s32 %v2066, %v2068
  %v2070 = vrot.slane %v2042, %v2069
  %v2071 = vcombine.low %v2049, %v2063
  %v2072 = vcombine.high %v2049, %v2063
  %v2073 = vcombine.low %v2056, %v2070
  %v2074 = vcombine.high %v2056, %v2070
  %v2075 = vcombine.low %v1009, %v1024
  %v2076 = vcombine.high %v1009, %v1024
  %v2077 = vcombine.low %v1039, %v1054
  %v2078 = vcombine.high %v1039, %v1054
  %v2080 = vunpack.c.l.s4 1983009808
  %v2081 = vunpack.c.0.s8 %v2080
  %v2082 = vlaneseq
  %v2083 = vshrl.u32 %v2082, 7
  %v2084 = vsub.s32 %v2081, %v2083
  %v2085 = vrot.slane %v2075, %v2084
  %v2087 = vunpack.c.l.s4 1983009808
  %v2088 = vunpack.c.0.s8 %v2087
  %v2089 = vlaneseq
  %v2090 = vshrl.u32 %v2089, 7
  %v2091 = vsub.s32 %v2088, %v2090
  %v2092 = vrot.slane %v2076, %v2091
  %v2094 = vunpack.c.l.s4 1983009808
  %v2095 = vunpack.c.0.s8 %v2094
  %v2096 = vlaneseq
  %v2097 = vshrl.u32 %v2096, 7
  %v2098 = vsub.s32 %v2095, %v2097
  %v2099 = vrot.slane %v2077, %v2098
  %v2101 = vunpack.c.l.s4 1983009808
  %v2102 = vunpack.c.0.s8 %v2101
  %v2103 = vlaneseq
  %v2104 = vshrl.u32 %v2103, 7
  %v2105 = vsub.s32 %v2102, %v2104
  %v2106 = vrot.slane %v2078, %v2105
  %v2107 = vcombine.low %v2085, %v2099
  %v2108 = vcombine.high %v2085, %v2099
  %v2109 = vcombine.low %v2092, %v2106
  %v2110 = vcombine.high %v2092, %v2106
  %v2111 = vcombine.low %v1069, %v1084
  %v2112 = vcombine.high %v1069, %v1084
  %v2113 = vcombine.low %v1099, %v1114
  %v2114 = vcombine.high %v1099, %v1114
  %v2116 = vunpack.c.l.s4 1983009808
  %v2117 = vunpack.c.0.s8 %v2116
  %v2118 = vlaneseq
  %v2119 = vshrl.u32 %v2118, 7
  %v2120 = vsub.s32 %v2117, %v2119
  %v2121 = vrot.slane %v2111, %v2120
  %v2123 = vunpack.c.l.s4 1983009808
  %v2124 = vunpack.c.0.s8 %v2123
  %v2125 = vlaneseq
  %v2126 = vshrl.u32 %v2125, 7
  %v2127 = vsub.s32 %v2124, %v2126
  %v2128 = vrot.slane %v2112, %v2127
  %v2130 = vunpack.c.l.s4 1983009808
  %v2131 = vunpack.c.0.s8 %v2130
  %v2132 = vlaneseq
  %v2133 = vshrl.u32 %v2132, 7
  %v2134 = vsub.s32 %v2131, %v2133
  %v2135 = vrot.slane %v2113, %v2134
  %v2137 = vunpack.c.l.s4 1983009808
  %v2138 = vunpack.c.0.s8 %v2137
  %v2139 = vlaneseq
  %v2140 = vshrl.u32 %v2139, 7
  %v2141 = vsub.s32 %v2138, %v2140
  %v2142 = vrot.slane %v2114, %v2141
  %v2143 = vcombine.low %v2121, %v2135
  %v2144 = vcombine.high %v2121, %v2135
  %v2145 = vcombine.low %v2128, %v2142
  %v2146 = vcombine.high %v2128, %v2142
  %v2147 = vcombine.low %v1129, %v1144
  %v2148 = vcombine.high %v1129, %v1144
  %v2149 = vcombine.low %v1159, %v1174
  %v2150 = vcombine.high %v1159, %v1174
  %v2152 = vunpack.c.l.s4 1983009808
  %v2153 = vunpack.c.0.s8 %v2152
  %v2154 = vlaneseq
  %v2155 = vshrl.u32 %v2154, 7
  %v2156 = vsub.s32 %v2153, %v2155
  %v2157 = vrot.slane %v2147, %v2156
  %v2159 = vunpack.c.l.s4 1983009808
  %v2160 = vunpack.c.0.s8 %v2159
  %v2161 = vlaneseq
  %v2162 = vshrl.u32 %v2161, 7
  %v2163 = vsub.s32 %v2160, %v2162
  %v2164 = vrot.slane %v2148, %v2163
  %v2166 = vunpack.c.l.s4 1983009808
  %v2167 = vunpack.c.0.s8 %v2166
  %v2168 = vlaneseq
  %v2169 = vshrl.u32 %v2168, 7
  %v2170 = vsub.s32 %v2167, %v2169
  %v2171 = vrot.slane %v2149, %v2170
  %v2173 = vunpack.c.l.s4 1983009808
  %v2174 = vunpack.c.0.s8 %v2173
  %v2175 = vlaneseq
  %v2176 = vshrl.u32 %v2175, 7
  %v2177 = vsub.s32 %v2174, %v2176
  %v2178 = vrot.slane %v2150, %v2177
  %v2179 = vcombine.low %v2157, %v2171
  %v2180 = vcombine.high %v2157, %v2171
  %v2181 = vcombine.low %v2164, %v2178
  %v2182 = vcombine.high %v2164, %v2178
  %v2199 = vcombine.low %v1508, %v1522
  %v2200 = vcombine.high %v1508, %v1522
  %v2201 = vcombine.low %v1536, %v1550
  %v2202 = vcombine.high %v1536, %v1550
  %v2204 = vunpack.c.l.s4 1983009808
  %v2205 = vunpack.c.0.s8 %v2204
  %v2206 = vlaneseq
  %v2207 = vshrl.u32 %v2206, 7
  %v2208 = vsub.s32 %v2205, %v2207
  %v2209 = vrot.slane %v2199, %v2208
  %v2211 = vunpack.c.l.s4 1983009808
  %v2212 = vunpack.c.0.s8 %v2211
  %v2213 = vlaneseq
  %v2214 = vshrl.u32 %v2213, 7
  %v2215 = vsub.s32 %v2212, %v2214
  %v2216 = vrot.slane %v2200, %v2215
  %v2218 = vunpack.c.l.s4 1983009808
  %v2219 = vunpack.c.0.s8 %v2218
  %v2220 = vlaneseq
  %v2221 = vshrl.u32 %v2220, 7
  %v2222 = vsub.s32 %v2219, %v2221
  %v2223 = vrot.slane %v2201, %v2222
  %v2225 = vunpack.c.l.s4 1983009808
  %v2226 = vunpack.c.0.s8 %v2225
  %v2227 = vlaneseq
  %v2228 = vshrl.u32 %v2227, 7
  %v2229 = vsub.s32 %v2226, %v2228
  %v2230 = vrot.slane %v2202, %v2229
  %v2231 = vcombine.low %v2209, %v2223
  %v2232 = vcombine.high %v2209, %v2223
  %v2233 = vcombine.low %v2216, %v2230
  %v2234 = vcombine.high %v2216, %v2230
  %v2235 = vcombine.low %v1564, %v1578
  %v2236 = vcombine.high %v1564, %v1578
  %v2237 = vcombine.low %v1592, %v1606
  %v2238 = vcombine.high %v1592, %v1606
  %v2240 = vunpack.c.l.s4 1983009808
  %v2241 = vunpack.c.0.s8 %v2240
  %v2242 = vlaneseq
  %v2243 = vshrl.u32 %v2242, 7
  %v2244 = vsub.s32 %v2241, %v2243
  %v2245 = vrot.slane %v2235, %v2244
  %v2247 = vunpack.c.l.s4 1983009808
  %v2248 = vunpack.c.0.s8 %v2247
  %v2249 = vlaneseq
  %v2250 = vshrl.u32 %v2249, 7
  %v2251 = vsub.s32 %v2248, %v2250
  %v2252 = vrot.slane %v2236, %v2251
  %v2254 = vunpack.c.l.s4 1983009808
  %v2255 = vunpack.c.0.s8 %v2254
  %v2256 = vlaneseq
  %v2257 = vshrl.u32 %v2256, 7
  %v2258 = vsub.s32 %v2255, %v2257
  %v2259 = vrot.slane %v2237, %v2258
  %v2261 = vunpack.c.l.s4 1983009808
  %v2262 = vunpack.c.0.s8 %v2261
  %v2263 = vlaneseq
  %v2264 = vshrl.u32 %v2263, 7
  %v2265 = vsub.s32 %v2262, %v2264
  %v2266 = vrot.slane %v2238, %v2265
  %v2267 = vcombine.low %v2245, %v2259
  %v2268 = vcombine.high %v2245, %v2259
  %v2269 = vcombine.low %v2252, %v2266
  %v2270 = vcombine.high %v2252, %v2266
  %v2271 = vcombine.low %v1620, %v1634
  %v2272 = vcombine.high %v1620, %v1634
  %v2273 = vcombine.low %v1648, %v1662
  %v2274 = vcombine.high %v1648, %v1662
  %v2276 = vunpack.c.l.s4 1983009808
  %v2277 = vunpack.c.0.s8 %v2276
  %v2278 = vlaneseq
  %v2279 = vshrl.u32 %v2278, 7
  %v2280 = vsub.s32 %v2277, %v2279
  %v2281 = vrot.slane %v2271, %v2280
  %v2283 = vunpack.c.l.s4 1983009808
  %v2284 = vunpack.c.0.s8 %v2283
  %v2285 = vlaneseq
  %v2286 = vshrl.u32 %v2285, 7
  %v2287 = vsub.s32 %v2284, %v2286
  %v2288 = vrot.slane %v2272, %v2287
  %v2290 = vunpack.c.l.s4 1983009808
  %v2291 = vunpack.c.0.s8 %v2290
  %v2292 = vlaneseq
  %v2293 = vshrl.u32 %v2292, 7
  %v2294 = vsub.s32 %v2291, %v2293
  %v2295 = vrot.slane %v2273, %v2294
  %v2297 = vunpack.c.l.s4 1983009808
  %v2298 = vunpack.c.0.s8 %v2297
  %v2299 = vlaneseq
  %v2300 = vshrl.u32 %v2299, 7
  %v2301 = vsub.s32 %v2298, %v2300
  %v2302 = vrot.slane %v2274, %v2301
  %v2303 = vcombine.low %v2281, %v2295
  %v2304 = vcombine.high %v2281, %v2295
  %v2305 = vcombine.low %v2288, %v2302
  %v2306 = vcombine.high %v2288, %v2302
  %v2307 = vcombine.low %v1676, %v1690
  %v2308 = vcombine.high %v1676, %v1690
  %v2309 = vcombine.low %v1704, %v1718
  %v2310 = vcombine.high %v1704, %v1718
  %v2312 = vunpack.c.l.s4 1983009808
  %v2313 = vunpack.c.0.s8 %v2312
  %v2314 = vlaneseq
  %v2315 = vshrl.u32 %v2314, 7
  %v2316 = vsub.s32 %v2313, %v2315
  %v2317 = vrot.slane %v2307, %v2316
  %v2319 = vunpack.c.l.s4 1983009808
  %v2320 = vunpack.c.0.s8 %v2319
  %v2321 = vlaneseq
  %v2322 = vshrl.u32 %v2321, 7
  %v2323 = vsub.s32 %v2320, %v2322
  %v2324 = vrot.slane %v2308, %v2323
  %v2326 = vunpack.c.l.s4 1983009808
  %v2327 = vunpack.c.0.s8 %v2326
  %v2328 = vlaneseq
  %v2329 = vshrl.u32 %v2328, 7
  %v2330 = vsub.s32 %v2327, %v2329
  %v2331 = vrot.slane %v2309, %v2330
  %v2333 = vunpack.c.l.s4 1983009808
  %v2334 = vunpack.c.0.s8 %v2333
  %v2335 = vlaneseq
  %v2336 = vshrl.u32 %v2335, 7
  %v2337 = vsub.s32 %v2334, %v2336
  %v2338 = vrot.slane %v2310, %v2337
  %v2339 = vcombine.low %v2317, %v2331
  %v2340 = vcombine.high %v2317, %v2331
  %v2341 = vcombine.low %v2324, %v2338
  %v2342 = vcombine.high %v2324, %v2338
  %v2359 = vld [vmem:[%s1] sm:$0xf]
  %v2360 = vld [vmem:[%s1 + $0x4] sm:$0xf]
  %v2361 = vld [vmem:[%s1 + $0x8] sm:$0xf]
  %v2362 = vld [vmem:[%s1 + $0xc] sm:$0xf]
  %v2363 = vld [vmem:[%s1 + $0x10] sm:$0xf]
  %v2364 = vld [vmem:[%s1 + $0x14] sm:$0xf]
  %v2365 = vld [vmem:[%s1 + $0x18] sm:$0xf]
  %v2366 = vld [vmem:[%s1 + $0x1c] sm:$0xf]
  %v2367 = vld [vmem:[%s1 + $0x20] sm:$0xf]
  %v2368 = vld [vmem:[%s1 + $0x24] sm:$0xf]
  %v2369 = vld [vmem:[%s1 + $0x28] sm:$0xf]
  %v2370 = vld [vmem:[%s1 + $0x2c] sm:$0xf]
  %v2371 = vld [vmem:[%s1 + $0x30] sm:$0xf]
  %v2372 = vld [vmem:[%s1 + $0x34] sm:$0xf]
  %v2373 = vld [vmem:[%s1 + $0x38] sm:$0xf]
  %v2374 = vld [vmem:[%s1 + $0x3c] sm:$0xf]
  %v2375 = vld [vmem:[%s1 + $0x40] sm:$0xf]
  %v2376 = vld [vmem:[%s1 + $0x44] sm:$0xf]
  %v2377 = vld [vmem:[%s1 + $0x48] sm:$0xf]
  %v2378 = vld [vmem:[%s1 + $0x4c] sm:$0xf]
  %v2379 = vld [vmem:[%s1 + $0x50] sm:$0xf]
  %v2380 = vld [vmem:[%s1 + $0x54] sm:$0xf]
  %v2381 = vld [vmem:[%s1 + $0x58] sm:$0xf]
  %v2382 = vld [vmem:[%s1 + $0x5c] sm:$0xf]
  %v2383 = vld [vmem:[%s1 + $0x60] sm:$0xf]
  %v2384 = vld [vmem:[%s1 + $0x64] sm:$0xf]
  %v2385 = vld [vmem:[%s1 + $0x68] sm:$0xf]
  %v2386 = vld [vmem:[%s1 + $0x6c] sm:$0xf]
  %v2387 = vld [vmem:[%s1 + $0x70] sm:$0xf]
  %v2388 = vld [vmem:[%s1 + $0x74] sm:$0xf]
  %v2389 = vld [vmem:[%s1 + $0x78] sm:$0xf]
  %v2390 = vld [vmem:[%s1 + $0x7c] sm:$0xf]
  %v2391 = vld [vmem:[%s1 + $0x80] sm:$0xf]
  %v2392 = vld [vmem:[%s1 + $0x84] sm:$0xf]
  %v2393 = vld [vmem:[%s1 + $0x88] sm:$0xf]
  %v2394 = vld [vmem:[%s1 + $0x8c] sm:$0xf]
  %v2395 = vld [vmem:[%s1 + $0x90] sm:$0xf]
  %v2396 = vld [vmem:[%s1 + $0x94] sm:$0xf]
  %v2397 = vld [vmem:[%s1 + $0x98] sm:$0xf]
  %v2398 = vld [vmem:[%s1 + $0x9c] sm:$0xf]
  %v2399 = vld [vmem:[%s1 + $0xa0] sm:$0xf]
  %v2400 = vld [vmem:[%s1 + $0xa4] sm:$0xf]
  %v2401 = vld [vmem:[%s1 + $0xa8] sm:$0xf]
  %v2402 = vld [vmem:[%s1 + $0xac] sm:$0xf]
  %v2403 = vld [vmem:[%s1 + $0xb0] sm:$0xf]
  %v2404 = vld [vmem:[%s1 + $0xb4] sm:$0xf]
  %v2405 = vld [vmem:[%s1 + $0xb8] sm:$0xf]
  %v2406 = vld [vmem:[%s1 + $0xbc] sm:$0xf]
  %v2407 = vld [vmem:[%s1 + $0xc0] sm:$0xf]
  %v2408 = vld [vmem:[%s1 + $0xc4] sm:$0xf]
  %v2409 = vld [vmem:[%s1 + $0xc8] sm:$0xf]
  %v2410 = vld [vmem:[%s1 + $0xcc] sm:$0xf]
  %v2411 = vld [vmem:[%s1 + $0xd0] sm:$0xf]
  %v2412 = vld [vmem:[%s1 + $0xd4] sm:$0xf]
  %v2413 = vld [vmem:[%s1 + $0xd8] sm:$0xf]
  %v2414 = vld [vmem:[%s1 + $0xdc] sm:$0xf]
  %v2415 = vld [vmem:[%s1 + $0xe0] sm:$0xf]
  %v2416 = vld [vmem:[%s1 + $0xe4] sm:$0xf]
  %v2417 = vld [vmem:[%s1 + $0xe8] sm:$0xf]
  %v2418 = vld [vmem:[%s1 + $0xec] sm:$0xf]
  %v2419 = vld [vmem:[%s1 + $0xf0] sm:$0xf]
  %v2420 = vld [vmem:[%s1 + $0xf4] sm:$0xf]
  %v2421 = vld [vmem:[%s1 + $0xf8] sm:$0xf]
  %v2422 = vld [vmem:[%s1 + $0xfc] sm:$0xf]
  %v2423 = vld [vmem:[%s1 + $0x100] sm:$0xf]
  %v2424 = vld [vmem:[%s1 + $0x104] sm:$0xf]
  %v2425 = vld [vmem:[%s1 + $0x108] sm:$0xf]
  %v2426 = vld [vmem:[%s1 + $0x10c] sm:$0xf]
  %v2427 = vld [vmem:[%s1 + $0x110] sm:$0xf]
  %v2428 = vld [vmem:[%s1 + $0x114] sm:$0xf]
  %v2429 = vld [vmem:[%s1 + $0x118] sm:$0xf]
  %v2430 = vld [vmem:[%s1 + $0x11c] sm:$0xf]
  %v2431 = vld [vmem:[%s1 + $0x120] sm:$0xf]
  %v2432 = vld [vmem:[%s1 + $0x124] sm:$0xf]
  %v2433 = vld [vmem:[%s1 + $0x128] sm:$0xf]
  %v2434 = vld [vmem:[%s1 + $0x12c] sm:$0xf]
  %v2435 = vld [vmem:[%s1 + $0x130] sm:$0xf]
  %v2436 = vld [vmem:[%s1 + $0x134] sm:$0xf]
  %v2437 = vld [vmem:[%s1 + $0x138] sm:$0xf]
  %v2438 = vld [vmem:[%s1 + $0x13c] sm:$0xf]
  %v2439 = vld [vmem:[%s1 + $0x140] sm:$0xf]
  %v2440 = vld [vmem:[%s1 + $0x144] sm:$0xf]
  %v2441 = vld [vmem:[%s1 + $0x148] sm:$0xf]
  %v2442 = vld [vmem:[%s1 + $0x14c] sm:$0xf]
  %v2443 = vld [vmem:[%s1 + $0x150] sm:$0xf]
  %v2444 = vld [vmem:[%s1 + $0x154] sm:$0xf]
  %v2445 = vld [vmem:[%s1 + $0x158] sm:$0xf]
  %v2446 = vld [vmem:[%s1 + $0x15c] sm:$0xf]
  %v2447 = vld [vmem:[%s1 + $0x160] sm:$0xf]
  %v2448 = vld [vmem:[%s1 + $0x164] sm:$0xf]
  %v2449 = vld [vmem:[%s1 + $0x168] sm:$0xf]
  %v2450 = vld [vmem:[%s1 + $0x16c] sm:$0xf]
  %v2451 = vld [vmem:[%s1 + $0x170] sm:$0xf]
  %v2452 = vld [vmem:[%s1 + $0x174] sm:$0xf]
  %v2453 = vld [vmem:[%s1 + $0x178] sm:$0xf]
  %v2454 = vld [vmem:[%s1 + $0x17c] sm:$0xf]
  %v2455 = vld [vmem:[%s1 + $0x180] sm:$0xf]
  %v2456 = vld [vmem:[%s1 + $0x184] sm:$0xf]
  %v2457 = vld [vmem:[%s1 + $0x188] sm:$0xf]
  %v2458 = vld [vmem:[%s1 + $0x18c] sm:$0xf]
  %v2459 = vld [vmem:[%s1 + $0x190] sm:$0xf]
  %v2460 = vld [vmem:[%s1 + $0x194] sm:$0xf]
  %v2461 = vld [vmem:[%s1 + $0x198] sm:$0xf]
  %v2462 = vld [vmem:[%s1 + $0x19c] sm:$0xf]
  %v2463 = vld [vmem:[%s1 + $0x1a0] sm:$0xf]
  %v2464 = vld [vmem:[%s1 + $0x1a4] sm:$0xf]
  %v2465 = vld [vmem:[%s1 + $0x1a8] sm:$0xf]
  %v2466 = vld [vmem:[%s1 + $0x1ac] sm:$0xf]
  %v2467 = vld [vmem:[%s1 + $0x1b0] sm:$0xf]
  %v2468 = vld [vmem:[%s1 + $0x1b4] sm:$0xf]
  %v2469 = vld [vmem:[%s1 + $0x1b8] sm:$0xf]
  %v2470 = vld [vmem:[%s1 + $0x1bc] sm:$0xf]
  %v2471 = vld [vmem:[%s1 + $0x1c0] sm:$0xf]
  %v2472 = vld [vmem:[%s1 + $0x1c4] sm:$0xf]
  %v2473 = vld [vmem:[%s1 + $0x1c8] sm:$0xf]
  %v2474 = vld [vmem:[%s1 + $0x1cc] sm:$0xf]
  %v2475 = vld [vmem:[%s1 + $0x1d0] sm:$0xf]
  %v2476 = vld [vmem:[%s1 + $0x1d4] sm:$0xf]
  %v2477 = vld [vmem:[%s1 + $0x1d8] sm:$0xf]
  %v2478 = vld [vmem:[%s1 + $0x1dc] sm:$0xf]
  %v2479 = vld [vmem:[%s1 + $0x1e0] sm:$0xf]
  %v2480 = vld [vmem:[%s1 + $0x1e4] sm:$0xf]
  %v2481 = vld [vmem:[%s1 + $0x1e8] sm:$0xf]
  %v2482 = vld [vmem:[%s1 + $0x1ec] sm:$0xf]
  %v2483 = vld [vmem:[%s1 + $0x1f0] sm:$0xf]
  %v2484 = vld [vmem:[%s1 + $0x1f4] sm:$0xf]
  %v2485 = vld [vmem:[%s1 + $0x1f8] sm:$0xf]
  %v2486 = vld [vmem:[%s1 + $0x1fc] sm:$0xf]
  %v2487 = vld [vmem:[%s1 + $0x200] sm:$0xf]
  %v2488 = vld [vmem:[%s1 + $0x204] sm:$0xf]
  %v2489 = vld [vmem:[%s1 + $0x208] sm:$0xf]
  %v2490 = vld [vmem:[%s1 + $0x20c] sm:$0xf]
  %v2491 = vld [vmem:[%s1 + $0x210] sm:$0xf]
  %v2492 = vld [vmem:[%s1 + $0x214] sm:$0xf]
  %v2493 = vld [vmem:[%s1 + $0x218] sm:$0xf]
  %v2494 = vld [vmem:[%s1 + $0x21c] sm:$0xf]
  %v2495 = vld [vmem:[%s1 + $0x220] sm:$0xf]
  %v2496 = vld [vmem:[%s1 + $0x224] sm:$0xf]
  %v2497 = vld [vmem:[%s1 + $0x228] sm:$0xf]
  %v2498 = vld [vmem:[%s1 + $0x22c] sm:$0xf]
  %v2499 = vld [vmem:[%s1 + $0x230] sm:$0xf]
  %v2500 = vld [vmem:[%s1 + $0x234] sm:$0xf]
  %v2501 = vld [vmem:[%s1 + $0x238] sm:$0xf]
  %v2502 = vld [vmem:[%s1 + $0x23c] sm:$0xf]
  %v2503 = vld [vmem:[%s1 + $0x240] sm:$0xf]
  %v2504 = vld [vmem:[%s1 + $0x244] sm:$0xf]
  %v2505 = vld [vmem:[%s1 + $0x248] sm:$0xf]
  %v2506 = vld [vmem:[%s1 + $0x24c] sm:$0xf]
  %v2507 = vld [vmem:[%s1 + $0x250] sm:$0xf]
  %v2508 = vld [vmem:[%s1 + $0x254] sm:$0xf]
  %v2509 = vld [vmem:[%s1 + $0x258] sm:$0xf]
  %v2510 = vld [vmem:[%s1 + $0x25c] sm:$0xf]
  %v2511 = vld [vmem:[%s1 + $0x260] sm:$0xf]
  %v2512 = vld [vmem:[%s1 + $0x264] sm:$0xf]
  %v2513 = vld [vmem:[%s1 + $0x268] sm:$0xf]
  %v2514 = vld [vmem:[%s1 + $0x26c] sm:$0xf]
  %v2515 = vld [vmem:[%s1 + $0x270] sm:$0xf]
  %v2516 = vld [vmem:[%s1 + $0x274] sm:$0xf]
  %v2517 = vld [vmem:[%s1 + $0x278] sm:$0xf]
  %v2518 = vld [vmem:[%s1 + $0x27c] sm:$0xf]
  %v2519 = vld [vmem:[%s1 + $0x280] sm:$0xf]
  %v2520 = vld [vmem:[%s1 + $0x284] sm:$0xf]
  %v2521 = vld [vmem:[%s1 + $0x288] sm:$0xf]
  %v2522 = vld [vmem:[%s1 + $0x28c] sm:$0xf]
  %v2523 = vld [vmem:[%s1 + $0x290] sm:$0xf]
  %v2524 = vld [vmem:[%s1 + $0x294] sm:$0xf]
  %v2525 = vld [vmem:[%s1 + $0x298] sm:$0xf]
  %v2526 = vld [vmem:[%s1 + $0x29c] sm:$0xf]
  %v2527 = vld [vmem:[%s1 + $0x2a0] sm:$0xf]
  %v2528 = vld [vmem:[%s1 + $0x2a4] sm:$0xf]
  %v2529 = vld [vmem:[%s1 + $0x2a8] sm:$0xf]
  %v2530 = vld [vmem:[%s1 + $0x2ac] sm:$0xf]
  %v2531 = vld [vmem:[%s1 + $0x2b0] sm:$0xf]
  %v2532 = vld [vmem:[%s1 + $0x2b4] sm:$0xf]
  %v2533 = vld [vmem:[%s1 + $0x2b8] sm:$0xf]
  %v2534 = vld [vmem:[%s1 + $0x2bc] sm:$0xf]
  %v2535 = vld [vmem:[%s1 + $0x2c0] sm:$0xf]
  %v2536 = vld [vmem:[%s1 + $0x2c4] sm:$0xf]
  %v2537 = vld [vmem:[%s1 + $0x2c8] sm:$0xf]
  %v2538 = vld [vmem:[%s1 + $0x2cc] sm:$0xf]
  %v2539 = vld [vmem:[%s1 + $0x2d0] sm:$0xf]
  %v2540 = vld [vmem:[%s1 + $0x2d4] sm:$0xf]
  %v2541 = vld [vmem:[%s1 + $0x2d8] sm:$0xf]
  %v2542 = vld [vmem:[%s1 + $0x2dc] sm:$0xf]
  %v2543 = vld [vmem:[%s1 + $0x2e0] sm:$0xf]
  %v2544 = vld [vmem:[%s1 + $0x2e4] sm:$0xf]
  %v2545 = vld [vmem:[%s1 + $0x2e8] sm:$0xf]
  %v2546 = vld [vmem:[%s1 + $0x2ec] sm:$0xf]
  %v2547 = vld [vmem:[%s1 + $0x2f0] sm:$0xf]
  %v2548 = vld [vmem:[%s1 + $0x2f4] sm:$0xf]
  %v2549 = vld [vmem:[%s1 + $0x2f8] sm:$0xf]
  %v2550 = vld [vmem:[%s1 + $0x2fc] sm:$0xf]
  %v2551 = vld [vmem:[%s1 + $0x300] sm:$0xf]
  %v2552 = vld [vmem:[%s1 + $0x304] sm:$0xf]
  %v2553 = vld [vmem:[%s1 + $0x308] sm:$0xf]
  %v2554 = vld [vmem:[%s1 + $0x30c] sm:$0xf]
  %v2555 = vld [vmem:[%s1 + $0x310] sm:$0xf]
  %v2556 = vld [vmem:[%s1 + $0x314] sm:$0xf]
  %v2557 = vld [vmem:[%s1 + $0x318] sm:$0xf]
  %v2558 = vld [vmem:[%s1 + $0x31c] sm:$0xf]
  %v2559 = vld [vmem:[%s1 + $0x320] sm:$0xf]
  %v2560 = vld [vmem:[%s1 + $0x324] sm:$0xf]
  %v2561 = vld [vmem:[%s1 + $0x328] sm:$0xf]
  %v2562 = vld [vmem:[%s1 + $0x32c] sm:$0xf]
  %v2563 = vld [vmem:[%s1 + $0x330] sm:$0xf]
  %v2564 = vld [vmem:[%s1 + $0x334] sm:$0xf]
  %v2565 = vld [vmem:[%s1 + $0x338] sm:$0xf]
  %v2566 = vld [vmem:[%s1 + $0x33c] sm:$0xf]
  %v2567 = vld [vmem:[%s1 + $0x340] sm:$0xf]
  %v2568 = vld [vmem:[%s1 + $0x344] sm:$0xf]
  %v2569 = vld [vmem:[%s1 + $0x348] sm:$0xf]
  %v2570 = vld [vmem:[%s1 + $0x34c] sm:$0xf]
  %v2571 = vld [vmem:[%s1 + $0x350] sm:$0xf]
  %v2572 = vld [vmem:[%s1 + $0x354] sm:$0xf]
  %v2573 = vld [vmem:[%s1 + $0x358] sm:$0xf]
  %v2574 = vld [vmem:[%s1 + $0x35c] sm:$0xf]
  %v2575 = vld [vmem:[%s1 + $0x360] sm:$0xf]
  %v2576 = vld [vmem:[%s1 + $0x364] sm:$0xf]
  %v2577 = vld [vmem:[%s1 + $0x368] sm:$0xf]
  %v2578 = vld [vmem:[%s1 + $0x36c] sm:$0xf]
  %v2579 = vld [vmem:[%s1 + $0x370] sm:$0xf]
  %v2580 = vld [vmem:[%s1 + $0x374] sm:$0xf]
  %v2581 = vld [vmem:[%s1 + $0x378] sm:$0xf]
  %v2582 = vld [vmem:[%s1 + $0x37c] sm:$0xf]
  %v2583 = vld [vmem:[%s1 + $0x380] sm:$0xf]
  %v2584 = vld [vmem:[%s1 + $0x384] sm:$0xf]
  %v2585 = vld [vmem:[%s1 + $0x388] sm:$0xf]
  %v2586 = vld [vmem:[%s1 + $0x38c] sm:$0xf]
  %v2587 = vld [vmem:[%s1 + $0x390] sm:$0xf]
  %v2588 = vld [vmem:[%s1 + $0x394] sm:$0xf]
  %v2589 = vld [vmem:[%s1 + $0x398] sm:$0xf]
  %v2590 = vld [vmem:[%s1 + $0x39c] sm:$0xf]
  %v2591 = vld [vmem:[%s1 + $0x3a0] sm:$0xf]
  %v2592 = vld [vmem:[%s1 + $0x3a4] sm:$0xf]
  %v2593 = vld [vmem:[%s1 + $0x3a8] sm:$0xf]
  %v2594 = vld [vmem:[%s1 + $0x3ac] sm:$0xf]
  %v2595 = vld [vmem:[%s1 + $0x3b0] sm:$0xf]
  %v2596 = vld [vmem:[%s1 + $0x3b4] sm:$0xf]
  %v2597 = vld [vmem:[%s1 + $0x3b8] sm:$0xf]
  %v2598 = vld [vmem:[%s1 + $0x3bc] sm:$0xf]
  %v2599 = vld [vmem:[%s1 + $0x3c0] sm:$0xf]
  %v2600 = vld [vmem:[%s1 + $0x3c4] sm:$0xf]
  %v2601 = vld [vmem:[%s1 + $0x3c8] sm:$0xf]
  %v2602 = vld [vmem:[%s1 + $0x3cc] sm:$0xf]
  %v2603 = vld [vmem:[%s1 + $0x3d0] sm:$0xf]
  %v2604 = vld [vmem:[%s1 + $0x3d4] sm:$0xf]
  %v2605 = vld [vmem:[%s1 + $0x3d8] sm:$0xf]
  %v2606 = vld [vmem:[%s1 + $0x3dc] sm:$0xf]
  %v2607 = vld [vmem:[%s1 + $0x3e0] sm:$0xf]
  %v2608 = vld [vmem:[%s1 + $0x3e4] sm:$0xf]
  %v2609 = vld [vmem:[%s1 + $0x3e8] sm:$0xf]
  %v2610 = vld [vmem:[%s1 + $0x3ec] sm:$0xf]
  %v2611 = vld [vmem:[%s1 + $0x3f0] sm:$0xf]
  %v2612 = vld [vmem:[%s1 + $0x3f4] sm:$0xf]
  %v2613 = vld [vmem:[%s1 + $0x3f8] sm:$0xf]
  %v2614 = vld [vmem:[%s1 + $0x3fc] sm:$0xf]
  %v2615 = vld [vmem:[%s2] sm:$0x1]
  %v2617 = vlaneseq
  %v2618 = vshrl.u32 %v2617, 7
  %v2619 = vsub.s32 0, %v2618
  %v2620 = vrot.slane %v2615, %v2619
  %v2878 = vunpack.c.l.b16 %v2359
  %v2879 = vunpack.c.l.b16 %v2360
  %v2880 = vunpack.c.l.b16 %v2361
  %v2881 = vunpack.c.l.b16 %v2362
  %v2882 = vunpack.c.l.b16 %v2363
  %v2883 = vunpack.c.l.b16 %v2364
  %v2884 = vunpack.c.l.b16 %v2365
  %v2885 = vunpack.c.l.b16 %v2366
  %v2886 = vunpack.c.l.b16 %v2367
  %v2887 = vunpack.c.l.b16 %v2368
  %v2888 = vunpack.c.l.b16 %v2369
  %v2889 = vunpack.c.l.b16 %v2370
  %v2890 = vunpack.c.l.b16 %v2371
  %v2891 = vunpack.c.l.b16 %v2372
  %v2892 = vunpack.c.l.b16 %v2373
  %v2893 = vunpack.c.l.b16 %v2374
  %v2894 = vunpack.c.l.b16 %v2375
  %v2895 = vunpack.c.l.b16 %v2376
  %v2896 = vunpack.c.l.b16 %v2377
  %v2897 = vunpack.c.l.b16 %v2378
  %v2898 = vunpack.c.l.b16 %v2379
  %v2899 = vunpack.c.l.b16 %v2380
  %v2900 = vunpack.c.l.b16 %v2381
  %v2901 = vunpack.c.l.b16 %v2382
  %v2902 = vunpack.c.l.b16 %v2383
  %v2903 = vunpack.c.l.b16 %v2384
  %v2904 = vunpack.c.l.b16 %v2385
  %v2905 = vunpack.c.l.b16 %v2386
  %v2906 = vunpack.c.l.b16 %v2387
  %v2907 = vunpack.c.l.b16 %v2388
  %v2908 = vunpack.c.l.b16 %v2389
  %v2909 = vunpack.c.l.b16 %v2390
  %v2910 = vunpack.c.l.b16 %v2391
  %v2911 = vunpack.c.l.b16 %v2392
  %v2912 = vunpack.c.l.b16 %v2393
  %v2913 = vunpack.c.l.b16 %v2394
  %v2914 = vunpack.c.l.b16 %v2395
  %v2915 = vunpack.c.l.b16 %v2396
  %v2916 = vunpack.c.l.b16 %v2397
  %v2917 = vunpack.c.l.b16 %v2398
  %v2918 = vunpack.c.l.b16 %v2399
  %v2919 = vunpack.c.l.b16 %v2400
  %v2920 = vunpack.c.l.b16 %v2401
  %v2921 = vunpack.c.l.b16 %v2402
  %v2922 = vunpack.c.l.b16 %v2403
  %v2923 = vunpack.c.l.b16 %v2404
  %v2924 = vunpack.c.l.b16 %v2405
  %v2925 = vunpack.c.l.b16 %v2406
  %v2926 = vunpack.c.l.b16 %v2407
  %v2927 = vunpack.c.l.b16 %v2408
  %v2928 = vunpack.c.l.b16 %v2409
  %v2929 = vunpack.c.l.b16 %v2410
  %v2930 = vunpack.c.l.b16 %v2411
  %v2931 = vunpack.c.l.b16 %v2412
  %v2932 = vunpack.c.l.b16 %v2413
  %v2933 = vunpack.c.l.b16 %v2414
  %v2934 = vunpack.c.l.b16 %v2415
  %v2935 = vunpack.c.l.b16 %v2416
  %v2936 = vunpack.c.l.b16 %v2417
  %v2937 = vunpack.c.l.b16 %v2418
  %v2938 = vunpack.c.l.b16 %v2419
  %v2939 = vunpack.c.l.b16 %v2420
  %v2940 = vunpack.c.l.b16 %v2421
  %v2941 = vunpack.c.l.b16 %v2422
  %v2942 = vunpack.c.l.b16 %v2423
  %v2943 = vunpack.c.l.b16 %v2424
  %v2944 = vunpack.c.l.b16 %v2425
  %v2945 = vunpack.c.l.b16 %v2426
  %v2946 = vunpack.c.l.b16 %v2427
  %v2947 = vunpack.c.l.b16 %v2428
  %v2948 = vunpack.c.l.b16 %v2429
  %v2949 = vunpack.c.l.b16 %v2430
  %v2950 = vunpack.c.l.b16 %v2431
  %v2951 = vunpack.c.l.b16 %v2432
  %v2952 = vunpack.c.l.b16 %v2433
  %v2953 = vunpack.c.l.b16 %v2434
  %v2954 = vunpack.c.l.b16 %v2435
  %v2955 = vunpack.c.l.b16 %v2436
  %v2956 = vunpack.c.l.b16 %v2437
  %v2957 = vunpack.c.l.b16 %v2438
  %v2958 = vunpack.c.l.b16 %v2439
  %v2959 = vunpack.c.l.b16 %v2440
  %v2960 = vunpack.c.l.b16 %v2441
  %v2961 = vunpack.c.l.b16 %v2442
  %v2962 = vunpack.c.l.b16 %v2443
  %v2963 = vunpack.c.l.b16 %v2444
  %v2964 = vunpack.c.l.b16 %v2445
  %v2965 = vunpack.c.l.b16 %v2446
  %v2966 = vunpack.c.l.b16 %v2447
  %v2967 = vunpack.c.l.b16 %v2448
  %v2968 = vunpack.c.l.b16 %v2449
  %v2969 = vunpack.c.l.b16 %v2450
  %v2970 = vunpack.c.l.b16 %v2451
  %v2971 = vunpack.c.l.b16 %v2452
  %v2972 = vunpack.c.l.b16 %v2453
  %v2973 = vunpack.c.l.b16 %v2454
  %v2974 = vunpack.c.l.b16 %v2455
  %v2975 = vunpack.c.l.b16 %v2456
  %v2976 = vunpack.c.l.b16 %v2457
  %v2977 = vunpack.c.l.b16 %v2458
  %v2978 = vunpack.c.l.b16 %v2459
  %v2979 = vunpack.c.l.b16 %v2460
  %v2980 = vunpack.c.l.b16 %v2461
  %v2981 = vunpack.c.l.b16 %v2462
  %v2982 = vunpack.c.l.b16 %v2463
  %v2983 = vunpack.c.l.b16 %v2464
  %v2984 = vunpack.c.l.b16 %v2465
  %v2985 = vunpack.c.l.b16 %v2466
  %v2986 = vunpack.c.l.b16 %v2467
  %v2987 = vunpack.c.l.b16 %v2468
  %v2988 = vunpack.c.l.b16 %v2469
  %v2989 = vunpack.c.l.b16 %v2470
  %v2990 = vunpack.c.l.b16 %v2471
  %v2991 = vunpack.c.l.b16 %v2472
  %v2992 = vunpack.c.l.b16 %v2473
  %v2993 = vunpack.c.l.b16 %v2474
  %v2994 = vunpack.c.l.b16 %v2475
  %v2995 = vunpack.c.l.b16 %v2476
  %v2996 = vunpack.c.l.b16 %v2477
  %v2997 = vunpack.c.l.b16 %v2478
  %v2998 = vunpack.c.l.b16 %v2479
  %v2999 = vunpack.c.l.b16 %v2480
  %v3000 = vunpack.c.l.b16 %v2481
  %v3001 = vunpack.c.l.b16 %v2482
  %v3002 = vunpack.c.l.b16 %v2483
  %v3003 = vunpack.c.l.b16 %v2484
  %v3004 = vunpack.c.l.b16 %v2485
  %v3005 = vunpack.c.l.b16 %v2486
  %v3006 = vunpack.c.l.b16 %v2487
  %v3007 = vunpack.c.l.b16 %v2488
  %v3008 = vunpack.c.l.b16 %v2489
  %v3009 = vunpack.c.l.b16 %v2490
  %v3010 = vunpack.c.l.b16 %v2491
  %v3011 = vunpack.c.l.b16 %v2492
  %v3012 = vunpack.c.l.b16 %v2493
  %v3013 = vunpack.c.l.b16 %v2494
  %v3014 = vunpack.c.l.b16 %v2495
  %v3015 = vunpack.c.l.b16 %v2496
  %v3016 = vunpack.c.l.b16 %v2497
  %v3017 = vunpack.c.l.b16 %v2498
  %v3018 = vunpack.c.l.b16 %v2499
  %v3019 = vunpack.c.l.b16 %v2500
  %v3020 = vunpack.c.l.b16 %v2501
  %v3021 = vunpack.c.l.b16 %v2502
  %v3022 = vunpack.c.l.b16 %v2503
  %v3023 = vunpack.c.l.b16 %v2504
  %v3024 = vunpack.c.l.b16 %v2505
  %v3025 = vunpack.c.l.b16 %v2506
  %v3026 = vunpack.c.l.b16 %v2507
  %v3027 = vunpack.c.l.b16 %v2508
  %v3028 = vunpack.c.l.b16 %v2509
  %v3029 = vunpack.c.l.b16 %v2510
  %v3030 = vunpack.c.l.b16 %v2511
  %v3031 = vunpack.c.l.b16 %v2512
  %v3032 = vunpack.c.l.b16 %v2513
  %v3033 = vunpack.c.l.b16 %v2514
  %v3034 = vunpack.c.l.b16 %v2515
  %v3035 = vunpack.c.l.b16 %v2516
  %v3036 = vunpack.c.l.b16 %v2517
  %v3037 = vunpack.c.l.b16 %v2518
  %v3038 = vunpack.c.l.b16 %v2519
  %v3039 = vunpack.c.l.b16 %v2520
  %v3040 = vunpack.c.l.b16 %v2521
  %v3041 = vunpack.c.l.b16 %v2522
  %v3042 = vunpack.c.l.b16 %v2523
  %v3043 = vunpack.c.l.b16 %v2524
  %v3044 = vunpack.c.l.b16 %v2525
  %v3045 = vunpack.c.l.b16 %v2526
  %v3046 = vunpack.c.l.b16 %v2527
  %v3047 = vunpack.c.l.b16 %v2528
  %v3048 = vunpack.c.l.b16 %v2529
  %v3049 = vunpack.c.l.b16 %v2530
  %v3050 = vunpack.c.l.b16 %v2531
  %v3051 = vunpack.c.l.b16 %v2532
  %v3052 = vunpack.c.l.b16 %v2533
  %v3053 = vunpack.c.l.b16 %v2534
  %v3054 = vunpack.c.l.b16 %v2535
  %v3055 = vunpack.c.l.b16 %v2536
  %v3056 = vunpack.c.l.b16 %v2537
  %v3057 = vunpack.c.l.b16 %v2538
  %v3058 = vunpack.c.l.b16 %v2539
  %v3059 = vunpack.c.l.b16 %v2540
  %v3060 = vunpack.c.l.b16 %v2541
  %v3061 = vunpack.c.l.b16 %v2542
  %v3062 = vunpack.c.l.b16 %v2543
  %v3063 = vunpack.c.l.b16 %v2544
  %v3064 = vunpack.c.l.b16 %v2545
  %v3065 = vunpack.c.l.b16 %v2546
  %v3066 = vunpack.c.l.b16 %v2547
  %v3067 = vunpack.c.l.b16 %v2548
  %v3068 = vunpack.c.l.b16 %v2549
  %v3069 = vunpack.c.l.b16 %v2550
  %v3070 = vunpack.c.l.b16 %v2551
  %v3071 = vunpack.c.l.b16 %v2552
  %v3072 = vunpack.c.l.b16 %v2553
  %v3073 = vunpack.c.l.b16 %v2554
  %v3074 = vunpack.c.l.b16 %v2555
  %v3075 = vunpack.c.l.b16 %v2556
  %v3076 = vunpack.c.l.b16 %v2557
  %v3077 = vunpack.c.l.b16 %v2558
  %v3078 = vunpack.c.l.b16 %v2559
  %v3079 = vunpack.c.l.b16 %v2560
  %v3080 = vunpack.c.l.b16 %v2561
  %v3081 = vunpack.c.l.b16 %v2562
  %v3082 = vunpack.c.l.b16 %v2563
  %v3083 = vunpack.c.l.b16 %v2564
  %v3084 = vunpack.c.l.b16 %v2565
  %v3085 = vunpack.c.l.b16 %v2566
  %v3086 = vunpack.c.l.b16 %v2567
  %v3087 = vunpack.c.l.b16 %v2568
  %v3088 = vunpack.c.l.b16 %v2569
  %v3089 = vunpack.c.l.b16 %v2570
  %v3090 = vunpack.c.l.b16 %v2571
  %v3091 = vunpack.c.l.b16 %v2572
  %v3092 = vunpack.c.l.b16 %v2573
  %v3093 = vunpack.c.l.b16 %v2574
  %v3094 = vunpack.c.l.b16 %v2575
  %v3095 = vunpack.c.l.b16 %v2576
  %v3096 = vunpack.c.l.b16 %v2577
  %v3097 = vunpack.c.l.b16 %v2578
  %v3098 = vunpack.c.l.b16 %v2579
  %v3099 = vunpack.c.l.b16 %v2580
  %v3100 = vunpack.c.l.b16 %v2581
  %v3101 = vunpack.c.l.b16 %v2582
  %v3102 = vunpack.c.l.b16 %v2583
  %v3103 = vunpack.c.l.b16 %v2584
  %v3104 = vunpack.c.l.b16 %v2585
  %v3105 = vunpack.c.l.b16 %v2586
  %v3106 = vunpack.c.l.b16 %v2587
  %v3107 = vunpack.c.l.b16 %v2588
  %v3108 = vunpack.c.l.b16 %v2589
  %v3109 = vunpack.c.l.b16 %v2590
  %v3110 = vunpack.c.l.b16 %v2591
  %v3111 = vunpack.c.l.b16 %v2592
  %v3112 = vunpack.c.l.b16 %v2593
  %v3113 = vunpack.c.l.b16 %v2594
  %v3114 = vunpack.c.l.b16 %v2595
  %v3115 = vunpack.c.l.b16 %v2596
  %v3116 = vunpack.c.l.b16 %v2597
  %v3117 = vunpack.c.l.b16 %v2598
  %v3118 = vunpack.c.l.b16 %v2599
  %v3119 = vunpack.c.l.b16 %v2600
  %v3120 = vunpack.c.l.b16 %v2601
  %v3121 = vunpack.c.l.b16 %v2602
  %v3122 = vunpack.c.l.b16 %v2603
  %v3123 = vunpack.c.l.b16 %v2604
  %v3124 = vunpack.c.l.b16 %v2605
  %v3125 = vunpack.c.l.b16 %v2606
  %v3126 = vunpack.c.l.b16 %v2607
  %v3127 = vunpack.c.l.b16 %v2608
  %v3128 = vunpack.c.l.b16 %v2609
  %v3129 = vunpack.c.l.b16 %v2610
  %v3130 = vunpack.c.l.b16 %v2611
  %v3131 = vunpack.c.l.b16 %v2612
  %v3132 = vunpack.c.l.b16 %v2613
  %v3133 = vunpack.c.l.b16 %v2614
  %v3134 = vpack.c.b16 %v2879, %v2878
  %v3135 = vpack.c.b16 %v2881, %v2880
  %v3136 = vpack.c.b16 %v2883, %v2882
  %v3137 = vpack.c.b16 %v2885, %v2884
  %v3138 = vpack.c.b16 %v2887, %v2886
  %v3139 = vpack.c.b16 %v2889, %v2888
  %v3140 = vpack.c.b16 %v2891, %v2890
  %v3141 = vpack.c.b16 %v2893, %v2892
  %v3142 = vpack.c.b16 %v2895, %v2894
  %v3143 = vpack.c.b16 %v2897, %v2896
  %v3144 = vpack.c.b16 %v2899, %v2898
  %v3145 = vpack.c.b16 %v2901, %v2900
  %v3146 = vpack.c.b16 %v2903, %v2902
  %v3147 = vpack.c.b16 %v2905, %v2904
  %v3148 = vpack.c.b16 %v2907, %v2906
  %v3149 = vpack.c.b16 %v2909, %v2908
  %v3150 = vpack.c.b16 %v2911, %v2910
  %v3151 = vpack.c.b16 %v2913, %v2912
  %v3152 = vpack.c.b16 %v2915, %v2914
  %v3153 = vpack.c.b16 %v2917, %v2916
  %v3154 = vpack.c.b16 %v2919, %v2918
  %v3155 = vpack.c.b16 %v2921, %v2920
  %v3156 = vpack.c.b16 %v2923, %v2922
  %v3157 = vpack.c.b16 %v2925, %v2924
  %v3158 = vpack.c.b16 %v2927, %v2926
  %v3159 = vpack.c.b16 %v2929, %v2928
  %v3160 = vpack.c.b16 %v2931, %v2930
  %v3161 = vpack.c.b16 %v2933, %v2932
  %v3162 = vpack.c.b16 %v2935, %v2934
  %v3163 = vpack.c.b16 %v2937, %v2936
  %v3164 = vpack.c.b16 %v2939, %v2938
  %v3165 = vpack.c.b16 %v2941, %v2940
  %v3166 = vpack.c.b16 %v2943, %v2942
  %v3167 = vpack.c.b16 %v2945, %v2944
  %v3168 = vpack.c.b16 %v2947, %v2946
  %v3169 = vpack.c.b16 %v2949, %v2948
  %v3170 = vpack.c.b16 %v2951, %v2950
  %v3171 = vpack.c.b16 %v2953, %v2952
  %v3172 = vpack.c.b16 %v2955, %v2954
  %v3173 = vpack.c.b16 %v2957, %v2956
  %v3174 = vpack.c.b16 %v2959, %v2958
  %v3175 = vpack.c.b16 %v2961, %v2960
  %v3176 = vpack.c.b16 %v2963, %v2962
  %v3177 = vpack.c.b16 %v2965, %v2964
  %v3178 = vpack.c.b16 %v2967, %v2966
  %v3179 = vpack.c.b16 %v2969, %v2968
  %v3180 = vpack.c.b16 %v2971, %v2970
  %v3181 = vpack.c.b16 %v2973, %v2972
  %v3182 = vpack.c.b16 %v2975, %v2974
  %v3183 = vpack.c.b16 %v2977, %v2976
  %v3184 = vpack.c.b16 %v2979, %v2978
  %v3185 = vpack.c.b16 %v2981, %v2980
  %v3186 = vpack.c.b16 %v2983, %v2982
  %v3187 = vpack.c.b16 %v2985, %v2984
  %v3188 = vpack.c.b16 %v2987, %v2986
  %v3189 = vpack.c.b16 %v2989, %v2988
  %v3190 = vpack.c.b16 %v2991, %v2990
  %v3191 = vpack.c.b16 %v2993, %v2992
  %v3192 = vpack.c.b16 %v2995, %v2994
  %v3193 = vpack.c.b16 %v2997, %v2996
  %v3194 = vpack.c.b16 %v2999, %v2998
  %v3195 = vpack.c.b16 %v3001, %v3000
  %v3196 = vpack.c.b16 %v3003, %v3002
  %v3197 = vpack.c.b16 %v3005, %v3004
  %v3198 = vpack.c.b16 %v3007, %v3006
  %v3199 = vpack.c.b16 %v3009, %v3008
  %v3200 = vpack.c.b16 %v3011, %v3010
  %v3201 = vpack.c.b16 %v3013, %v3012
  %v3202 = vpack.c.b16 %v3015, %v3014
  %v3203 = vpack.c.b16 %v3017, %v3016
  %v3204 = vpack.c.b16 %v3019, %v3018
  %v3205 = vpack.c.b16 %v3021, %v3020
  %v3206 = vpack.c.b16 %v3023, %v3022
  %v3207 = vpack.c.b16 %v3025, %v3024
  %v3208 = vpack.c.b16 %v3027, %v3026
  %v3209 = vpack.c.b16 %v3029, %v3028
  %v3210 = vpack.c.b16 %v3031, %v3030
  %v3211 = vpack.c.b16 %v3033, %v3032
  %v3212 = vpack.c.b16 %v3035, %v3034
  %v3213 = vpack.c.b16 %v3037, %v3036
  %v3214 = vpack.c.b16 %v3039, %v3038
  %v3215 = vpack.c.b16 %v3041, %v3040
  %v3216 = vpack.c.b16 %v3043, %v3042
  %v3217 = vpack.c.b16 %v3045, %v3044
  %v3218 = vpack.c.b16 %v3047, %v3046
  %v3219 = vpack.c.b16 %v3049, %v3048
  %v3220 = vpack.c.b16 %v3051, %v3050
  %v3221 = vpack.c.b16 %v3053, %v3052
  %v3222 = vpack.c.b16 %v3055, %v3054
  %v3223 = vpack.c.b16 %v3057, %v3056
  %v3224 = vpack.c.b16 %v3059, %v3058
  %v3225 = vpack.c.b16 %v3061, %v3060
  %v3226 = vpack.c.b16 %v3063, %v3062
  %v3227 = vpack.c.b16 %v3065, %v3064
  %v3228 = vpack.c.b16 %v3067, %v3066
  %v3229 = vpack.c.b16 %v3069, %v3068
  %v3230 = vpack.c.b16 %v3071, %v3070
  %v3231 = vpack.c.b16 %v3073, %v3072
  %v3232 = vpack.c.b16 %v3075, %v3074
  %v3233 = vpack.c.b16 %v3077, %v3076
  %v3234 = vpack.c.b16 %v3079, %v3078
  %v3235 = vpack.c.b16 %v3081, %v3080
  %v3236 = vpack.c.b16 %v3083, %v3082
  %v3237 = vpack.c.b16 %v3085, %v3084
  %v3238 = vpack.c.b16 %v3087, %v3086
  %v3239 = vpack.c.b16 %v3089, %v3088
  %v3240 = vpack.c.b16 %v3091, %v3090
  %v3241 = vpack.c.b16 %v3093, %v3092
  %v3242 = vpack.c.b16 %v3095, %v3094
  %v3243 = vpack.c.b16 %v3097, %v3096
  %v3244 = vpack.c.b16 %v3099, %v3098
  %v3245 = vpack.c.b16 %v3101, %v3100
  %v3246 = vpack.c.b16 %v3103, %v3102
  %v3247 = vpack.c.b16 %v3105, %v3104
  %v3248 = vpack.c.b16 %v3107, %v3106
  %v3249 = vpack.c.b16 %v3109, %v3108
  %v3250 = vpack.c.b16 %v3111, %v3110
  %v3251 = vpack.c.b16 %v3113, %v3112
  %v3252 = vpack.c.b16 %v3115, %v3114
  %v3253 = vpack.c.b16 %v3117, %v3116
  %v3254 = vpack.c.b16 %v3119, %v3118
  %v3255 = vpack.c.b16 %v3121, %v3120
  %v3256 = vpack.c.b16 %v3123, %v3122
  %v3257 = vpack.c.b16 %v3125, %v3124
  %v3258 = vpack.c.b16 %v3127, %v3126
  %v3259 = vpack.c.b16 %v3129, %v3128
  %v3260 = vpack.c.b16 %v3131, %v3130
  %v3261 = vpack.c.b16 %v3133, %v3132
  %3390 = vmatprep.subr.bf16.mxu0 0
  %3391 = vmatpush1.bf16.msra.mxu0 %v3134
  %3392 = vmatprep.subr.bf16.mxu0 0
  %3393 = vmatpush1.bf16.msra.mxu0 %v3135
  %3394 = vmatprep.subr.bf16.mxu0 0
  %3395 = vmatpush1.bf16.msra.mxu0 %v3136
  %3396 = vmatprep.subr.bf16.mxu0 0
  %3397 = vmatpush1.bf16.msra.mxu0 %v3137
  %3398 = vmatprep.subr.bf16.mxu0 0
  %3399 = vmatpush1.bf16.msra.mxu0 %v3138
  %3400 = vmatprep.subr.bf16.mxu0 0
  %3401 = vmatpush1.bf16.msra.mxu0 %v3139
  %3402 = vmatprep.subr.bf16.mxu0 0
  %3403 = vmatpush1.bf16.msra.mxu0 %v3140
  %3404 = vmatprep.subr.bf16.mxu0 0
  %3405 = vmatpush1.bf16.msra.mxu0 %v3141
  %3406 = vmatprep.subr.bf16.mxu0 0
  %3407 = vmatpush1.bf16.msra.mxu0 %v3142
  %3408 = vmatprep.subr.bf16.mxu0 0
  %3409 = vmatpush1.bf16.msra.mxu0 %v3143
  %3410 = vmatprep.subr.bf16.mxu0 0
  %3411 = vmatpush1.bf16.msra.mxu0 %v3144
  %3412 = vmatprep.subr.bf16.mxu0 0
  %3413 = vmatpush1.bf16.msra.mxu0 %v3145
  %3414 = vmatprep.subr.bf16.mxu0 0
  %3415 = vmatpush1.bf16.msra.mxu0 %v3146
  %3416 = vmatprep.subr.bf16.mxu0 0
  %3417 = vmatpush1.bf16.msra.mxu0 %v3147
  %3418 = vmatprep.subr.bf16.mxu0 0
  %3419 = vmatpush1.bf16.msra.mxu0 %v3148
  %3420 = vmatprep.subr.bf16.mxu0 0
  %3421 = vmatpush1.bf16.msra.mxu0 %v3149
  %3422 = vmatprep.mubr.bf16.mxu0 %v1752
  %3423 = vmatmul.mubr.bf16.gmra.mrb[0].mxu0 %v1751
  %v3424 = vpop.f32.mrb[0].mxu0
  %v3425 = vadd.f32 %v2620, %v3424
  %v3426 = vpop.f32.mrb[0].mxu0
  %v3427 = vpop.f32.mrb[0].mxu0
  %v3428 = vadd.f32 %v2620, %v3427
  %v3429 = vpop.f32.mrb[0].mxu0
  %3430 = vmatprep.mubr.bf16.mxu0 %v1788
  %3431 = vmatmul.mubr.bf16.gmra.mrb[0].mxu0 %v1787
  %v3432 = vpop.f32.mrb[0].mxu0
  %v3433 = vadd.f32 %v2620, %v3432
  %v3434 = vpop.f32.mrb[0].mxu0
  %v3435 = vpop.f32.mrb[0].mxu0
  %v3436 = vadd.f32 %v2620, %v3435
  %v3437 = vpop.f32.mrb[0].mxu0
  %3438 = vmatprep.mubr.bf16.mxu0 %v1824
  %3439 = vmatmul.mubr.bf16.gmra.mrb[0].mxu0 %v1823
  %v3440 = vpop.f32.mrb[0].mxu0
  %v3441 = vadd.f32 %v2620, %v3440
  %v3442 = vpop.f32.mrb[0].mxu0
  %v3443 = vpop.f32.mrb[0].mxu0
  %v3444 = vadd.f32 %v2620, %v3443
  %v3445 = vpop.f32.mrb[0].mxu0
  %3446 = vmatprep.mubr.bf16.mxu0 %v1860
  %3447 = vmatmul.mubr.bf16.gmra.mrb[0].mxu0 %v1859
  %v3448 = vpop.f32.mrb[0].mxu0
  %v3449 = vadd.f32 %v2620, %v3448
  %v3450 = vpop.f32.mrb[0].mxu0
  %v3451 = vpop.f32.mrb[0].mxu0
  %v3452 = vadd.f32 %v2620, %v3451
  %v3453 = vpop.f32.mrb[0].mxu0
  %3454 = vdwg.mxu0
  %3455 = vmatprep.subr.bf16.mxu0 0
  %3456 = vmatpush1.bf16.msra.mxu0 %v3150
  %3457 = vmatprep.subr.bf16.mxu0 0
  %3458 = vmatpush1.bf16.msra.mxu0 %v3151
  %3459 = vmatprep.subr.bf16.mxu0 0
  %3460 = vmatpush1.bf16.msra.mxu0 %v3152
  %3461 = vmatprep.subr.bf16.mxu0 0
  %3462 = vmatpush1.bf16.msra.mxu0 %v3153
  %3463 = vmatprep.subr.bf16.mxu0 0
  %3464 = vmatpush1.bf16.msra.mxu0 %v3154
  %3465 = vmatprep.subr.bf16.mxu0 0
  %3466 = vmatpush1.bf16.msra.mxu0 %v3155
  %3467 = vmatprep.subr.bf16.mxu0 0
  %3468 = vmatpush1.bf16.msra.mxu0 %v3156
  %3469 = vmatprep.subr.bf16.mxu0 0
  %3470 = vmatpush1.bf16.msra.mxu0 %v3157
  %3471 = vmatprep.subr.bf16.mxu0 0
  %3472 = vmatpush1.bf16.msra.mxu0 %v3158
  %3473 = vmatprep.subr.bf16.mxu0 0
  %3474 = vmatpush1.bf16.msra.mxu0 %v3159
  %3475 = vmatprep.subr.bf16.mxu0 0
  %3476 = vmatpush1.bf16.msra.mxu0 %v3160
  %3477 = vmatprep.subr.bf16.mxu0 0
  %3478 = vmatpush1.bf16.msra.mxu0 %v3161
  %3479 = vmatprep.subr.bf16.mxu0 0
  %3480 = vmatpush1.bf16.msra.mxu0 %v3162
  %3481 = vmatprep.subr.bf16.mxu0 0
  %3482 = vmatpush1.bf16.msra.mxu0 %v3163
  %3483 = vmatprep.subr.bf16.mxu0 0
  %3484 = vmatpush1.bf16.msra.mxu0 %v3164
  %3485 = vmatprep.subr.bf16.mxu0 0
  %3486 = vmatpush1.bf16.msra.mxu0 %v3165
  %3487 = vmatprep.mubr.bf16.mxu0 %v1754
  %3488 = vmatmul.mubr.bf16.gmra.mrb[0].mxu0 %v1753
  %v3489 = vpop.f32.mrb[0].mxu0
  %v3490 = vadd.f32 %v3425, %v3489
  %v3491 = vpop.f32.mrb[0].mxu0
  %v3492 = vpop.f32.mrb[0].mxu0
  %v3493 = vadd.f32 %v3428, %v3492
  %v3494 = vpop.f32.mrb[0].mxu0
  %3495 = vmatprep.mubr.bf16.mxu0 %v1790
  %3496 = vmatmul.mubr.bf16.gmra.mrb[0].mxu0 %v1789
  %v3497 = vpop.f32.mrb[0].mxu0
  %v3498 = vadd.f32 %v3433, %v3497
  %v3499 = vpop.f32.mrb[0].mxu0
  %v3500 = vpop.f32.mrb[0].mxu0
  %v3501 = vadd.f32 %v3436, %v3500
  %v3502 = vpop.f32.mrb[0].mxu0
  %3503 = vmatprep.mubr.bf16.mxu0 %v1826
  %3504 = vmatmul.mubr.bf16.gmra.mrb[0].mxu0 %v1825
  %v3505 = vpop.f32.mrb[0].mxu0
  %v3506 = vadd.f32 %v3441, %v3505
  %v3507 = vpop.f32.mrb[0].mxu0
  %v3508 = vpop.f32.mrb[0].mxu0
  %v3509 = vadd.f32 %v3444, %v3508
  %v3510 = vpop.f32.mrb[0].mxu0
  %3511 = vmatprep.mubr.bf16.mxu0 %v1862
  %3512 = vmatmul.mubr.bf16.gmra.mrb[0].mxu0 %v1861
  %v3513 = vpop.f32.mrb[0].mxu0
  %v3514 = vadd.f32 %v3449, %v3513
  %v3515 = vpop.f32.mrb[0].mxu0
  %v3516 = vpop.f32.mrb[0].mxu0
  %v3517 = vadd.f32 %v3452, %v3516
  %v3518 = vpop.f32.mrb[0].mxu0
  %3519 = vdwg.mxu0
  %3520 = vmatprep.subr.bf16.mxu0 0
  %3521 = vmatpush1.bf16.msra.mxu0 %v3166
  %3522 = vmatprep.subr.bf16.mxu0 0
  %3523 = vmatpush1.bf16.msra.mxu0 %v3167
  %3524 = vmatprep.subr.bf16.mxu0 0
  %3525 = vmatpush1.bf16.msra.mxu0 %v3168
  %3526 = vmatprep.subr.bf16.mxu0 0
  %3527 = vmatpush1.bf16.msra.mxu0 %v3169
  %3528 = vmatprep.subr.bf16.mxu0 0
  %3529 = vmatpush1.bf16.msra.mxu0 %v3170
  %3530 = vmatprep.subr.bf16.mxu0 0
  %3531 = vmatpush1.bf16.msra.mxu0 %v3171
  %3532 = vmatprep.subr.bf16.mxu0 0
  %3533 = vmatpush1.bf16.msra.mxu0 %v3172
  %3534 = vmatprep.subr.bf16.mxu0 0
  %3535 = vmatpush1.bf16.msra.mxu0 %v3173
  %3536 = vmatprep.subr.bf16.mxu0 0
  %3537 = vmatpush1.bf16.msra.mxu0 %v3174
  %3538 = vmatprep.subr.bf16.mxu0 0
  %3539 = vmatpush1.bf16.msra.mxu0 %v3175
  %3540 = vmatprep.subr.bf16.mxu0 0
  %3541 = vmatpush1.bf16.msra.mxu0 %v3176
  %3542 = vmatprep.subr.bf16.mxu0 0
  %3543 = vmatpush1.bf16.msra.mxu0 %v3177
  %3544 = vmatprep.subr.bf16.mxu0 0
  %3545 = vmatpush1.bf16.msra.mxu0 %v3178
  %3546 = vmatprep.subr.bf16.mxu0 0
  %3547 = vmatpush1.bf16.msra.mxu0 %v3179
  %3548 = vmatprep.subr.bf16.mxu0 0
  %3549 = vmatpush1.bf16.msra.mxu0 %v3180
  %3550 = vmatprep.subr.bf16.mxu0 0
  %3551 = vmatpush1.bf16.msra.mxu0 %v3181
  %3552 = vmatprep.mubr.bf16.mxu0 %v1912
  %3553 = vmatmul.mubr.bf16.gmra.mrb[0].mxu0 %v1911
  %v3554 = vpop.f32.mrb[0].mxu0
  %v3555 = vadd.f32 %v3490, %v3554
  %v3556 = vpop.f32.mrb[0].mxu0
  %v3557 = vpop.f32.mrb[0].mxu0
  %v3558 = vadd.f32 %v3493, %v3557
  %v3559 = vpop.f32.mrb[0].mxu0
  %3560 = vmatprep.mubr.bf16.mxu0 %v1948
  %3561 = vmatmul.mubr.bf16.gmra.mrb[0].mxu0 %v1947
  %v3562 = vpop.f32.mrb[0].mxu0
  %v3563 = vadd.f32 %v3498, %v3562
  %v3564 = vpop.f32.mrb[0].mxu0
  %v3565 = vpop.f32.mrb[0].mxu0
  %v3566 = vadd.f32 %v3501, %v3565
  %v3567 = vpop.f32.mrb[0].mxu0
  %3568 = vmatprep.mubr.bf16.mxu0 %v1984
  %3569 = vmatmul.mubr.bf16.gmra.mrb[0].mxu0 %v1983
  %v3570 = vpop.f32.mrb[0].mxu0
  %v3571 = vadd.f32 %v3506, %v3570
  %v3572 = vpop.f32.mrb[0].mxu0
  %v3573 = vpop.f32.mrb[0].mxu0
  %v3574 = vadd.f32 %v3509, %v3573
  %v3575 = vpop.f32.mrb[0].mxu0
  %3576 = vmatprep.mubr.bf16.mxu0 %v2020
  %3577 = vmatmul.mubr.bf16.gmra.mrb[0].mxu0 %v2019
  %v3578 = vpop.f32.mrb[0].mxu0
  %v3579 = vadd.f32 %v3514, %v3578
  %v3580 = vpop.f32.mrb[0].mxu0
  %v3581 = vpop.f32.mrb[0].mxu0
  %v3582 = vadd.f32 %v3517, %v3581
  %v3583 = vpop.f32.mrb[0].mxu0
  %3584 = vdwg.mxu0
  %3585 = vmatprep.subr.bf16.mxu0 0
  %3586 = vmatpush1.bf16.msra.mxu0 %v3182
  %3587 = vmatprep.subr.bf16.mxu0 0
  %3588 = vmatpush1.bf16.msra.mxu0 %v3183
  %3589 = vmatprep.subr.bf16.mxu0 0
  %3590 = vmatpush1.bf16.msra.mxu0 %v3184
  %3591 = vmatprep.subr.bf16.mxu0 0
  %3592 = vmatpush1.bf16.msra.mxu0 %v3185
  %3593 = vmatprep.subr.bf16.mxu0 0
  %3594 = vmatpush1.bf16.msra.mxu0 %v3186
  %3595 = vmatprep.subr.bf16.mxu0 0
  %3596 = vmatpush1.bf16.msra.mxu0 %v3187
  %3597 = vmatprep.subr.bf16.mxu0 0
  %3598 = vmatpush1.bf16.msra.mxu0 %v3188
  %3599 = vmatprep.subr.bf16.mxu0 0
  %3600 = vmatpush1.bf16.msra.mxu0 %v3189
  %3601 = vmatprep.subr.bf16.mxu0 0
  %3602 = vmatpush1.bf16.msra.mxu0 %v3190
  %3603 = vmatprep.subr.bf16.mxu0 0
  %3604 = vmatpush1.bf16.msra.mxu0 %v3191
  %3605 = vmatprep.subr.bf16.mxu0 0
  %3606 = vmatpush1.bf16.msra.mxu0 %v3192
  %3607 = vmatprep.subr.bf16.mxu0 0
  %3608 = vmatpush1.bf16.msra.mxu0 %v3193
  %3609 = vmatprep.subr.bf16.mxu0 0
  %3610 = vmatpush1.bf16.msra.mxu0 %v3194
  %3611 = vmatprep.subr.bf16.mxu0 0
  %3612 = vmatpush1.bf16.msra.mxu0 %v3195
  %3613 = vmatprep.subr.bf16.mxu0 0
  %3614 = vmatpush1.bf16.msra.mxu0 %v3196
  %3615 = vmatprep.subr.bf16.mxu0 0
  %3616 = vmatpush1.bf16.msra.mxu0 %v3197
  %3617 = vmatprep.mubr.bf16.mxu0 %v1914
  %3618 = vmatmul.mubr.bf16.gmra.mrb[0].mxu0 %v1913
  %v3619 = vpop.f32.mrb[0].mxu0
  %v3620 = vadd.f32 %v3555, %v3619
  %v3621 = vpop.f32.mrb[0].mxu0
  %v3622 = vpop.f32.mrb[0].mxu0
  %v3623 = vadd.f32 %v3558, %v3622
  %v3624 = vpop.f32.mrb[0].mxu0
  %3625 = vmatprep.mubr.bf16.mxu0 %v1950
  %3626 = vmatmul.mubr.bf16.gmra.mrb[0].mxu0 %v1949
  %v3627 = vpop.f32.mrb[0].mxu0
  %v3628 = vadd.f32 %v3563, %v3627
  %v3629 = vpop.f32.mrb[0].mxu0
  %v3630 = vpop.f32.mrb[0].mxu0
  %v3631 = vadd.f32 %v3566, %v3630
  %v3632 = vpop.f32.mrb[0].mxu0
  %3633 = vmatprep.mubr.bf16.mxu0 %v1986
  %3634 = vmatmul.mubr.bf16.gmra.mrb[0].mxu0 %v1985
  %v3635 = vpop.f32.mrb[0].mxu0
  %v3636 = vadd.f32 %v3571, %v3635
  %v3637 = vpop.f32.mrb[0].mxu0
  %v3638 = vpop.f32.mrb[0].mxu0
  %v3639 = vadd.f32 %v3574, %v3638
  %v3640 = vpop.f32.mrb[0].mxu0
  %3641 = vmatprep.mubr.bf16.mxu0 %v2022
  %3642 = vmatmul.mubr.bf16.gmra.mrb[0].mxu0 %v2021
  %v3643 = vpop.f32.mrb[0].mxu0
  %v3644 = vadd.f32 %v3579, %v3643
  %v3645 = vpop.f32.mrb[0].mxu0
  %v3646 = vpop.f32.mrb[0].mxu0
  %v3647 = vadd.f32 %v3582, %v3646
  %v3648 = vpop.f32.mrb[0].mxu0
  %3649 = vdwg.mxu0
  %3650 = vmatprep.subr.bf16.mxu0 0
  %3651 = vmatpush1.bf16.msra.mxu0 %v3198
  %3652 = vmatprep.subr.bf16.mxu0 0
  %3653 = vmatpush1.bf16.msra.mxu0 %v3199
  %3654 = vmatprep.subr.bf16.mxu0 0
  %3655 = vmatpush1.bf16.msra.mxu0 %v3200
  %3656 = vmatprep.subr.bf16.mxu0 0
  %3657 = vmatpush1.bf16.msra.mxu0 %v3201
  %3658 = vmatprep.subr.bf16.mxu0 0
  %3659 = vmatpush1.bf16.msra.mxu0 %v3202
  %3660 = vmatprep.subr.bf16.mxu0 0
  %3661 = vmatpush1.bf16.msra.mxu0 %v3203
  %3662 = vmatprep.subr.bf16.mxu0 0
  %3663 = vmatpush1.bf16.msra.mxu0 %v3204
  %3664 = vmatprep.subr.bf16.mxu0 0
  %3665 = vmatpush1.bf16.msra.mxu0 %v3205
  %3666 = vmatprep.subr.bf16.mxu0 0
  %3667 = vmatpush1.bf16.msra.mxu0 %v3206
  %3668 = vmatprep.subr.bf16.mxu0 0
  %3669 = vmatpush1.bf16.msra.mxu0 %v3207
  %3670 = vmatprep.subr.bf16.mxu0 0
  %3671 = vmatpush1.bf16.msra.mxu0 %v3208
  %3672 = vmatprep.subr.bf16.mxu0 0
  %3673 = vmatpush1.bf16.msra.mxu0 %v3209
  %3674 = vmatprep.subr.bf16.mxu0 0
  %3675 = vmatpush1.bf16.msra.mxu0 %v3210
  %3676 = vmatprep.subr.bf16.mxu0 0
  %3677 = vmatpush1.bf16.msra.mxu0 %v3211
  %3678 = vmatprep.subr.bf16.mxu0 0
  %3679 = vmatpush1.bf16.msra.mxu0 %v3212
  %3680 = vmatprep.subr.bf16.mxu0 0
  %3681 = vmatpush1.bf16.msra.mxu0 %v3213
  %3682 = vmatprep.mubr.bf16.mxu0 %v2072
  %3683 = vmatmul.mubr.bf16.gmra.mrb[0].mxu0 %v2071
  %v3684 = vpop.f32.mrb[0].mxu0
  %v3685 = vadd.f32 %v3620, %v3684
  %v3686 = vpop.f32.mrb[0].mxu0
  %v3687 = vpop.f32.mrb[0].mxu0
  %v3688 = vadd.f32 %v3623, %v3687
  %v3689 = vpop.f32.mrb[0].mxu0
  %3690 = vmatprep.mubr.bf16.mxu0 %v2108
  %3691 = vmatmul.mubr.bf16.gmra.mrb[0].mxu0 %v2107
  %v3692 = vpop.f32.mrb[0].mxu0
  %v3693 = vadd.f32 %v3628, %v3692
  %v3694 = vpop.f32.mrb[0].mxu0
  %v3695 = vpop.f32.mrb[0].mxu0
  %v3696 = vadd.f32 %v3631, %v3695
  %v3697 = vpop.f32.mrb[0].mxu0
  %3698 = vmatprep.mubr.bf16.mxu0 %v2144
  %3699 = vmatmul.mubr.bf16.gmra.mrb[0].mxu0 %v2143
  %v3700 = vpop.f32.mrb[0].mxu0
  %v3701 = vadd.f32 %v3636, %v3700
  %v3702 = vpop.f32.mrb[0].mxu0
  %v3703 = vpop.f32.mrb[0].mxu0
  %v3704 = vadd.f32 %v3639, %v3703
  %v3705 = vpop.f32.mrb[0].mxu0
  %3706 = vmatprep.mubr.bf16.mxu0 %v2180
  %3707 = vmatmul.mubr.bf16.gmra.mrb[0].mxu0 %v2179
  %v3708 = vpop.f32.mrb[0].mxu0
  %v3709 = vadd.f32 %v3644, %v3708
  %v3710 = vpop.f32.mrb[0].mxu0
  %v3711 = vpop.f32.mrb[0].mxu0
  %v3712 = vadd.f32 %v3647, %v3711
  %v3713 = vpop.f32.mrb[0].mxu0
  %3714 = vdwg.mxu0
  %3715 = vmatprep.subr.bf16.mxu0 0
  %3716 = vmatpush1.bf16.msra.mxu0 %v3214
  %3717 = vmatprep.subr.bf16.mxu0 0
  %3718 = vmatpush1.bf16.msra.mxu0 %v3215
  %3719 = vmatprep.subr.bf16.mxu0 0
  %3720 = vmatpush1.bf16.msra.mxu0 %v3216
  %3721 = vmatprep.subr.bf16.mxu0 0
  %3722 = vmatpush1.bf16.msra.mxu0 %v3217
  %3723 = vmatprep.subr.bf16.mxu0 0
  %3724 = vmatpush1.bf16.msra.mxu0 %v3218
  %3725 = vmatprep.subr.bf16.mxu0 0
  %3726 = vmatpush1.bf16.msra.mxu0 %v3219
  %3727 = vmatprep.subr.bf16.mxu0 0
  %3728 = vmatpush1.bf16.msra.mxu0 %v3220
  %3729 = vmatprep.subr.bf16.mxu0 0
  %3730 = vmatpush1.bf16.msra.mxu0 %v3221
  %3731 = vmatprep.subr.bf16.mxu0 0
  %3732 = vmatpush1.bf16.msra.mxu0 %v3222
  %3733 = vmatprep.subr.bf16.mxu0 0
  %3734 = vmatpush1.bf16.msra.mxu0 %v3223
  %3735 = vmatprep.subr.bf16.mxu0 0
  %3736 = vmatpush1.bf16.msra.mxu0 %v3224
  %3737 = vmatprep.subr.bf16.mxu0 0
  %3738 = vmatpush1.bf16.msra.mxu0 %v3225
  %3739 = vmatprep.subr.bf16.mxu0 0
  %3740 = vmatpush1.bf16.msra.mxu0 %v3226
  %3741 = vmatprep.subr.bf16.mxu0 0
  %3742 = vmatpush1.bf16.msra.mxu0 %v3227
  %3743 = vmatprep.subr.bf16.mxu0 0
  %3744 = vmatpush1.bf16.msra.mxu0 %v3228
  %3745 = vmatprep.subr.bf16.mxu0 0
  %3746 = vmatpush1.bf16.msra.mxu0 %v3229
  %3747 = vmatprep.mubr.bf16.mxu0 %v2074
  %3748 = vmatmul.mubr.bf16.gmra.mrb[0].mxu0 %v2073
  %v3749 = vpop.f32.mrb[0].mxu0
  %v3750 = vadd.f32 %v3685, %v3749
  %v3751 = vpop.f32.mrb[0].mxu0
  %v3752 = vpop.f32.mrb[0].mxu0
  %v3753 = vadd.f32 %v3688, %v3752
  %v3754 = vpop.f32.mrb[0].mxu0
  %3755 = vmatprep.mubr.bf16.mxu0 %v2110
  %3756 = vmatmul.mubr.bf16.gmra.mrb[0].mxu0 %v2109
  %v3757 = vpop.f32.mrb[0].mxu0
  %v3758 = vadd.f32 %v3693, %v3757
  %v3759 = vpop.f32.mrb[0].mxu0
  %v3760 = vpop.f32.mrb[0].mxu0
  %v3761 = vadd.f32 %v3696, %v3760
  %v3762 = vpop.f32.mrb[0].mxu0
  %3763 = vmatprep.mubr.bf16.mxu0 %v2146
  %3764 = vmatmul.mubr.bf16.gmra.mrb[0].mxu0 %v2145
  %v3765 = vpop.f32.mrb[0].mxu0
  %v3766 = vadd.f32 %v3701, %v3765
  %v3767 = vpop.f32.mrb[0].mxu0
  %v3768 = vpop.f32.mrb[0].mxu0
  %v3769 = vadd.f32 %v3704, %v3768
  %v3770 = vpop.f32.mrb[0].mxu0
  %3771 = vmatprep.mubr.bf16.mxu0 %v2182
  %3772 = vmatmul.mubr.bf16.gmra.mrb[0].mxu0 %v2181
  %v3773 = vpop.f32.mrb[0].mxu0
  %v3774 = vadd.f32 %v3709, %v3773
  %v3775 = vpop.f32.mrb[0].mxu0
  %v3776 = vpop.f32.mrb[0].mxu0
  %v3777 = vadd.f32 %v3712, %v3776
  %v3778 = vpop.f32.mrb[0].mxu0
  %3779 = vdwg.mxu0
  %3780 = vmatprep.subr.bf16.mxu0 0
  %3781 = vmatpush1.bf16.msra.mxu0 %v3230
  %3782 = vmatprep.subr.bf16.mxu0 0
  %3783 = vmatpush1.bf16.msra.mxu0 %v3231
  %3784 = vmatprep.subr.bf16.mxu0 0
  %3785 = vmatpush1.bf16.msra.mxu0 %v3232
  %3786 = vmatprep.subr.bf16.mxu0 0
  %3787 = vmatpush1.bf16.msra.mxu0 %v3233
  %3788 = vmatprep.subr.bf16.mxu0 0
  %3789 = vmatpush1.bf16.msra.mxu0 %v3234
  %3790 = vmatprep.subr.bf16.mxu0 0
  %3791 = vmatpush1.bf16.msra.mxu0 %v3235
  %3792 = vmatprep.subr.bf16.mxu0 0
  %3793 = vmatpush1.bf16.msra.mxu0 %v3236
  %3794 = vmatprep.subr.bf16.mxu0 0
  %3795 = vmatpush1.bf16.msra.mxu0 %v3237
  %3796 = vmatprep.subr.bf16.mxu0 0
  %3797 = vmatpush1.bf16.msra.mxu0 %v3238
  %3798 = vmatprep.subr.bf16.mxu0 0
  %3799 = vmatpush1.bf16.msra.mxu0 %v3239
  %3800 = vmatprep.subr.bf16.mxu0 0
  %3801 = vmatpush1.bf16.msra.mxu0 %v3240
  %3802 = vmatprep.subr.bf16.mxu0 0
  %3803 = vmatpush1.bf16.msra.mxu0 %v3241
  %3804 = vmatprep.subr.bf16.mxu0 0
  %3805 = vmatpush1.bf16.msra.mxu0 %v3242
  %3806 = vmatprep.subr.bf16.mxu0 0
  %3807 = vmatpush1.bf16.msra.mxu0 %v3243
  %3808 = vmatprep.subr.bf16.mxu0 0
  %3809 = vmatpush1.bf16.msra.mxu0 %v3244
  %3810 = vmatprep.subr.bf16.mxu0 0
  %3811 = vmatpush1.bf16.msra.mxu0 %v3245
  %3812 = vmatprep.mubr.bf16.mxu0 %v2232
  %3813 = vmatmul.mubr.bf16.gmra.mrb[0].mxu0 %v2231
  %v3814 = vpop.f32.mrb[0].mxu0
  %v3815 = vadd.f32 %v3750, %v3814
  %v3816 = vpop.f32.mrb[0].mxu0
  %v3817 = vpop.f32.mrb[0].mxu0
  %v3818 = vadd.f32 %v3753, %v3817
  %v3819 = vpop.f32.mrb[0].mxu0
  %3820 = vmatprep.mubr.bf16.mxu0 %v2268
  %3821 = vmatmul.mubr.bf16.gmra.mrb[0].mxu0 %v2267
  %v3822 = vpop.f32.mrb[0].mxu0
  %v3823 = vadd.f32 %v3758, %v3822
  %v3824 = vpop.f32.mrb[0].mxu0
  %v3825 = vpop.f32.mrb[0].mxu0
  %v3826 = vadd.f32 %v3761, %v3825
  %v3827 = vpop.f32.mrb[0].mxu0
  %3828 = vmatprep.mubr.bf16.mxu0 %v2304
  %3829 = vmatmul.mubr.bf16.gmra.mrb[0].mxu0 %v2303
  %v3830 = vpop.f32.mrb[0].mxu0
  %v3831 = vadd.f32 %v3766, %v3830
  %v3832 = vpop.f32.mrb[0].mxu0
  %v3833 = vpop.f32.mrb[0].mxu0
  %v3834 = vadd.f32 %v3769, %v3833
  %v3835 = vpop.f32.mrb[0].mxu0
  %3836 = vmatprep.mubr.bf16.mxu0 %v2340
  %3837 = vmatmul.mubr.bf16.gmra.mrb[0].mxu0 %v2339
  %v3838 = vpop.f32.mrb[0].mxu0
  %v3839 = vadd.f32 %v3774, %v3838
  %v3840 = vpop.f32.mrb[0].mxu0
  %v3841 = vpop.f32.mrb[0].mxu0
  %v3842 = vadd.f32 %v3777, %v3841
  %v3843 = vpop.f32.mrb[0].mxu0
  %3844 = vdwg.mxu0
  %3845 = vmatprep.subr.bf16.mxu0 0
  %3846 = vmatpush1.bf16.msra.mxu0 %v3246
  %3847 = vmatprep.subr.bf16.mxu0 0
  %3848 = vmatpush1.bf16.msra.mxu0 %v3247
  %3849 = vmatprep.subr.bf16.mxu0 0
  %3850 = vmatpush1.bf16.msra.mxu0 %v3248
  %3851 = vmatprep.subr.bf16.mxu0 0
  %3852 = vmatpush1.bf16.msra.mxu0 %v3249
  %3853 = vmatprep.subr.bf16.mxu0 0
  %3854 = vmatpush1.bf16.msra.mxu0 %v3250
  %3855 = vmatprep.subr.bf16.mxu0 0
  %3856 = vmatpush1.bf16.msra.mxu0 %v3251
  %3857 = vmatprep.subr.bf16.mxu0 0
  %3858 = vmatpush1.bf16.msra.mxu0 %v3252
  %3859 = vmatprep.subr.bf16.mxu0 0
  %3860 = vmatpush1.bf16.msra.mxu0 %v3253
  %3861 = vmatprep.subr.bf16.mxu0 0
  %3862 = vmatpush1.bf16.msra.mxu0 %v3254
  %3863 = vmatprep.subr.bf16.mxu0 0
  %3864 = vmatpush1.bf16.msra.mxu0 %v3255
  %3865 = vmatprep.subr.bf16.mxu0 0
  %3866 = vmatpush1.bf16.msra.mxu0 %v3256
  %3867 = vmatprep.subr.bf16.mxu0 0
  %3868 = vmatpush1.bf16.msra.mxu0 %v3257
  %3869 = vmatprep.subr.bf16.mxu0 0
  %3870 = vmatpush1.bf16.msra.mxu0 %v3258
  %3871 = vmatprep.subr.bf16.mxu0 0
  %3872 = vmatpush1.bf16.msra.mxu0 %v3259
  %3873 = vmatprep.subr.bf16.mxu0 0
  %3874 = vmatpush1.bf16.msra.mxu0 %v3260
  %3875 = vmatprep.subr.bf16.mxu0 0
  %3876 = vmatpush1.bf16.msra.mxu0 %v3261
  %3877 = vmatprep.mubr.bf16.mxu0 %v2234
  %3878 = vmatmul.mubr.bf16.gmra.mrb[0].mxu0 %v2233
  %v3879 = vpop.f32.mrb[0].mxu0
  %v3880 = vadd.f32 %v3815, %v3879
  %v3881 = vpop.f32.mrb[0].mxu0
  %v3882 = vpop.f32.mrb[0].mxu0
  %v3883 = vadd.f32 %v3818, %v3882
  %v3884 = vpop.f32.mrb[0].mxu0
  %3885 = vmatprep.mubr.bf16.mxu0 %v2270
  %3886 = vmatmul.mubr.bf16.gmra.mrb[0].mxu0 %v2269
  %v3887 = vpop.f32.mrb[0].mxu0
  %v3888 = vadd.f32 %v3823, %v3887
  %v3889 = vpop.f32.mrb[0].mxu0
  %v3890 = vpop.f32.mrb[0].mxu0
  %v3891 = vadd.f32 %v3826, %v3890
  %v3892 = vpop.f32.mrb[0].mxu0
  %3893 = vmatprep.mubr.bf16.mxu0 %v2306
  %3894 = vmatmul.mubr.bf16.gmra.mrb[0].mxu0 %v2305
  %v3895 = vpop.f32.mrb[0].mxu0
  %v3896 = vadd.f32 %v3831, %v3895
  %v3897 = vpop.f32.mrb[0].mxu0
  %v3898 = vpop.f32.mrb[0].mxu0
  %v3899 = vadd.f32 %v3834, %v3898
  %v3900 = vpop.f32.mrb[0].mxu0
  %3901 = vmatprep.mubr.bf16.mxu0 %v2342
  %3902 = vmatmul.mubr.bf16.gmra.mrb[0].mxu0 %v2341
  %v3903 = vpop.f32.mrb[0].mxu0
  %v3904 = vadd.f32 %v3839, %v3903
  %v3905 = vpop.f32.mrb[0].mxu0
  %v3906 = vpop.f32.mrb[0].mxu0
  %v3907 = vadd.f32 %v3842, %v3906
  %v3908 = vpop.f32.mrb[0].mxu0
  %3909 = vdwg.mxu0
  %v3910 = vmax.f32 %v3880, 0.0
  %v3911 = vmax.f32 %v3883, 0.0
  %v3912 = vmax.f32 %v3888, 0.0
  %v3913 = vmax.f32 %v3891, 0.0
  %v3914 = vmax.f32 %v3896, 0.0
  %v3915 = vmax.f32 %v3899, 0.0
  %v3916 = vmax.f32 %v3904, 0.0
  %v3917 = vmax.f32 %v3907, 0.0
  %v3918 = vpack.c.bf16 %v3911, %v3910
  %v3919 = vpack.c.bf16 %v3913, %v3912
  %v3920 = vpack.c.bf16 %v3915, %v3914
  %v3921 = vpack.c.bf16 %v3917, %v3916
  %v3926 = vunpack.c.l.b16 %v3918
  %v3927 = vunpack.c.h.b16 %v3918
  %v3928 = vunpack.c.l.b16 %v3919
  %v3929 = vunpack.c.h.b16 %v3919
  %v3930 = vunpack.c.l.b16 %v3920
  %v3931 = vunpack.c.h.b16 %v3920
  %v3932 = vunpack.c.l.b16 %v3921
  %v3933 = vunpack.c.h.b16 %v3921
  %v3934 = vpack.c.b16 %v3926, %v3926
  %v3935 = vpack.c.b16 %v3927, %v3927
  %v3936 = vpack.c.b16 %v3928, %v3928
  %v3937 = vpack.c.b16 %v3929, %v3929
  %v3938 = vpack.c.b16 %v3930, %v3930
  %v3939 = vpack.c.b16 %v3931, %v3931
  %v3940 = vpack.c.b16 %v3932, %v3932
  %v3941 = vpack.c.b16 %v3933, %v3933
  %3950 = vst [vmem:[%s3] sm:$0xf] %v3934
  %3951 = vst [vmem:[%s3 + $0x4] sm:$0xf] %v3935
  %3952 = vst [vmem:[%s3 + $0x8] sm:$0xf] %v3936
  %3953 = vst [vmem:[%s3 + $0xc] sm:$0xf] %v3937
  %3954 = vst [vmem:[%s3 + $0x10] sm:$0xf] %v3938
  %3955 = vst [vmem:[%s3 + $0x14] sm:$0xf] %v3939
  %3956 = vst [vmem:[%s3 + $0x18] sm:$0xf] %v3940
  %3957 = vst [vmem:[%s3 + $0x1c] sm:$0xf] %v3941
  // Predicated region
  $region14: #{_lambda_.3} parent=0 // pred_check
    _
  $region15: #{_lambda_.3} parent=0 // pred_check_branch
    %3959 = sbr.rel (0) target = $region17
  $region16: #{_lambda_.3} parent=0 // pred_region
    _
  $region17: #{_lambda_.3} parent=0 // pred_fallthru
    _
  // Predicated region
  $region18: #{_lambda_.3} parent=0 // pred_check
    _
  $region19: #{_lambda_.3} parent=0 // pred_check_branch
    %3961 = sbr.rel (0) target = $region21
  $region20: #{_lambda_.3} parent=0 // pred_region
    _
  $region21: #{_lambda_.3} parent=0 // pred_fallthru
    _

</llo_original>
